<compile_context>
chip_gen: v7x
topology: tpu7x:2x2x1
jax: 0.10.0
libtpu: 0.0.40
codegen_flags: <defaults>
</compile_context>

<pallas_src>
import numpy as np
import jax
import jax.numpy as jnp
from jax import lax
from jax.experimental import pallas as pl
from jax.experimental.pallas import tpu as pltpu

EPS = 1e-5  # PyTorch InstanceNorm2d default eps (affine=False, biased var)


# ------------------------------ parameters ---------------------------------

def make_params(key, in_ch=4, channels=8):
    """Deterministic parameter init (HWIO weight layout, (1, Co) biases)."""
    c1, c2 = channels, channels * 2
    ks = jax.random.split(key, 10)

    def w(k, shape, fan_in):
        return (jax.random.normal(k, shape, jnp.float32) /
                np.float32(np.sqrt(fan_in)))

    return {
        'w_in': w(ks[0], (3, 3, in_ch, c1), 9 * in_ch),
        'b_in': w(ks[1], (1, c1), 9 * in_ch),
        'w1':   w(ks[2], (3, 3, c1, c2), 9 * c1),
        'b1':   w(ks[3], (1, c2), 9 * c1),
        'w2':   w(ks[4], (3, 3, c2, c2), 9 * c2),
        'b2':   w(ks[5], (1, c2), 9 * c2),
        'ws':   w(ks[6], (1, 1, c1, c2), c1),
        'bs':   w(ks[7], (1, c2), c1),
        'wd':   w(ks[8], (3, 3, c2, c2), 9 * c2),
        'bd':   w(ks[9], (1, c2), 9 * c2),
    }


def _num_batch_groups(batch):
    """v7x has 2 TensorCores/chip: split the batch across a parallel grid axis.
    On v5e/v6e (1 TC) a grid step is just serial overhead, so fold everything
    into a single invocation there."""
    try:
        kind = jax.devices()[0].device_kind.lower()
    except Exception:
        return 1
    if ('v7' in kind or '7x' in kind) and batch % 2 == 0:
        return 2
    return 1


# ------------------------------ forward (Pallas) ----------------------------

def encoder_forward(x_nchw, params):
    B, Cin, H, W = x_nchw.shape
    HW = H * W
    Ho = (H - 1) // 2 + 1                  # 3x3 / stride 2 / pad 1
    Wo = (W - 1) // 2 + 1
    HoWo = Ho * Wo
    c1 = params['w_in'].shape[-1]
    c2 = params['w1'].shape[-1]
    cin_p = max(8, -(-Cin // 8) * 8)       # pad input channels to a sublane tile

    n_groups = _num_batch_groups(B)        # v7x: 2 (one sample per TC), else 1
    Bg = B // n_groups                     # samples folded into one invocation
    SPAN = Bg * HW                         # lane extent of a folded activation
    base = W + 1                           # halo in front of the flat scratch
    padw = SPAN + 2 * base                 # flat halo'd scratch width

    # --- weight re-layout: HWIO -> (Co, 9*Ci + 1) with the bias as the last
    #     column (folded into the conv matmul via a ones row of the im2col) ---
    def conv_mat(w, b, ci_pad):
        kh, kw, ci, co = w.shape
        wt = jnp.transpose(w, (3, 0, 1, 2))                        # (Co,kh,kw,Ci)
        if ci_pad != ci:
            wt = jnp.concatenate(
                [wt, jnp.zeros((co, kh, kw, ci_pad - ci), wt.dtype)], axis=-1)
        wm = wt.reshape(co, kh * kw * ci_pad)
        return jnp.concatenate([wm, b.reshape(co, 1)], axis=1)

    m_in = conv_mat(params['w_in'], params['b_in'], cin_p)         # (c1, 9*cin_p+1)
    m_1 = conv_mat(params['w1'], params['b1'], c1)                 # (c2, 9*c1+1)
    m_2 = conv_mat(params['w2'], params['b2'], c2)                 # (c2, 9*c2+1)
    m_d = conv_mat(params['wd'], params['bd'], c2)                 # (c2, 9*c2+1)
    m_s = jnp.concatenate([jnp.transpose(params['ws'].reshape(c1, c2)),
                           params['bs'].reshape(c2, 1)], axis=1)   # (c2, c1+1)

    # --- pack ALL parameters into ONE weight slab (lane-aligned segments) ---
    mats = [m_in, m_1, m_2, m_d, m_s]
    widths = [int(m.shape[1]) for m in mats]
    offs, w_tot = [], 0
    for wdt in widths:
        offs.append(w_tot)
        w_tot += -(-wdt // 128) * 128
    w_slab = jnp.zeros((c2, w_tot), jnp.float32)
    for m, off in zip(mats, offs):
        w_slab = w_slab.at[:m.shape[0], off:off + m.shape[1]].set(m)
    o_in, o_1, o_2, o_d, o_s = offs
    k_in, k_1, k_2, k_d, k_s = widths

    # --- stride-2 decimation operator, hoisted out of the kernel; block-
    #     diagonal over the folded batch: (Bg*HW, Bg*HoWo). ---
    sdec_np = np.zeros((SPAN, Bg * HoWo), np.float32)
    for b in range(Bg):
        for oy in range(Ho):
            for ox in range(Wo):
                sdec_np[b * HW + 2 * oy * W + 2 * ox,
                        b * HoWo + oy * Wo + ox] = 1.0
    sdec = jnp.asarray(sdec_np)

    # --- input re-layout: (n_groups, Cin, Bg*HW); batch folded on the lanes ---
    x_flat = (x_nchw.astype(jnp.float32)
              .reshape(n_groups, Bg, Cin, HW)
              .transpose(0, 2, 1, 3)
              .reshape(n_groups, Cin, SPAN))

    def kernel(x_ref, w_ref, sdec_ref, o_ref, buf_ref):
        # Zero the halo'd flat scratch once per invocation: halo columns and
        # the padded input-channel rows [Cin, cin_p) are then genuinely zero,
        # so no stale / non-finite data can ever reach a conv tap.
        buf_ref[...] = jnp.zeros(buf_ref.shape, buf_ref.dtype)

        # Boundary masks, built once: x wrap-around + per-sample y seams of
        # the lane-stacked "tall image" (Bg samples stacked along lanes).
        pos = lax.broadcasted_iota(jnp.int32, (1, SPAN), 1)
        col = pos % W
        prow = pos % HW
        xm = {-1: col >= 1, 1: col <= W - 2}
        ym = {-1: prow >= W, 1: prow < HW - W}
        masks = {}
        for dy in (-1, 0, 1):
            for dx in (-1, 0, 1):
                m = ym.get(dy)
                if dx != 0:
                    m = xm[dx] if m is None else (m & xm[dx])
                if m is not None:
                    masks[(dy, dx)] = m

        ones_row = jnp.ones((1, SPAN), jnp.float32)      # bias row of im2col

        def conv_from_buf(ci_read, wmat):
            # buf rows [0:ci_read] hold the activation. Build the im2col matrix
            # (9*ci+1, SPAN) with 3 wide windowed reads (one per dy); the dx
            # taps are static in-register sub-slices of each wide window.
            taps = []
            for dy in (-1, 0, 1):
                lo = base + dy * W - 1
                wide = buf_ref[0:ci_read, lo:lo + SPAN + 2]
                for dx in (-1, 0, 1):
                    t = wide[:, dx + 1:dx + 1 + SPAN]
                    m = masks.get((dy, dx))
                    if m is not None:
                        t = jnp.where(m, t, 0.0)
                    taps.append(t)
            cols = jnp.concatenate(taps + [ones_row], axis=0)
            return jnp.dot(wmat, cols, preferred_element_type=jnp.float32)

        def norm_swish_to_buf(h, ci):
            # InstanceNorm2d (two-pass, biased var, eps=1e-5) + swish, computed
            # per sample (segmented lane reductions) and written straight into
            # the conv scratch (no extra staging store).
            for b in range(Bg):
                seg = h[:, b * HW:(b + 1) * HW]
                mu = jnp.mean(seg, axis=-1, keepdims=True)
                d = seg - mu
                var = jnp.mean(d * d, axis=-1, keepdims=True)
                z = d * lax.rsqrt(var + EPS)
                z = z * jax.nn.sigmoid(z)     # swish; exact (kept inside 2e-3 gate)
                buf_ref[0:ci, base + b * HW:base + (b + 1) * HW] = z

        # conv_in: Cin -> c1 (buf rows [Cin, cin_p) are zero from the init)
        buf_ref[0:Cin, base:base + SPAN] = x_ref[0]
        h0 = conv_from_buf(cin_p, w_ref[0:c1, o_in:o_in + k_in])    # (c1, SPAN)

        # ResnetBlock(c1 -> c2): norm-swish-conv1, norm-swish-dropout(0)-conv2
        norm_swish_to_buf(h0, c1)
        h = conv_from_buf(c1, w_ref[0:c2, o_1:o_1 + k_1])           # (c2, SPAN)
        norm_swish_to_buf(h, c2)
        h = conv_from_buf(c2, w_ref[0:c2, o_2:o_2 + k_2])           # (c2, SPAN)
        skip = jnp.dot(w_ref[0:c2, o_s:o_s + k_s],                  # 1x1 skip
                       jnp.concatenate([h0, ones_row], axis=0),
                       preferred_element_type=jnp.float32)
        res = skip + h                                              # (c2, SPAN)

        # Fused downsample conv (3x3 / stride 2 / pad 1): full-res conv of the
        # residual, then one MXU decimation matmul -> a single lane-dense
        # (c2, Bg*HoWo) output store.
        buf_ref[0:c2, base:base + SPAN] = res
        full = conv_from_buf(c2, w_ref[0:c2, o_d:o_d + k_d])        # (c2, SPAN)
        o_ref[0] = jnp.dot(full, sdec_ref[...],
                           preferred_element_type=jnp.float32)

    out = pl.pallas_call(
        kernel,
        out_shape=jax.ShapeDtypeStruct((n_groups, c2, Bg * HoWo), jnp.float32),
        grid_spec=pltpu.PrefetchScalarGridSpec(
            num_scalar_prefetch=0,
            grid=(n_groups,),
            in_specs=[
                pl.BlockSpec((1, Cin, SPAN), lambda g: (g, 0, 0)),
                pl.BlockSpec((c2, w_tot), lambda g: (0, 0)),
                pl.BlockSpec((SPAN, Bg * HoWo), lambda g: (0, 0)),
            ],
            out_specs=pl.BlockSpec((1, c2, Bg * HoWo), lambda g: (g, 0, 0)),
            scratch_shapes=[pltpu.VMEM((c2, padw), jnp.float32)],
        ),
        compiler_params=pltpu.CompilerParams(
            dimension_semantics=("parallel",)),
    )(x_flat, w_slab, sdec)

    # (n_groups, c2, Bg*Ho*Wo) lane-dense kernel output -> NCHW
    return (out.reshape(n_groups, c2, Bg, Ho, Wo)
               .transpose(0, 2, 1, 3, 4)
               .reshape(B, c2, Ho, Wo))


# --------------------------- pure-JAX reference -----------------------------

def encoder_reference(x_nchw, params):
    x = jnp.transpose(x_nchw, (0, 2, 3, 1)).astype(jnp.float32)
    dn = ('NHWC', 'HWIO', 'NHWC')

    def conv(h, w, b, stride=1, pad=1):
        return lax.conv_general_dilated(
            h, w, (stride, stride), ((pad, pad), (pad, pad)),
            dimension_numbers=dn) + b.reshape(1, 1, 1, -1)

    def inorm(h):
        m = jnp.mean(h, axis=(1, 2), keepdims=True)
        v = jnp.mean((h - m) ** 2, axis=(1, 2), keepdims=True)
        return (h - m) * lax.rsqrt(v + EPS)

    def swish(h):
        return h * jax.nn.sigmoid(h)

    h0 = conv(x, params['w_in'], params['b_in'])
    h = swish(inorm(h0))
    h = conv(h, params['w1'], params['b1'])
    h = swish(inorm(h))
    h = conv(h, params['w2'], params['b2'])
    skip = conv(h0, params['ws'], params['bs'], pad=0)
    r = skip + h
    y = conv(r, params['wd'], params['bd'], stride=2)
    return jnp.transpose(y, (0, 3, 1, 2))


if __name__ == "__main__":
    key = jax.random.PRNGKey(0)
    kx, kp = jax.random.split(key)
    B, Cin, H, W = 2, 4, 16, 16
    x = jax.random.normal(kx, (B, Cin, H, W), jnp.float32)
    params = make_params(kp, in_ch=Cin, channels=8)

    fwd = jax.jit(encoder_forward)
    y = jax.block_until_ready(fwd(x, params))

    y_ref = encoder_reference(x, params)
    np.testing.assert_allclose(np.asarray(y), np.asarray(y_ref),
                               rtol=2e-3, atol=2e-3)
    assert y.shape == (B, 16, 8, 8)
    print("KERNEL_OK")
</pallas_src>

<mosaic_0001>
module attributes {stable_mosaic.version = 11 : i64} {
  func.func @kernel(%arg0: i32, %arg1: memref<1x4x512xf32, #tpu.memory_space<vmem>>, %arg2: memref<16x896xf32, #tpu.memory_space<vmem>>, %arg3: memref<512x128xf32, #tpu.memory_space<vmem>>, %arg4: memref<1x16x128xf32, #tpu.memory_space<vmem>>, %arg5: memref<16x546xf32, #tpu.memory_space<vmem>>) attributes {dimension_semantics = [#tpu.dimension_semantics<parallel>], iteration_bounds = array<i64: 1>, scalar_prefetch = 0 : i64, scratch_operands = 1 : i64, tpu.core_type = #tpu.core_type<tc>, window_params = [{transform_indices = @transform_0, window_bounds = array<i64: 1, 4, 512>}, {pipeline_mode = #tpu.pipeline_mode<synchronous>, transform_indices = @transform_1, window_bounds = array<i64: 16, 896>}, {pipeline_mode = #tpu.pipeline_mode<synchronous>, transform_indices = @transform_2, window_bounds = array<i64: 512, 128>}, {transform_indices = @transform_3, window_bounds = array<i64: 1, 16, 128>}]} {
    %cst = arith.constant 0.000000e+00 : f32
    %0 = vector.broadcast %cst : f32 to vector<16x546xf32>
    %c0 = arith.constant 0 : index
    %c0_0 = arith.constant 0 : index
    %1 = vector.load %arg5[%c0, %c0_0] : memref<16x546xf32, #tpu.memory_space<vmem>>, vector<16x546xf32>
    tpu.vector_store %arg5[%c0, %c0_0], %0 {strides = array<i32>} : memref<16x546xf32, #tpu.memory_space<vmem>>, vector<16x546xf32>,
    %2 = tpu.iota {dimensions = array<i32: 1>} : vector<1x512xi32>
    %c16_i32 = arith.constant 16 : i32
    %c0_i32 = arith.constant 0 : i32
    %3 = arith.cmpi eq, %c16_i32, %c0_i32 : i32
    %c1_i32 = arith.constant 1 : i32
    %4 = arith.select %3, %c1_i32, %c16_i32 : i32
    %5 = vector.broadcast %4 : i32 to vector<1x512xi32>
    %6 = arith.remsi %2, %5 : vector<1x512xi32>
    %c0_i32_1 = arith.constant 0 : i32
    %7 = vector.broadcast %c0_i32_1 : i32 to vector<1x512xi32>
    %8 = arith.cmpi ne, %6, %7 : vector<1x512xi32>
    %c0_i32_2 = arith.constant 0 : i32
    %9 = vector.broadcast %c0_i32_2 : i32 to vector<1x512xi32>
    %10 = arith.cmpi slt, %6, %9 : vector<1x512xi32>
    %c0_i32_3 = arith.constant 0 : i32
    %11 = arith.cmpi slt, %4, %c0_i32_3 : i32
    %12 = vector.broadcast %11 : i1 to vector<1x512xi1>
    %13 = vector.broadcast %12 : vector<1x512xi1> to vector<1x512xi1>
    %14 = arith.xori %10, %13 : vector<1x512xi1>
    %15 = arith.andi %14, %8 : vector<1x512xi1>
    %16 = vector.broadcast %4 : i32 to vector<1x512xi32>
    %17 = arith.addi %6, %16 : vector<1x512xi32>
    %18 = arith.select %15, %17, %6 : vector<1x512xi1>, vector<1x512xi32>
    %c256_i32 = arith.constant 256 : i32
    %c0_i32_4 = arith.constant 0 : i32
    %19 = arith.cmpi eq, %c256_i32, %c0_i32_4 : i32
    %c1_i32_5 = arith.constant 1 : i32
    %20 = arith.select %19, %c1_i32_5, %c256_i32 : i32
    %21 = vector.broadcast %20 : i32 to vector<1x512xi32>
    %22 = arith.remsi %2, %21 : vector<1x512xi32>
    %c0_i32_6 = arith.constant 0 : i32
    %23 = vector.broadcast %c0_i32_6 : i32 to vector<1x512xi32>
    %24 = arith.cmpi ne, %22, %23 : vector<1x512xi32>
    %c0_i32_7 = arith.constant 0 : i32
    %25 = vector.broadcast %c0_i32_7 : i32 to vector<1x512xi32>
    %26 = arith.cmpi slt, %22, %25 : vector<1x512xi32>
    %c0_i32_8 = arith.constant 0 : i32
    %27 = arith.cmpi slt, %20, %c0_i32_8 : i32
    %28 = vector.broadcast %27 : i1 to vector<1x512xi1>
    %29 = vector.broadcast %28 : vector<1x512xi1> to vector<1x512xi1>
    %30 = arith.xori %26, %29 : vector<1x512xi1>
    %31 = arith.andi %30, %24 : vector<1x512xi1>
    %32 = vector.broadcast %20 : i32 to vector<1x512xi32>
    %33 = arith.addi %22, %32 : vector<1x512xi32>
    %34 = arith.select %31, %33, %22 : vector<1x512xi1>, vector<1x512xi32>
    %c1_i32_9 = arith.constant 1 : i32
    %35 = vector.broadcast %c1_i32_9 : i32 to vector<1x512xi32>
    %36 = arith.cmpi sge, %18, %35 : vector<1x512xi32>
    %c14_i32 = arith.constant 14 : i32
    %37 = vector.broadcast %c14_i32 : i32 to vector<1x512xi32>
    %38 = arith.cmpi sle, %18, %37 : vector<1x512xi32>
    %c16_i32_10 = arith.constant 16 : i32
    %39 = vector.broadcast %c16_i32_10 : i32 to vector<1x512xi32>
    %40 = arith.cmpi sge, %34, %39 : vector<1x512xi32>
    %c240_i32 = arith.constant 240 : i32
    %41 = vector.broadcast %c240_i32 : i32 to vector<1x512xi32>
    %42 = arith.cmpi slt, %34, %41 : vector<1x512xi32>
    %43 = arith.andi %40, %36 : vector<1x512xi1>
    %44 = arith.andi %40, %38 : vector<1x512xi1>
    %45 = arith.andi %42, %36 : vector<1x512xi1>
    %46 = arith.andi %42, %38 : vector<1x512xi1>
    %cst_11 = arith.constant 1.000000e+00 : f32
    %47 = vector.broadcast %cst_11 : f32 to vector<1x512xf32>
    %c0_12 = arith.constant 0 : index
    %c0_13 = arith.constant 0 : index
    %c0_14 = arith.constant 0 : index
    %48 = vector.load %arg1[%c0_12, %c0_13, %c0_14] : memref<1x4x512xf32, #tpu.memory_space<vmem>>, vector<1x4x512xf32>
    %49 = vector.shape_cast %48 : vector<1x4x512xf32> to vector<4x512xf32>
    %c0_15 = arith.constant 0 : index
    %c17 = arith.constant 17 : index
    %50 = vector.load %arg5[%c0_15, %c17] : memref<16x546xf32, #tpu.memory_space<vmem>>, vector<4x512xf32>
    tpu.vector_store %arg5[%c0_15, %c17], %49 {strides = array<i32>} : memref<16x546xf32, #tpu.memory_space<vmem>>, vector<4x512xf32>,
    %c0_16 = arith.constant 0 : index
    %c0_17 = arith.constant 0 : index
    %51 = vector.load %arg2[%c0_16, %c0_17] : memref<16x896xf32, #tpu.memory_space<vmem>>, vector<8x73xf32>
    %c0_18 = arith.constant 0 : index
    %c0_19 = arith.constant 0 : index
    %52 = vector.load %arg5[%c0_18, %c0_19] : memref<16x546xf32, #tpu.memory_space<vmem>>, vector<8x514xf32>
    %53 = vector.extract_strided_slice %52 {offsets = [0, 0], sizes = [8, 512], strides = [1, 1]} : vector<8x514xf32> to vector<8x512xf32>
    %cst_20 = arith.constant 0.000000e+00 : f32
    %54 = vector.shape_cast %43 : vector<1x512xi1> to vector<1x512xi1>
    %55 = vector.broadcast %54 : vector<1x512xi1> to vector<8x512xi1>
    %56 = vector.broadcast %cst_20 : f32 to vector<8x512xf32>
    %57 = arith.select %55, %53, %56 : vector<8x512xi1>, vector<8x512xf32>
    %58 = vector.extract_strided_slice %52 {offsets = [0, 1], sizes = [8, 512], strides = [1, 1]} : vector<8x514xf32> to vector<8x512xf32>
    %cst_21 = arith.constant 0.000000e+00 : f32
    %59 = vector.shape_cast %40 : vector<1x512xi1> to vector<1x512xi1>
    %60 = vector.broadcast %59 : vector<1x512xi1> to vector<8x512xi1>
    %61 = vector.broadcast %cst_21 : f32 to vector<8x512xf32>
    %62 = arith.select %60, %58, %61 : vector<8x512xi1>, vector<8x512xf32>
    %63 = vector.extract_strided_slice %52 {offsets = [0, 2], sizes = [8, 512], strides = [1, 1]} : vector<8x514xf32> to vector<8x512xf32>
    %cst_22 = arith.constant 0.000000e+00 : f32
    %64 = vector.shape_cast %44 : vector<1x512xi1> to vector<1x512xi1>
    %65 = vector.broadcast %64 : vector<1x512xi1> to vector<8x512xi1>
    %66 = vector.broadcast %cst_22 : f32 to vector<8x512xf32>
    %67 = arith.select %65, %63, %66 : vector<8x512xi1>, vector<8x512xf32>
    %c0_23 = arith.constant 0 : index
    %c16 = arith.constant 16 : index
    %68 = vector.load %arg5[%c0_23, %c16] : memref<16x546xf32, #tpu.memory_space<vmem>>, vector<8x514xf32>
    %69 = vector.extract_strided_slice %68 {offsets = [0, 0], sizes = [8, 512], strides = [1, 1]} : vector<8x514xf32> to vector<8x512xf32>
    %cst_24 = arith.constant 0.000000e+00 : f32
    %70 = vector.shape_cast %36 : vector<1x512xi1> to vector<1x512xi1>
    %71 = vector.broadcast %70 : vector<1x512xi1> to vector<8x512xi1>
    %72 = vector.broadcast %cst_24 : f32 to vector<8x512xf32>
    %73 = arith.select %71, %69, %72 : vector<8x512xi1>, vector<8x512xf32>
    %74 = vector.extract_strided_slice %68 {offsets = [0, 1], sizes = [8, 512], strides = [1, 1]} : vector<8x514xf32> to vector<8x512xf32>
    %75 = vector.extract_strided_slice %68 {offsets = [0, 2], sizes = [8, 512], strides = [1, 1]} : vector<8x514xf32> to vector<8x512xf32>
    %cst_25 = arith.constant 0.000000e+00 : f32
    %76 = vector.shape_cast %38 : vector<1x512xi1> to vector<1x512xi1>
    %77 = vector.broadcast %76 : vector<1x512xi1> to vector<8x512xi1>
    %78 = vector.broadcast %cst_25 : f32 to vector<8x512xf32>
    %79 = arith.select %77, %75, %78 : vector<8x512xi1>, vector<8x512xf32>
    %c0_26 = arith.constant 0 : index
    %c32 = arith.constant 32 : index
    %80 = vector.load %arg5[%c0_26, %c32] : memref<16x546xf32, #tpu.memory_space<vmem>>, vector<8x514xf32>
    %81 = vector.extract_strided_slice %80 {offsets = [0, 0], sizes = [8, 512], strides = [1, 1]} : vector<8x514xf32> to vector<8x512xf32>
    %cst_27 = arith.constant 0.000000e+00 : f32
    %82 = vector.shape_cast %45 : vector<1x512xi1> to vector<1x512xi1>
    %83 = vector.broadcast %82 : vector<1x512xi1> to vector<8x512xi1>
    %84 = vector.broadcast %cst_27 : f32 to vector<8x512xf32>
    %85 = arith.select %83, %81, %84 : vector<8x512xi1>, vector<8x512xf32>
    %86 = vector.extract_strided_slice %80 {offsets = [0, 1], sizes = [8, 512], strides = [1, 1]} : vector<8x514xf32> to vector<8x512xf32>
    %cst_28 = arith.constant 0.000000e+00 : f32
    %87 = vector.shape_cast %42 : vector<1x512xi1> to vector<1x512xi1>
    %88 = vector.broadcast %87 : vector<1x512xi1> to vector<8x512xi1>
    %89 = vector.broadcast %cst_28 : f32 to vector<8x512xf32>
    %90 = arith.select %88, %86, %89 : vector<8x512xi1>, vector<8x512xf32>
    %91 = vector.extract_strided_slice %80 {offsets = [0, 2], sizes = [8, 512], strides = [1, 1]} : vector<8x514xf32> to vector<8x512xf32>
    %cst_29 = arith.constant 0.000000e+00 : f32
    %92 = vector.shape_cast %46 : vector<1x512xi1> to vector<1x512xi1>
    %93 = vector.broadcast %92 : vector<1x512xi1> to vector<8x512xi1>
    %94 = vector.broadcast %cst_29 : f32 to vector<8x512xf32>
    %95 = arith.select %93, %91, %94 : vector<8x512xi1>, vector<8x512xf32>
    %96 = tpu.concatenate %57, %62, %67, %73, %74, %79, %85, %90, %95, %47 in 0 : vector<8x512xf32>, vector<8x512xf32>, vector<8x512xf32>, vector<8x512xf32>, vector<8x512xf32>, vector<8x512xf32>, vector<8x512xf32>, vector<8x512xf32>, vector<8x512xf32>, vector<1x512xf32> -> vector<73x512xf32>
    %cst_30 = arith.constant dense<0.000000e+00> : vector<8x512xf32>
    %97 = tpu.matmul %51, %96, %cst_30 {dimension_numbers = #tpu.dot_dimension_numbers<[1], [0], [0], [1], [0, 0, 1, 1], [], []>} : vector<8x73xf32>, vector<73x512xf32>, vector<8x512xf32> -> vector<8x512xf32>
    %98 = vector.extract_strided_slice %97 {offsets = [0, 0], sizes = [8, 256], strides = [1, 1]} : vector<8x512xf32> to vector<8x256xf32>
    %cst_31 = arith.constant dense<0.000000e+00> : vector<8xf32>
    %99 = vector.multi_reduction <add>, %98, %cst_31 [1] : vector<8x256xf32> to vector<8xf32>
    %100 = vector.shape_cast %99 : vector<8xf32> to vector<8x1xf32>
    %cst_32 = arith.constant 2.560000e+02 : f32
    %101 = vector.broadcast %cst_32 : f32 to vector<8x1xf32>
    %102 = arith.divf %100, %101 : vector<8x1xf32>
    %103 = vector.broadcast %102 : vector<8x1xf32> to vector<8x256xf32>
    %104 = arith.subf %98, %103 : vector<8x256xf32>
    %105 = arith.mulf %104, %104 : vector<8x256xf32>
    %cst_33 = arith.constant dense<0.000000e+00> : vector<8xf32>
    %106 = vector.multi_reduction <add>, %105, %cst_33 [1] : vector<8x256xf32> to vector<8xf32>
    %107 = vector.shape_cast %106 : vector<8xf32> to vector<8x1xf32>
    %cst_34 = arith.constant 2.560000e+02 : f32
    %108 = vector.broadcast %cst_34 : f32 to vector<8x1xf32>
    %109 = arith.divf %107, %108 : vector<8x1xf32>
    %cst_35 = arith.constant 9.99999974E-6 : f32
    %110 = vector.broadcast %cst_35 : f32 to vector<8x1xf32>
    %111 = arith.addf %109, %110 : vector<8x1xf32>
    %112 = math.rsqrt %111 : vector<8x1xf32>
    %113 = vector.broadcast %112 : vector<8x1xf32> to vector<8x256xf32>
    %114 = arith.mulf %104, %113 : vector<8x256xf32>
    %115 = arith.negf %114 : vector<8x256xf32>
    %116 = math.exp %115 : vector<8x256xf32>
    %cst_36 = arith.constant 1.000000e+00 : f32
    %117 = vector.broadcast %cst_36 : f32 to vector<8x256xf32>
    %118 = arith.addf %117, %116 : vector<8x256xf32>
    %119 = arith.divf %117, %118 : vector<8x256xf32>
    %120 = arith.mulf %114, %119 : vector<8x256xf32>
    %c0_37 = arith.constant 0 : index
    %c17_38 = arith.constant 17 : index
    %121 = vector.load %arg5[%c0_37, %c17_38] : memref<16x546xf32, #tpu.memory_space<vmem>>, vector<8x256xf32>
    tpu.vector_store %arg5[%c0_37, %c17_38], %120 {strides = array<i32>} : memref<16x546xf32, #tpu.memory_space<vmem>>, vector<8x256xf32>,
    %122 = vector.extract_strided_slice %97 {offsets = [0, 256], sizes = [8, 256], strides = [1, 1]} : vector<8x512xf32> to vector<8x256xf32>
    %cst_39 = arith.constant dense<0.000000e+00> : vector<8xf32>
    %123 = vector.multi_reduction <add>, %122, %cst_39 [1] : vector<8x256xf32> to vector<8xf32>
    %124 = vector.shape_cast %123 : vector<8xf32> to vector<8x1xf32>
    %cst_40 = arith.constant 2.560000e+02 : f32
    %125 = vector.broadcast %cst_40 : f32 to vector<8x1xf32>
    %126 = arith.divf %124, %125 : vector<8x1xf32>
    %127 = vector.broadcast %126 : vector<8x1xf32> to vector<8x256xf32>
    %128 = arith.subf %122, %127 : vector<8x256xf32>
    %129 = arith.mulf %128, %128 : vector<8x256xf32>
    %cst_41 = arith.constant dense<0.000000e+00> : vector<8xf32>
    %130 = vector.multi_reduction <add>, %129, %cst_41 [1] : vector<8x256xf32> to vector<8xf32>
    %131 = vector.shape_cast %130 : vector<8xf32> to vector<8x1xf32>
    %cst_42 = arith.constant 2.560000e+02 : f32
    %132 = vector.broadcast %cst_42 : f32 to vector<8x1xf32>
    %133 = arith.divf %131, %132 : vector<8x1xf32>
    %cst_43 = arith.constant 9.99999974E-6 : f32
    %134 = vector.broadcast %cst_43 : f32 to vector<8x1xf32>
    %135 = arith.addf %133, %134 : vector<8x1xf32>
    %136 = math.rsqrt %135 : vector<8x1xf32>
    %137 = vector.broadcast %136 : vector<8x1xf32> to vector<8x256xf32>
    %138 = arith.mulf %128, %137 : vector<8x256xf32>
    %139 = arith.negf %138 : vector<8x256xf32>
    %140 = math.exp %139 : vector<8x256xf32>
    %cst_44 = arith.constant 1.000000e+00 : f32
    %141 = vector.broadcast %cst_44 : f32 to vector<8x256xf32>
    %142 = arith.addf %141, %140 : vector<8x256xf32>
    %143 = arith.divf %141, %142 : vector<8x256xf32>
    %144 = arith.mulf %138, %143 : vector<8x256xf32>
    %c0_45 = arith.constant 0 : index
    %c273 = arith.constant 273 : index
    %145 = vector.load %arg5[%c0_45, %c273] : memref<16x546xf32, #tpu.memory_space<vmem>>, vector<8x256xf32>
    tpu.vector_store %arg5[%c0_45, %c273], %144 {strides = array<i32>} : memref<16x546xf32, #tpu.memory_space<vmem>>, vector<8x256xf32>,
    %c0_46 = arith.constant 0 : index
    %c128 = arith.constant 128 : index
    %146 = vector.load %arg2[%c0_46, %c128] : memref<16x896xf32, #tpu.memory_space<vmem>>, vector<16x73xf32>
    %c0_47 = arith.constant 0 : index
    %c0_48 = arith.constant 0 : index
    %147 = vector.load %arg5[%c0_47, %c0_48] : memref<16x546xf32, #tpu.memory_space<vmem>>, vector<8x514xf32>
    %148 = vector.extract_strided_slice %147 {offsets = [0, 0], sizes = [8, 512], strides = [1, 1]} : vector<8x514xf32> to vector<8x512xf32>
    %cst_49 = arith.constant 0.000000e+00 : f32
    %149 = vector.shape_cast %43 : vector<1x512xi1> to vector<1x512xi1>
    %150 = vector.broadcast %149 : vector<1x512xi1> to vector<8x512xi1>
    %151 = vector.broadcast %cst_49 : f32 to vector<8x512xf32>
    %152 = arith.select %150, %148, %151 : vector<8x512xi1>, vector<8x512xf32>
    %153 = vector.extract_strided_slice %147 {offsets = [0, 1], sizes = [8, 512], strides = [1, 1]} : vector<8x514xf32> to vector<8x512xf32>
    %cst_50 = arith.constant 0.000000e+00 : f32
    %154 = vector.shape_cast %40 : vector<1x512xi1> to vector<1x512xi1>
    %155 = vector.broadcast %154 : vector<1x512xi1> to vector<8x512xi1>
    %156 = vector.broadcast %cst_50 : f32 to vector<8x512xf32>
    %157 = arith.select %155, %153, %156 : vector<8x512xi1>, vector<8x512xf32>
    %158 = vector.extract_strided_slice %147 {offsets = [0, 2], sizes = [8, 512], strides = [1, 1]} : vector<8x514xf32> to vector<8x512xf32>
    %cst_51 = arith.constant 0.000000e+00 : f32
    %159 = vector.shape_cast %44 : vector<1x512xi1> to vector<1x512xi1>
    %160 = vector.broadcast %159 : vector<1x512xi1> to vector<8x512xi1>
    %161 = vector.broadcast %cst_51 : f32 to vector<8x512xf32>
    %162 = arith.select %160, %158, %161 : vector<8x512xi1>, vector<8x512xf32>
    %c0_52 = arith.constant 0 : index
    %c16_53 = arith.constant 16 : index
    %163 = vector.load %arg5[%c0_52, %c16_53] : memref<16x546xf32, #tpu.memory_space<vmem>>, vector<8x514xf32>
    %164 = vector.extract_strided_slice %163 {offsets = [0, 0], sizes = [8, 512], strides = [1, 1]} : vector<8x514xf32> to vector<8x512xf32>
    %cst_54 = arith.constant 0.000000e+00 : f32
    %165 = vector.shape_cast %36 : vector<1x512xi1> to vector<1x512xi1>
    %166 = vector.broadcast %165 : vector<1x512xi1> to vector<8x512xi1>
    %167 = vector.broadcast %cst_54 : f32 to vector<8x512xf32>
    %168 = arith.select %166, %164, %167 : vector<8x512xi1>, vector<8x512xf32>
    %169 = vector.extract_strided_slice %163 {offsets = [0, 1], sizes = [8, 512], strides = [1, 1]} : vector<8x514xf32> to vector<8x512xf32>
    %170 = vector.extract_strided_slice %163 {offsets = [0, 2], sizes = [8, 512], strides = [1, 1]} : vector<8x514xf32> to vector<8x512xf32>
    %cst_55 = arith.constant 0.000000e+00 : f32
    %171 = vector.shape_cast %38 : vector<1x512xi1> to vector<1x512xi1>
    %172 = vector.broadcast %171 : vector<1x512xi1> to vector<8x512xi1>
    %173 = vector.broadcast %cst_55 : f32 to vector<8x512xf32>
    %174 = arith.select %172, %170, %173 : vector<8x512xi1>, vector<8x512xf32>
    %c0_56 = arith.constant 0 : index
    %c32_57 = arith.constant 32 : index
    %175 = vector.load %arg5[%c0_56, %c32_57] : memref<16x546xf32, #tpu.memory_space<vmem>>, vector<8x514xf32>
    %176 = vector.extract_strided_slice %175 {offsets = [0, 0], sizes = [8, 512], strides = [1, 1]} : vector<8x514xf32> to vector<8x512xf32>
    %cst_58 = arith.constant 0.000000e+00 : f32
    %177 = vector.shape_cast %45 : vector<1x512xi1> to vector<1x512xi1>
    %178 = vector.broadcast %177 : vector<1x512xi1> to vector<8x512xi1>
    %179 = vector.broadcast %cst_58 : f32 to vector<8x512xf32>
    %180 = arith.select %178, %176, %179 : vector<8x512xi1>, vector<8x512xf32>
    %181 = vector.extract_strided_slice %175 {offsets = [0, 1], sizes = [8, 512], strides = [1, 1]} : vector<8x514xf32> to vector<8x512xf32>
    %cst_59 = arith.constant 0.000000e+00 : f32
    %182 = vector.shape_cast %42 : vector<1x512xi1> to vector<1x512xi1>
    %183 = vector.broadcast %182 : vector<1x512xi1> to vector<8x512xi1>
    %184 = vector.broadcast %cst_59 : f32 to vector<8x512xf32>
    %185 = arith.select %183, %181, %184 : vector<8x512xi1>, vector<8x512xf32>
    %186 = vector.extract_strided_slice %175 {offsets = [0, 2], sizes = [8, 512], strides = [1, 1]} : vector<8x514xf32> to vector<8x512xf32>
    %cst_60 = arith.constant 0.000000e+00 : f32
    %187 = vector.shape_cast %46 : vector<1x512xi1> to vector<1x512xi1>
    %188 = vector.broadcast %187 : vector<1x512xi1> to vector<8x512xi1>
    %189 = vector.broadcast %cst_60 : f32 to vector<8x512xf32>
    %190 = arith.select %188, %186, %189 : vector<8x512xi1>, vector<8x512xf32>
    %191 = tpu.concatenate %152, %157, %162, %168, %169, %174, %180, %185, %190, %47 in 0 : vector<8x512xf32>, vector<8x512xf32>, vector<8x512xf32>, vector<8x512xf32>, vector<8x512xf32>, vector<8x512xf32>, vector<8x512xf32>, vector<8x512xf32>, vector<8x512xf32>, vector<1x512xf32> -> vector<73x512xf32>
    %cst_61 = arith.constant dense<0.000000e+00> : vector<16x512xf32>
    %192 = tpu.matmul %146, %191, %cst_61 {dimension_numbers = #tpu.dot_dimension_numbers<[1], [0], [0], [1], [0, 0, 1, 1], [], []>} : vector<16x73xf32>, vector<73x512xf32>, vector<16x512xf32> -> vector<16x512xf32>
    %193 = vector.extract_strided_slice %192 {offsets = [0, 0], sizes = [16, 256], strides = [1, 1]} : vector<16x512xf32> to vector<16x256xf32>
    %cst_62 = arith.constant dense<0.000000e+00> : vector<16xf32>
    %194 = vector.multi_reduction <add>, %193, %cst_62 [1] : vector<16x256xf32> to vector<16xf32>
    %195 = vector.shape_cast %194 : vector<16xf32> to vector<16x1xf32>
    %cst_63 = arith.constant 2.560000e+02 : f32
    %196 = vector.broadcast %cst_63 : f32 to vector<16x1xf32>
    %197 = arith.divf %195, %196 : vector<16x1xf32>
    %198 = vector.broadcast %197 : vector<16x1xf32> to vector<16x256xf32>
    %199 = arith.subf %193, %198 : vector<16x256xf32>
    %200 = arith.mulf %199, %199 : vector<16x256xf32>
    %cst_64 = arith.constant dense<0.000000e+00> : vector<16xf32>
    %201 = vector.multi_reduction <add>, %200, %cst_64 [1] : vector<16x256xf32> to vector<16xf32>
    %202 = vector.shape_cast %201 : vector<16xf32> to vector<16x1xf32>
    %cst_65 = arith.constant 2.560000e+02 : f32
    %203 = vector.broadcast %cst_65 : f32 to vector<16x1xf32>
    %204 = arith.divf %202, %203 : vector<16x1xf32>
    %cst_66 = arith.constant 9.99999974E-6 : f32
    %205 = vector.broadcast %cst_66 : f32 to vector<16x1xf32>
    %206 = arith.addf %204, %205 : vector<16x1xf32>
    %207 = math.rsqrt %206 : vector<16x1xf32>
    %208 = vector.broadcast %207 : vector<16x1xf32> to vector<16x256xf32>
    %209 = arith.mulf %199, %208 : vector<16x256xf32>
    %210 = arith.negf %209 : vector<16x256xf32>
    %211 = math.exp %210 : vector<16x256xf32>
    %cst_67 = arith.constant 1.000000e+00 : f32
    %212 = vector.broadcast %cst_67 : f32 to vector<16x256xf32>
    %213 = arith.addf %212, %211 : vector<16x256xf32>
    %214 = arith.divf %212, %213 : vector<16x256xf32>
    %215 = arith.mulf %209, %214 : vector<16x256xf32>
    %c0_68 = arith.constant 0 : index
    %c17_69 = arith.constant 17 : index
    %216 = vector.load %arg5[%c0_68, %c17_69] : memref<16x546xf32, #tpu.memory_space<vmem>>, vector<16x256xf32>
    tpu.vector_store %arg5[%c0_68, %c17_69], %215 {strides = array<i32>} : memref<16x546xf32, #tpu.memory_space<vmem>>, vector<16x256xf32>,
    %217 = vector.extract_strided_slice %192 {offsets = [0, 256], sizes = [16, 256], strides = [1, 1]} : vector<16x512xf32> to vector<16x256xf32>
    %cst_70 = arith.constant dense<0.000000e+00> : vector<16xf32>
    %218 = vector.multi_reduction <add>, %217, %cst_70 [1] : vector<16x256xf32> to vector<16xf32>
    %219 = vector.shape_cast %218 : vector<16xf32> to vector<16x1xf32>
    %cst_71 = arith.constant 2.560000e+02 : f32
    %220 = vector.broadcast %cst_71 : f32 to vector<16x1xf32>
    %221 = arith.divf %219, %220 : vector<16x1xf32>
    %222 = vector.broadcast %221 : vector<16x1xf32> to vector<16x256xf32>
    %223 = arith.subf %217, %222 : vector<16x256xf32>
    %224 = arith.mulf %223, %223 : vector<16x256xf32>
    %cst_72 = arith.constant dense<0.000000e+00> : vector<16xf32>
    %225 = vector.multi_reduction <add>, %224, %cst_72 [1] : vector<16x256xf32> to vector<16xf32>
    %226 = vector.shape_cast %225 : vector<16xf32> to vector<16x1xf32>
    %cst_73 = arith.constant 2.560000e+02 : f32
    %227 = vector.broadcast %cst_73 : f32 to vector<16x1xf32>
    %228 = arith.divf %226, %227 : vector<16x1xf32>
    %cst_74 = arith.constant 9.99999974E-6 : f32
    %229 = vector.broadcast %cst_74 : f32 to vector<16x1xf32>
    %230 = arith.addf %228, %229 : vector<16x1xf32>
    %231 = math.rsqrt %230 : vector<16x1xf32>
    %232 = vector.broadcast %231 : vector<16x1xf32> to vector<16x256xf32>
    %233 = arith.mulf %223, %232 : vector<16x256xf32>
    %234 = arith.negf %233 : vector<16x256xf32>
    %235 = math.exp %234 : vector<16x256xf32>
    %cst_75 = arith.constant 1.000000e+00 : f32
    %236 = vector.broadcast %cst_75 : f32 to vector<16x256xf32>
    %237 = arith.addf %236, %235 : vector<16x256xf32>
    %238 = arith.divf %236, %237 : vector<16x256xf32>
    %239 = arith.mulf %233, %238 : vector<16x256xf32>
    %c0_76 = arith.constant 0 : index
    %c273_77 = arith.constant 273 : index
    %240 = vector.load %arg5[%c0_76, %c273_77] : memref<16x546xf32, #tpu.memory_space<vmem>>, vector<16x256xf32>
    tpu.vector_store %arg5[%c0_76, %c273_77], %239 {strides = array<i32>} : memref<16x546xf32, #tpu.memory_space<vmem>>, vector<16x256xf32>,
    %c0_78 = arith.constant 0 : index
    %c256 = arith.constant 256 : index
    %241 = vector.load %arg2[%c0_78, %c256] : memref<16x896xf32, #tpu.memory_space<vmem>>, vector<16x145xf32>
    %c0_79 = arith.constant 0 : index
    %c0_80 = arith.constant 0 : index
    %242 = vector.load %arg5[%c0_79, %c0_80] : memref<16x546xf32, #tpu.memory_space<vmem>>, vector<16x514xf32>
    %243 = vector.extract_strided_slice %242 {offsets = [0, 0], sizes = [16, 512], strides = [1, 1]} : vector<16x514xf32> to vector<16x512xf32>
    %cst_81 = arith.constant 0.000000e+00 : f32
    %244 = vector.shape_cast %43 : vector<1x512xi1> to vector<1x512xi1>
    %245 = vector.broadcast %244 : vector<1x512xi1> to vector<16x512xi1>
    %246 = vector.broadcast %cst_81 : f32 to vector<16x512xf32>
    %247 = arith.select %245, %243, %246 : vector<16x512xi1>, vector<16x512xf32>
    %248 = vector.extract_strided_slice %242 {offsets = [0, 1], sizes = [16, 512], strides = [1, 1]} : vector<16x514xf32> to vector<16x512xf32>
    %cst_82 = arith.constant 0.000000e+00 : f32
    %249 = vector.shape_cast %40 : vector<1x512xi1> to vector<1x512xi1>
    %250 = vector.broadcast %249 : vector<1x512xi1> to vector<16x512xi1>
    %251 = vector.broadcast %cst_82 : f32 to vector<16x512xf32>
    %252 = arith.select %250, %248, %251 : vector<16x512xi1>, vector<16x512xf32>
    %253 = vector.extract_strided_slice %242 {offsets = [0, 2], sizes = [16, 512], strides = [1, 1]} : vector<16x514xf32> to vector<16x512xf32>
    %cst_83 = arith.constant 0.000000e+00 : f32
    %254 = vector.shape_cast %44 : vector<1x512xi1> to vector<1x512xi1>
    %255 = vector.broadcast %254 : vector<1x512xi1> to vector<16x512xi1>
    %256 = vector.broadcast %cst_83 : f32 to vector<16x512xf32>
    %257 = arith.select %255, %253, %256 : vector<16x512xi1>, vector<16x512xf32>
    %c0_84 = arith.constant 0 : index
    %c16_85 = arith.constant 16 : index
    %258 = vector.load %arg5[%c0_84, %c16_85] : memref<16x546xf32, #tpu.memory_space<vmem>>, vector<16x514xf32>
    %259 = vector.extract_strided_slice %258 {offsets = [0, 0], sizes = [16, 512], strides = [1, 1]} : vector<16x514xf32> to vector<16x512xf32>
    %cst_86 = arith.constant 0.000000e+00 : f32
    %260 = vector.shape_cast %36 : vector<1x512xi1> to vector<1x512xi1>
    %261 = vector.broadcast %260 : vector<1x512xi1> to vector<16x512xi1>
    %262 = vector.broadcast %cst_86 : f32 to vector<16x512xf32>
    %263 = arith.select %261, %259, %262 : vector<16x512xi1>, vector<16x512xf32>
    %264 = vector.extract_strided_slice %258 {offsets = [0, 1], sizes = [16, 512], strides = [1, 1]} : vector<16x514xf32> to vector<16x512xf32>
    %265 = vector.extract_strided_slice %258 {offsets = [0, 2], sizes = [16, 512], strides = [1, 1]} : vector<16x514xf32> to vector<16x512xf32>
    %cst_87 = arith.constant 0.000000e+00 : f32
    %266 = vector.shape_cast %38 : vector<1x512xi1> to vector<1x512xi1>
    %267 = vector.broadcast %266 : vector<1x512xi1> to vector<16x512xi1>
    %268 = vector.broadcast %cst_87 : f32 to vector<16x512xf32>
    %269 = arith.select %267, %265, %268 : vector<16x512xi1>, vector<16x512xf32>
    %c0_88 = arith.constant 0 : index
    %c32_89 = arith.constant 32 : index
    %270 = vector.load %arg5[%c0_88, %c32_89] : memref<16x546xf32, #tpu.memory_space<vmem>>, vector<16x514xf32>
    %271 = vector.extract_strided_slice %270 {offsets = [0, 0], sizes = [16, 512], strides = [1, 1]} : vector<16x514xf32> to vector<16x512xf32>
    %cst_90 = arith.constant 0.000000e+00 : f32
    %272 = vector.shape_cast %45 : vector<1x512xi1> to vector<1x512xi1>
    %273 = vector.broadcast %272 : vector<1x512xi1> to vector<16x512xi1>
    %274 = vector.broadcast %cst_90 : f32 to vector<16x512xf32>
    %275 = arith.select %273, %271, %274 : vector<16x512xi1>, vector<16x512xf32>
    %276 = vector.extract_strided_slice %270 {offsets = [0, 1], sizes = [16, 512], strides = [1, 1]} : vector<16x514xf32> to vector<16x512xf32>
    %cst_91 = arith.constant 0.000000e+00 : f32
    %277 = vector.shape_cast %42 : vector<1x512xi1> to vector<1x512xi1>
    %278 = vector.broadcast %277 : vector<1x512xi1> to vector<16x512xi1>
    %279 = vector.broadcast %cst_91 : f32 to vector<16x512xf32>
    %280 = arith.select %278, %276, %279 : vector<16x512xi1>, vector<16x512xf32>
    %281 = vector.extract_strided_slice %270 {offsets = [0, 2], sizes = [16, 512], strides = [1, 1]} : vector<16x514xf32> to vector<16x512xf32>
    %cst_92 = arith.constant 0.000000e+00 : f32
    %282 = vector.shape_cast %46 : vector<1x512xi1> to vector<1x512xi1>
    %283 = vector.broadcast %282 : vector<1x512xi1> to vector<16x512xi1>
    %284 = vector.broadcast %cst_92 : f32 to vector<16x512xf32>
    %285 = arith.select %283, %281, %284 : vector<16x512xi1>, vector<16x512xf32>
    %286 = tpu.concatenate %247, %252, %257, %263, %264, %269, %275, %280, %285, %47 in 0 : vector<16x512xf32>, vector<16x512xf32>, vector<16x512xf32>, vector<16x512xf32>, vector<16x512xf32>, vector<16x512xf32>, vector<16x512xf32>, vector<16x512xf32>, vector<16x512xf32>, vector<1x512xf32> -> vector<145x512xf32>
    %cst_93 = arith.constant dense<0.000000e+00> : vector<16x512xf32>
    %287 = tpu.matmul %241, %286, %cst_93 {dimension_numbers = #tpu.dot_dimension_numbers<[1], [0], [0], [1], [0, 0, 1, 1], [], []>} : vector<16x145xf32>, vector<145x512xf32>, vector<16x512xf32> -> vector<16x512xf32>
    %c0_94 = arith.constant 0 : index
    %c768 = arith.constant 768 : index
    %288 = vector.load %arg2[%c0_94, %c768] : memref<16x896xf32, #tpu.memory_space<vmem>>, vector<16x9xf32>
    %289 = tpu.concatenate %97, %47 in 0 : vector<8x512xf32>, vector<1x512xf32> -> vector<9x512xf32>
    %cst_95 = arith.constant dense<0.000000e+00> : vector<16x512xf32>
    %290 = tpu.matmul %288, %289, %cst_95 {dimension_numbers = #tpu.dot_dimension_numbers<[1], [0], [0], [1], [0, 0, 1, 1], [], []>} : vector<16x9xf32>, vector<9x512xf32>, vector<16x512xf32> -> vector<16x512xf32>
    %291 = arith.addf %290, %287 : vector<16x512xf32>
    %c0_96 = arith.constant 0 : index
    %c17_97 = arith.constant 17 : index
    %292 = vector.load %arg5[%c0_96, %c17_97] : memref<16x546xf32, #tpu.memory_space<vmem>>, vector<16x512xf32>
    tpu.vector_store %arg5[%c0_96, %c17_97], %291 {strides = array<i32>} : memref<16x546xf32, #tpu.memory_space<vmem>>, vector<16x512xf32>,
    %c0_98 = arith.constant 0 : index
    %c512 = arith.constant 512 : index
    %293 = vector.load %arg2[%c0_98, %c512] : memref<16x896xf32, #tpu.memory_space<vmem>>, vector<16x145xf32>
    %c0_99 = arith.constant 0 : index
    %c0_100 = arith.constant 0 : index
    %294 = vector.load %arg5[%c0_99, %c0_100] : memref<16x546xf32, #tpu.memory_space<vmem>>, vector<16x514xf32>
    %295 = vector.extract_strided_slice %294 {offsets = [0, 0], sizes = [16, 512], strides = [1, 1]} : vector<16x514xf32> to vector<16x512xf32>
    %cst_101 = arith.constant 0.000000e+00 : f32
    %296 = vector.shape_cast %43 : vector<1x512xi1> to vector<1x512xi1>
    %297 = vector.broadcast %296 : vector<1x512xi1> to vector<16x512xi1>
    %298 = vector.broadcast %cst_101 : f32 to vector<16x512xf32>
    %299 = arith.select %297, %295, %298 : vector<16x512xi1>, vector<16x512xf32>
    %300 = vector.extract_strided_slice %294 {offsets = [0, 1], sizes = [16, 512], strides = [1, 1]} : vector<16x514xf32> to vector<16x512xf32>
    %cst_102 = arith.constant 0.000000e+00 : f32
    %301 = vector.shape_cast %40 : vector<1x512xi1> to vector<1x512xi1>
    %302 = vector.broadcast %301 : vector<1x512xi1> to vector<16x512xi1>
    %303 = vector.broadcast %cst_102 : f32 to vector<16x512xf32>
    %304 = arith.select %302, %300, %303 : vector<16x512xi1>, vector<16x512xf32>
    %305 = vector.extract_strided_slice %294 {offsets = [0, 2], sizes = [16, 512], strides = [1, 1]} : vector<16x514xf32> to vector<16x512xf32>
    %cst_103 = arith.constant 0.000000e+00 : f32
    %306 = vector.shape_cast %44 : vector<1x512xi1> to vector<1x512xi1>
    %307 = vector.broadcast %306 : vector<1x512xi1> to vector<16x512xi1>
    %308 = vector.broadcast %cst_103 : f32 to vector<16x512xf32>
    %309 = arith.select %307, %305, %308 : vector<16x512xi1>, vector<16x512xf32>
    %c0_104 = arith.constant 0 : index
    %c16_105 = arith.constant 16 : index
    %310 = vector.load %arg5[%c0_104, %c16_105] : memref<16x546xf32, #tpu.memory_space<vmem>>, vector<16x514xf32>
    %311 = vector.extract_strided_slice %310 {offsets = [0, 0], sizes = [16, 512], strides = [1, 1]} : vector<16x514xf32> to vector<16x512xf32>
    %cst_106 = arith.constant 0.000000e+00 : f32
    %312 = vector.shape_cast %36 : vector<1x512xi1> to vector<1x512xi1>
    %313 = vector.broadcast %312 : vector<1x512xi1> to vector<16x512xi1>
    %314 = vector.broadcast %cst_106 : f32 to vector<16x512xf32>
    %315 = arith.select %313, %311, %314 : vector<16x512xi1>, vector<16x512xf32>
    %316 = vector.extract_strided_slice %310 {offsets = [0, 1], sizes = [16, 512], strides = [1, 1]} : vector<16x514xf32> to vector<16x512xf32>
    %317 = vector.extract_strided_slice %310 {offsets = [0, 2], sizes = [16, 512], strides = [1, 1]} : vector<16x514xf32> to vector<16x512xf32>
    %cst_107 = arith.constant 0.000000e+00 : f32
    %318 = vector.shape_cast %38 : vector<1x512xi1> to vector<1x512xi1>
    %319 = vector.broadcast %318 : vector<1x512xi1> to vector<16x512xi1>
    %320 = vector.broadcast %cst_107 : f32 to vector<16x512xf32>
    %321 = arith.select %319, %317, %320 : vector<16x512xi1>, vector<16x512xf32>
    %c0_108 = arith.constant 0 : index
    %c32_109 = arith.constant 32 : index
    %322 = vector.load %arg5[%c0_108, %c32_109] : memref<16x546xf32, #tpu.memory_space<vmem>>, vector<16x514xf32>
    %323 = vector.extract_strided_slice %322 {offsets = [0, 0], sizes = [16, 512], strides = [1, 1]} : vector<16x514xf32> to vector<16x512xf32>
    %cst_110 = arith.constant 0.000000e+00 : f32
    %324 = vector.shape_cast %45 : vector<1x512xi1> to vector<1x512xi1>
    %325 = vector.broadcast %324 : vector<1x512xi1> to vector<16x512xi1>
    %326 = vector.broadcast %cst_110 : f32 to vector<16x512xf32>
    %327 = arith.select %325, %323, %326 : vector<16x512xi1>, vector<16x512xf32>
    %328 = vector.extract_strided_slice %322 {offsets = [0, 1], sizes = [16, 512], strides = [1, 1]} : vector<16x514xf32> to vector<16x512xf32>
    %cst_111 = arith.constant 0.000000e+00 : f32
    %329 = vector.shape_cast %42 : vector<1x512xi1> to vector<1x512xi1>
    %330 = vector.broadcast %329 : vector<1x512xi1> to vector<16x512xi1>
    %331 = vector.broadcast %cst_111 : f32 to vector<16x512xf32>
    %332 = arith.select %330, %328, %331 : vector<16x512xi1>, vector<16x512xf32>
    %333 = vector.extract_strided_slice %322 {offsets = [0, 2], sizes = [16, 512], strides = [1, 1]} : vector<16x514xf32> to vector<16x512xf32>
    %cst_112 = arith.constant 0.000000e+00 : f32
    %334 = vector.shape_cast %46 : vector<1x512xi1> to vector<1x512xi1>
    %335 = vector.broadcast %334 : vector<1x512xi1> to vector<16x512xi1>
    %336 = vector.broadcast %cst_112 : f32 to vector<16x512xf32>
    %337 = arith.select %335, %333, %336 : vector<16x512xi1>, vector<16x512xf32>
    %338 = tpu.concatenate %299, %304, %309, %315, %316, %321, %327, %332, %337, %47 in 0 : vector<16x512xf32>, vector<16x512xf32>, vector<16x512xf32>, vector<16x512xf32>, vector<16x512xf32>, vector<16x512xf32>, vector<16x512xf32>, vector<16x512xf32>, vector<16x512xf32>, vector<1x512xf32> -> vector<145x512xf32>
    %cst_113 = arith.constant dense<0.000000e+00> : vector<16x512xf32>
    %339 = tpu.matmul %293, %338, %cst_113 {dimension_numbers = #tpu.dot_dimension_numbers<[1], [0], [0], [1], [0, 0, 1, 1], [], []>} : vector<16x145xf32>, vector<145x512xf32>, vector<16x512xf32> -> vector<16x512xf32>
    %c0_114 = arith.constant 0 : index
    %c0_115 = arith.constant 0 : index
    %340 = vector.load %arg3[%c0_114, %c0_115] : memref<512x128xf32, #tpu.memory_space<vmem>>, vector<512x128xf32>
    %cst_116 = arith.constant dense<0.000000e+00> : vector<16x128xf32>
    %341 = tpu.matmul %339, %340, %cst_116 {dimension_numbers = #tpu.dot_dimension_numbers<[1], [0], [0], [1], [0, 0, 1, 1], [], []>} : vector<16x512xf32>, vector<512x128xf32>, vector<16x128xf32> -> vector<16x128xf32>
    %c0_117 = arith.constant 0 : index
    %c0_118 = arith.constant 0 : index
    %c0_119 = arith.constant 0 : index
    %342 = vector.load %arg4[%c0_117, %c0_118, %c0_119] : memref<1x16x128xf32, #tpu.memory_space<vmem>>, vector<1x16x128xf32>
    %343 = vector.shape_cast %342 : vector<1x16x128xf32> to vector<16x128xf32>
    %344 = vector.shape_cast %341 : vector<16x128xf32> to vector<1x16x128xf32>
    tpu.vector_store %arg4[%c0_117, %c0_118, %c0_119], %344 {strides = array<i32>} : memref<1x16x128xf32, #tpu.memory_space<vmem>>, vector<1x16x128xf32>,
    return
  }
  func.func @transform_0(%arg0: i32) -> (i32, i32, i32) {
    %c0_i32 = arith.constant 0 : i32
    %c0_i32_0 = arith.constant 0 : i32
    %c0_i32_1 = arith.constant 0 : i32
    return %arg0, %c0_i32, %c0_i32_0 : i32, i32, i32
  }
  func.func @transform_1(%arg0: i32) -> (i32, i32) {
    %c0_i32 = arith.constant 0 : i32
    %c0_i32_0 = arith.constant 0 : i32
    %c0_i32_1 = arith.constant 0 : i32
    return %c0_i32, %c0_i32_0 : i32, i32
  }
  func.func @transform_2(%arg0: i32) -> (i32, i32) {
    %c0_i32 = arith.constant 0 : i32
    %c0_i32_0 = arith.constant 0 : i32
    %c0_i32_1 = arith.constant 0 : i32
    return %c0_i32, %c0_i32_0 : i32, i32
  }
  func.func @transform_3(%arg0: i32) -> (i32, i32, i32) {
    %c0_i32 = arith.constant 0 : i32
    %c0_i32_0 = arith.constant 0 : i32
    %c0_i32_1 = arith.constant 0 : i32
    return %arg0, %c0_i32, %c0_i32_0 : i32, i32, i32
  }
}

</mosaic_0001>

<llo_original>
// kernel: encoder_forward.1
$region0: #{encoder_forward.1}
  #allocation0 [shape = 'u32[]', space=smem, size = 0x4, offset = 0x4, fixed_abs, tag = 'smem constant byte address 0x4 - core index']
  #allocation1 [shape = 'u32[144,128]{1,0:T(1,128)}', space=vmem, size = 0x12000, scoped, tag = 'internal scratch']
  #allocation2 [shape = 'f32[16,546]{1,0:T(8,128)}', space=vmem, size = 0xa000, scoped, tag = 'scratch operand']
  %s0 = inlined_call_operand.vmem [shape: f32[1,4,512], index: 0, kind: input, shape index: {}]
  %s1 = inlined_call_operand.vmem [shape: f32[16,896], index: 1, kind: input, shape index: {}]
  %s2 = inlined_call_operand.vmem [shape: f32[512,128], index: 2, kind: input, shape index: {}]
  %s3 = inlined_call_operand.vmem [shape: f32[1,16,128], index: 3, kind: output, shape index: {}]
  %s4 = sld [smem:[#allocation0]]
  $region22: #{encoder_forward.1} parent=0
    _
  %s6 = ssub.s32 1, %s4
  %s7 = scalar_select 0, %s6, %s4
  // Predicated region
  $region2: #{encoder_forward.1} parent=0 // pred_check
    _
  $region3: #{encoder_forward.1} parent=0 // pred_check_branch
    %9 = sbr.rel (0) target = $region5
  $region4: #{encoder_forward.1} parent=0 // pred_region
    _
  $region5: #{encoder_forward.1} parent=0 // pred_fallthru
    _
  // Predicated region
  $region6: #{encoder_forward.1} parent=0 // pred_check
    _
  $region7: #{encoder_forward.1} parent=0 // pred_check_branch
    %11 = sbr.rel (0) target = $region9
  $region8: #{encoder_forward.1} parent=0 // pred_region
    _
  $region9: #{encoder_forward.1} parent=0 // pred_fallthru
    _
  // Predicated region
  $region10: #{encoder_forward.1} parent=0 // pred_check
    _
  $region11: #{encoder_forward.1} parent=0 // pred_check_branch
    %13 = sbr.rel (0) target = $region13
  $region12: #{encoder_forward.1} parent=0 // pred_region
    _
  $region13: #{encoder_forward.1} parent=0 // pred_fallthru
    _
  %14 = vst [vmem:[#allocation2] sm:$0xff] 0.0
  %15 = vst [vmem:[#allocation2 + $0x8] sm:$0xff] 0.0
  %16 = vst [vmem:[#allocation2 + $0x10] sm:$0xff] 0.0
  %17 = vst [vmem:[#allocation2 + $0x18] sm:$0xff] 0.0
  %vm18 = vcmask 277504
  %19 = vst.msk [vmem:[#allocation2 + $0x20] sm:$0xff] %vm18, 0.0
  %20 = vst [vmem:[#allocation2 + $0x28] sm:$0xff] 0.0
  %21 = vst [vmem:[#allocation2 + $0x30] sm:$0xff] 0.0
  %22 = vst [vmem:[#allocation2 + $0x38] sm:$0xff] 0.0
  %23 = vst [vmem:[#allocation2 + $0x40] sm:$0xff] 0.0
  %24 = vst.msk [vmem:[#allocation2 + $0x48] sm:$0xff] %vm18, 0.0
  %v25 = vlaneseq
  %v26 = vand.u32 %v25, 127
  %v27 = vadd.s32 %v26, 128
  %v28 = vadd.s32 %v26, 256
  %v29 = vadd.s32 %v26, 384
  %vm30 = vcmp.lt.s32.totalorder %v26, 0
  %v31 = vsub.s32 0, %v26
  %v32 = vsel %vm30, %v31, %v26
  %v33 = vshrl.u32 %v32, 4
  %v34 = vand.u32 %v32, 15
  %v35 = vsub.s32 0, %v34
  %v36 = vsel %vm30, %v35, %v34
  %vm37 = vcmp.lt.s32.totalorder %v27, 0
  %v38 = vsub.s32 0, %v27
  %v39 = vsel %vm37, %v38, %v27
  %v40 = vshrl.u32 %v39, 4
  %v41 = vand.u32 %v39, 15
  %v42 = vsub.s32 0, %v41
  %v43 = vsel %vm37, %v42, %v41
  %vm44 = vcmp.lt.s32.totalorder %v28, 0
  %v45 = vsub.s32 0, %v28
  %v46 = vsel %vm44, %v45, %v28
  %v47 = vshrl.u32 %v46, 4
  %v48 = vand.u32 %v46, 15
  %v49 = vsub.s32 0, %v48
  %v50 = vsel %vm44, %v49, %v48
  %vm51 = vcmp.lt.s32.totalorder %v29, 0
  %v52 = vsub.s32 0, %v29
  %v53 = vsel %vm51, %v52, %v29
  %v54 = vshrl.u32 %v53, 4
  %v55 = vand.u32 %v53, 15
  %v56 = vsub.s32 0, %v55
  %v57 = vsel %vm51, %v56, %v55
  %vm58 = vcmp.ne.s32.totalorder %v36, 0
  %vm59 = vcmp.ne.s32.totalorder %v43, 0
  %vm60 = vcmp.ne.s32.totalorder %v50, 0
  %vm61 = vcmp.ne.s32.totalorder %v57, 0
  %vm62 = vcmp.lt.s32.totalorder %v36, 0
  %vm63 = vcmp.lt.s32.totalorder %v43, 0
  %vm64 = vcmp.lt.s32.totalorder %v50, 0
  %vm65 = vcmp.lt.s32.totalorder %v57, 0
  %vm66 = vmand %vm62, %vm58
  %vm67 = vmand %vm63, %vm59
  %vm68 = vmand %vm64, %vm60
  %vm69 = vmand %vm65, %vm61
  %v70 = vadd.s32 %v36, 16
  %v71 = vadd.s32 %v43, 16
  %v72 = vadd.s32 %v50, 16
  %v73 = vadd.s32 %v57, 16
  %v74 = vsel %vm66, %v70, %v36
  %v75 = vsel %vm67, %v71, %v43
  %v76 = vsel %vm68, %v72, %v50
  %v77 = vsel %vm69, %v73, %v57
  %vm78 = vcmp.lt.s32.totalorder %v26, 0
  %v79 = vsub.s32 0, %v26
  %v80 = vsel %vm78, %v79, %v26
  %v81 = vshrl.u32 %v80, 8
  %v82 = vand.u32 %v80, 255
  %v83 = vsub.s32 0, %v82
  %v84 = vsel %vm78, %v83, %v82
  %vm85 = vcmp.lt.s32.totalorder %v27, 0
  %v86 = vsub.s32 0, %v27
  %v87 = vsel %vm85, %v86, %v27
  %v88 = vshrl.u32 %v87, 8
  %v89 = vand.u32 %v87, 255
  %v90 = vsub.s32 0, %v89
  %v91 = vsel %vm85, %v90, %v89
  %vm92 = vcmp.lt.s32.totalorder %v28, 0
  %v93 = vsub.s32 0, %v28
  %v94 = vsel %vm92, %v93, %v28
  %v95 = vshrl.u32 %v94, 8
  %v96 = vand.u32 %v94, 255
  %v97 = vsub.s32 0, %v96
  %v98 = vsel %vm92, %v97, %v96
  %vm99 = vcmp.lt.s32.totalorder %v29, 0
  %v100 = vsub.s32 0, %v29
  %v101 = vsel %vm99, %v100, %v29
  %v102 = vshrl.u32 %v101, 8
  %v103 = vand.u32 %v101, 255
  %v104 = vsub.s32 0, %v103
  %v105 = vsel %vm99, %v104, %v103
  %vm106 = vcmp.ne.s32.totalorder %v84, 0
  %vm107 = vcmp.ne.s32.totalorder %v91, 0
  %vm108 = vcmp.ne.s32.totalorder %v98, 0
  %vm109 = vcmp.ne.s32.totalorder %v105, 0
  %vm110 = vcmp.lt.s32.totalorder %v84, 0
  %vm111 = vcmp.lt.s32.totalorder %v91, 0
  %vm112 = vcmp.lt.s32.totalorder %v98, 0
  %vm113 = vcmp.lt.s32.totalorder %v105, 0
  %vm114 = vmand %vm110, %vm106
  %vm115 = vmand %vm111, %vm107
  %vm116 = vmand %vm112, %vm108
  %vm117 = vmand %vm113, %vm109
  %v118 = vadd.s32 %v84, 256
  %v119 = vadd.s32 %v91, 256
  %v120 = vadd.s32 %v98, 256
  %v121 = vadd.s32 %v105, 256
  %v122 = vsel %vm114, %v118, %v84
  %v123 = vsel %vm115, %v119, %v91
  %v124 = vsel %vm116, %v120, %v98
  %v125 = vsel %vm117, %v121, %v105
  %vm126 = vcmp.ge.s32.totalorder %v74, 1
  %vm127 = vcmp.ge.s32.totalorder %v75, 1
  %vm128 = vcmp.ge.s32.totalorder %v76, 1
  %vm129 = vcmp.ge.s32.totalorder %v77, 1
  %vm130 = vcmp.le.s32.totalorder %v74, 14
  %vm131 = vcmp.le.s32.totalorder %v75, 14
  %vm132 = vcmp.le.s32.totalorder %v76, 14
  %vm133 = vcmp.le.s32.totalorder %v77, 14
  %vm134 = vcmp.ge.s32.totalorder %v122, 16
  %vm135 = vcmp.ge.s32.totalorder %v123, 16
  %vm136 = vcmp.ge.s32.totalorder %v124, 16
  %vm137 = vcmp.ge.s32.totalorder %v125, 16
  %vm138 = vcmp.lt.s32.totalorder %v122, 240
  %vm139 = vcmp.lt.s32.totalorder %v123, 240
  %vm140 = vcmp.lt.s32.totalorder %v124, 240
  %vm141 = vcmp.lt.s32.totalorder %v125, 240
  %vm142 = vmand %vm134, %vm126
  %vm143 = vmand %vm135, %vm127
  %vm144 = vmand %vm136, %vm128
  %vm145 = vmand %vm137, %vm129
  %vm146 = vmand %vm134, %vm130
  %vm147 = vmand %vm135, %vm131
  %vm148 = vmand %vm136, %vm132
  %vm149 = vmand %vm137, %vm133
  %vm150 = vmand %vm138, %vm126
  %vm151 = vmand %vm139, %vm127
  %vm152 = vmand %vm140, %vm128
  %vm153 = vmand %vm141, %vm129
  %vm154 = vmand %vm138, %vm130
  %vm155 = vmand %vm139, %vm131
  %vm156 = vmand %vm140, %vm132
  %vm157 = vmand %vm141, %vm133
  %v158 = vld [vmem:[%s0] sm:$0xff]
  %v159 = vld [vmem:[%s0 + $0x8] sm:$0xff]
  %v162 = vcombine.high %v158, %v158
  %v163 = vcombine.high %v159, %v159
  %164 = vrot.lane.b32.xlu0 %v158, 17
  %v165 = vpop.permute.xlu0 %164
  %166 = vrot.lane.b32.xlu0 %v162, 17
  %v167 = vpop.permute.xlu0 %166
  %168 = vrot.lane.b32.xlu0 %v159, 17
  %v169 = vpop.permute.xlu0 %168
  %170 = vrot.lane.b32.xlu0 %v163, 17
  %v171 = vpop.permute.xlu0 %170
  %vm172 = vcmask 138240
  %v173 = vsel %vm172, %v165, %v167
  %v174 = vsel %vm172, %v167, %v169
  %v175 = vsel %vm172, %v169, %v171
  %vm181 = vcmask 1043592
  %182 = vst.msk [vmem:[#allocation2] sm:$0xf] %vm181, %v165
  %183 = vst [vmem:[#allocation2 + $0x8] sm:$0xf] %v173
  %184 = vst [vmem:[#allocation2 + $0x10] sm:$0xf] %v174
  %185 = vst [vmem:[#allocation2 + $0x18] sm:$0xf] %v175
  %vm186 = vcmask 134144
  %187 = vst.msk [vmem:[#allocation2 + $0x20] sm:$0xf] %vm186, %v171
  %v188 = vld [vmem:[%s1] sm:$0xff]
  %v189 = vld [vmem:[#allocation2] sm:$0xff]
  %v190 = vld [vmem:[#allocation2 + $0x8] sm:$0xff]
  %v191 = vld [vmem:[#allocation2 + $0x10] sm:$0xff]
  %v192 = vld [vmem:[#allocation2 + $0x18] sm:$0xff]
  %v193 = vld [vmem:[#allocation2 + $0x20] sm:$0xff]
  %v194 = vsel %vm142, 1, 0
  %v195 = vsel %vm143, 1, 0
  %v196 = vsel %vm144, 1, 0
  %v197 = vsel %vm145, 1, 0
  %vm198 = vcmp.eq.s32.totalorder %v194, 1
  %vm199 = vcmp.eq.s32.totalorder %v195, 1
  %vm200 = vcmp.eq.s32.totalorder %v196, 1
  %vm201 = vcmp.eq.s32.totalorder %v197, 1
  %v202 = vsel %vm198, %v189, 0.0
  %v203 = vsel %vm199, %v190, 0.0
  %v204 = vsel %vm200, %v191, 0.0
  %v205 = vsel %vm201, %v192, 0.0
  %v206 = vsel %vm134, 1, 0
  %v207 = vsel %vm135, 1, 0
  %v208 = vsel %vm136, 1, 0
  %v209 = vsel %vm137, 1, 0
  %vm210 = vcmp.eq.s32.totalorder %v206, 1
  %vm211 = vcmp.eq.s32.totalorder %v207, 1
  %vm212 = vcmp.eq.s32.totalorder %v208, 1
  %vm213 = vcmp.eq.s32.totalorder %v209, 1
  %219 = vrot.lane.b32.xlu0 %v189, 127
  %v220 = vpop.permute.xlu0 %219
  %221 = vrot.lane.b32.xlu0 %v190, 127
  %v222 = vpop.permute.xlu0 %221
  %223 = vrot.lane.b32.xlu0 %v191, 127
  %v224 = vpop.permute.xlu0 %223
  %225 = vrot.lane.b32.xlu0 %v192, 127
  %v226 = vpop.permute.xlu0 %225
  %227 = vrot.lane.b32.xlu0 %v193, 127
  %v228 = vpop.permute.xlu0 %227
  %vm229 = vcmask 1039360
  %v230 = vsel %vm229, %v220, %v222
  %v231 = vsel %vm229, %v222, %v224
  %v232 = vsel %vm229, %v224, %v226
  %v233 = vsel %vm229, %v226, %v228
  %v238 = vsel %vm210, %v230, 0.0
  %v239 = vsel %vm211, %v231, 0.0
  %v240 = vsel %vm212, %v232, 0.0
  %v241 = vsel %vm213, %v233, 0.0
  %v242 = vsel %vm146, 1, 0
  %v243 = vsel %vm147, 1, 0
  %v244 = vsel %vm148, 1, 0
  %v245 = vsel %vm149, 1, 0
  %vm246 = vcmp.eq.s32.totalorder %v242, 1
  %vm247 = vcmp.eq.s32.totalorder %v243, 1
  %vm248 = vcmp.eq.s32.totalorder %v244, 1
  %vm249 = vcmp.eq.s32.totalorder %v245, 1
  %250 = vrot.lane.b32.xlu0 %v189, 126
  %v251 = vpop.permute.xlu0 %250
  %252 = vrot.lane.b32.xlu0 %v190, 126
  %v253 = vpop.permute.xlu0 %252
  %254 = vrot.lane.b32.xlu0 %v191, 126
  %v255 = vpop.permute.xlu0 %254
  %256 = vrot.lane.b32.xlu0 %v192, 126
  %v257 = vpop.permute.xlu0 %256
  %258 = vrot.lane.b32.xlu0 %v193, 126
  %v259 = vpop.permute.xlu0 %258
  %vm260 = vcmask 1031168
  %v261 = vsel %vm260, %v251, %v253
  %v262 = vsel %vm260, %v253, %v255
  %v263 = vsel %vm260, %v255, %v257
  %v264 = vsel %vm260, %v257, %v259
  %v269 = vsel %vm246, %v261, 0.0
  %v270 = vsel %vm247, %v262, 0.0
  %v271 = vsel %vm248, %v263, 0.0
  %v272 = vsel %vm249, %v264, 0.0
  %v273 = vsel %vm126, 1, 0
  %v274 = vsel %vm127, 1, 0
  %v275 = vsel %vm128, 1, 0
  %v276 = vsel %vm129, 1, 0
  %vm277 = vcmp.eq.s32.totalorder %v273, 1
  %vm278 = vcmp.eq.s32.totalorder %v274, 1
  %vm279 = vcmp.eq.s32.totalorder %v275, 1
  %vm280 = vcmp.eq.s32.totalorder %v276, 1
  %281 = vrot.lane.b32.xlu0 %v189, 112
  %v282 = vpop.permute.xlu0 %281
  %283 = vrot.lane.b32.xlu0 %v190, 112
  %v284 = vpop.permute.xlu0 %283
  %285 = vrot.lane.b32.xlu0 %v191, 112
  %v286 = vpop.permute.xlu0 %285
  %287 = vrot.lane.b32.xlu0 %v192, 112
  %v288 = vpop.permute.xlu0 %287
  %289 = vrot.lane.b32.xlu0 %v193, 112
  %v290 = vpop.permute.xlu0 %289
  %vm291 = vcmask 916480
  %v292 = vsel %vm291, %v282, %v284
  %v293 = vsel %vm291, %v284, %v286
  %v294 = vsel %vm291, %v286, %v288
  %v295 = vsel %vm291, %v288, %v290
  %v300 = vsel %vm277, %v292, 0.0
  %v301 = vsel %vm278, %v293, 0.0
  %v302 = vsel %vm279, %v294, 0.0
  %v303 = vsel %vm280, %v295, 0.0
  %v304 = vsel %vm130, 1, 0
  %v305 = vsel %vm131, 1, 0
  %v306 = vsel %vm132, 1, 0
  %v307 = vsel %vm133, 1, 0
  %vm308 = vcmp.eq.s32.totalorder %v304, 1
  %vm309 = vcmp.eq.s32.totalorder %v305, 1
  %vm310 = vcmp.eq.s32.totalorder %v306, 1
  %vm311 = vcmp.eq.s32.totalorder %v307, 1
  %312 = vrot.lane.b32.xlu0 %v189, 110
  %v313 = vpop.permute.xlu0 %312
  %314 = vrot.lane.b32.xlu0 %v190, 110
  %v315 = vpop.permute.xlu0 %314
  %316 = vrot.lane.b32.xlu0 %v191, 110
  %v317 = vpop.permute.xlu0 %316
  %318 = vrot.lane.b32.xlu0 %v192, 110
  %v319 = vpop.permute.xlu0 %318
  %320 = vrot.lane.b32.xlu0 %v193, 110
  %v321 = vpop.permute.xlu0 %320
  %vm322 = vcmask 900096
  %v323 = vsel %vm322, %v313, %v315
  %v324 = vsel %vm322, %v315, %v317
  %v325 = vsel %vm322, %v317, %v319
  %v326 = vsel %vm322, %v319, %v321
  %v331 = vsel %vm308, %v323, 0.0
  %v332 = vsel %vm309, %v324, 0.0
  %v333 = vsel %vm310, %v325, 0.0
  %v334 = vsel %vm311, %v326, 0.0
  %v335 = vsel %vm150, 1, 0
  %v336 = vsel %vm151, 1, 0
  %v337 = vsel %vm152, 1, 0
  %v338 = vsel %vm153, 1, 0
  %vm339 = vcmp.eq.s32.totalorder %v335, 1
  %vm340 = vcmp.eq.s32.totalorder %v336, 1
  %vm341 = vcmp.eq.s32.totalorder %v337, 1
  %vm342 = vcmp.eq.s32.totalorder %v338, 1
  %343 = vrot.lane.b32.xlu0 %v189, 96
  %v344 = vpop.permute.xlu0 %343
  %345 = vrot.lane.b32.xlu0 %v190, 96
  %v346 = vpop.permute.xlu0 %345
  %347 = vrot.lane.b32.xlu0 %v191, 96
  %v348 = vpop.permute.xlu0 %347
  %349 = vrot.lane.b32.xlu0 %v192, 96
  %v350 = vpop.permute.xlu0 %349
  %351 = vrot.lane.b32.xlu0 %v193, 96
  %v352 = vpop.permute.xlu0 %351
  %vm353 = vcmask 785408
  %v354 = vsel %vm353, %v344, %v346
  %v355 = vsel %vm353, %v346, %v348
  %v356 = vsel %vm353, %v348, %v350
  %v357 = vsel %vm353, %v350, %v352
  %v362 = vsel %vm339, %v354, 0.0
  %v363 = vsel %vm340, %v355, 0.0
  %v364 = vsel %vm341, %v356, 0.0
  %v365 = vsel %vm342, %v357, 0.0
  %v366 = vsel %vm138, 1, 0
  %v367 = vsel %vm139, 1, 0
  %v368 = vsel %vm140, 1, 0
  %v369 = vsel %vm141, 1, 0
  %vm370 = vcmp.eq.s32.totalorder %v366, 1
  %vm371 = vcmp.eq.s32.totalorder %v367, 1
  %vm372 = vcmp.eq.s32.totalorder %v368, 1
  %vm373 = vcmp.eq.s32.totalorder %v369, 1
  %374 = vrot.lane.b32.xlu0 %v189, 95
  %v375 = vpop.permute.xlu0 %374
  %376 = vrot.lane.b32.xlu0 %v190, 95
  %v377 = vpop.permute.xlu0 %376
  %378 = vrot.lane.b32.xlu0 %v191, 95
  %v379 = vpop.permute.xlu0 %378
  %380 = vrot.lane.b32.xlu0 %v192, 95
  %v381 = vpop.permute.xlu0 %380
  %382 = vrot.lane.b32.xlu0 %v193, 95
  %v383 = vpop.permute.xlu0 %382
  %vm384 = vcmask 777216
  %v385 = vsel %vm384, %v375, %v377
  %v386 = vsel %vm384, %v377, %v379
  %v387 = vsel %vm384, %v379, %v381
  %v388 = vsel %vm384, %v381, %v383
  %v393 = vsel %vm370, %v385, 0.0
  %v394 = vsel %vm371, %v386, 0.0
  %v395 = vsel %vm372, %v387, 0.0
  %v396 = vsel %vm373, %v388, 0.0
  %v397 = vsel %vm154, 1, 0
  %v398 = vsel %vm155, 1, 0
  %v399 = vsel %vm156, 1, 0
  %v400 = vsel %vm157, 1, 0
  %vm401 = vcmp.eq.s32.totalorder %v397, 1
  %vm402 = vcmp.eq.s32.totalorder %v398, 1
  %vm403 = vcmp.eq.s32.totalorder %v399, 1
  %vm404 = vcmp.eq.s32.totalorder %v400, 1
  %405 = vrot.lane.b32.xlu0 %v189, 94
  %v406 = vpop.permute.xlu0 %405
  %407 = vrot.lane.b32.xlu0 %v190, 94
  %v408 = vpop.permute.xlu0 %407
  %409 = vrot.lane.b32.xlu0 %v191, 94
  %v410 = vpop.permute.xlu0 %409
  %411 = vrot.lane.b32.xlu0 %v192, 94
  %v412 = vpop.permute.xlu0 %411
  %413 = vrot.lane.b32.xlu0 %v193, 94
  %v414 = vpop.permute.xlu0 %413
  %vm415 = vcmask 769024
  %v416 = vsel %vm415, %v406, %v408
  %v417 = vsel %vm415, %v408, %v410
  %v418 = vsel %vm415, %v410, %v412
  %v419 = vsel %vm415, %v412, %v414
  %v424 = vsel %vm401, %v416, 0.0
  %v425 = vsel %vm402, %v417, 0.0
  %v426 = vsel %vm403, %v418, 0.0
  %v427 = vsel %vm404, %v419, 0.0
  %428 = vrot.lane.b32.xlu0 %v189, 111
  %v429 = vpop.permute.xlu0 %428
  %430 = vrot.lane.b32.xlu0 %v190, 111
  %v431 = vpop.permute.xlu0 %430
  %432 = vrot.lane.b32.xlu0 %v191, 111
  %v433 = vpop.permute.xlu0 %432
  %434 = vrot.lane.b32.xlu0 %v192, 111
  %v435 = vpop.permute.xlu0 %434
  %436 = vrot.lane.b32.xlu0 %v193, 111
  %v437 = vpop.permute.xlu0 %436
  %vm438 = vcmask 908288
  %v439 = vsel %vm438, %v429, %v431
  %v440 = vsel %vm438, %v431, %v433
  %v441 = vsel %vm438, %v433, %v435
  %v442 = vsel %vm438, %v435, %v437
  %vm447 = vcmask 596992
  %v449 = vsel %vm447, %v188, 0
  %vm451 = vcmask 1040384
  %v453 = vsel %vm451, 1.0, 0
  %455 = vmatprep.subr.mxu0 %v203
  %456 = vmatpush1.msra.mxu0 %v202
  %457 = vmatprep.subr.mxu0 %v239
  %458 = vmatpush1.msra.mxu0 %v238
  %459 = vmatprep.subr.mxu0 %v270
  %460 = vmatpush1.msra.mxu0 %v269
  %461 = vmatprep.subr.mxu0 %v301
  %462 = vmatpush1.msra.mxu0 %v300
  %463 = vmatprep.subr.mxu0 %v440
  %464 = vmatpush1.msra.mxu0 %v439
  %465 = vmatprep.subr.mxu0 %v332
  %466 = vmatpush1.msra.mxu0 %v331
  %467 = vmatprep.subr.mxu0 %v363
  %468 = vmatpush1.msra.mxu0 %v362
  %469 = vmatprep.subr.mxu0 %v394
  %470 = vmatpush1.msra.mxu0 %v393
  %471 = vmatprep.subr.mxu0 %v425
  %472 = vmatpush1.msra.mxu0 %v424
  %473 = vmatprep.subr.mxu0 %v453
  %474 = vmatpush1.msra.mxu0 %v453
  %475 = vmatprep.subr.mxu0 0.0
  %476 = vmatpush1.msra.mxu0 0.0
  %477 = vmatprep.subr.mxu0 0.0
  %478 = vmatpush1.msra.mxu0 0.0
  %479 = vmatprep.subr.mxu0 0.0
  %480 = vmatpush1.msra.mxu0 0.0
  %481 = vmatprep.subr.mxu0 0.0
  %482 = vmatpush1.msra.mxu0 0.0
  %483 = vmatprep.subr.mxu0 0.0
  %484 = vmatpush1.msra.mxu0 0.0
  %485 = vmatprep.subr.mxu0 0.0
  %486 = vmatpush1.msra.mxu0 0.0
  %487 = vmatprep.subr.mxu0 0.0
  %488 = vmatpush1.msra.mxu0 0.0
  %489 = vmatprep.subr.mxu0 0.0
  %490 = vmatpush1.msra.mxu0 0.0
  %491 = vmatprep.subr.mxu0 0.0
  %492 = vmatpush1.msra.mxu0 0.0
  %493 = vmatprep.subr.mxu0 0.0
  %494 = vmatpush1.msra.mxu0 0.0
  %495 = vmatprep.subr.mxu0 0.0
  %496 = vmatpush1.msra.mxu0 0.0
  %497 = vmatprep.subr.mxu0 0.0
  %498 = vmatpush1.msra.mxu0 0.0
  %499 = vmatprep.subr.mxu0 0.0
  %500 = vmatpush1.msra.mxu0 0.0
  %501 = vmatprep.subr.mxu0 0.0
  %502 = vmatpush1.msra.mxu0 0.0
  %503 = vmatprep.subr.mxu0 0.0
  %504 = vmatpush1.msra.mxu0 0.0
  %505 = vmatprep.subr.mxu0 0.0
  %506 = vmatpush1.msra.mxu0 0.0
  %507 = vmatprep.subr.mxu0 0.0
  %508 = vmatpush1.msra.mxu0 0.0
  %509 = vmatprep.subr.mxu0 0.0
  %510 = vmatpush1.msra.mxu0 0.0
  %511 = vmatprep.subr.mxu0 0.0
  %512 = vmatpush1.msra.mxu0 0.0
  %513 = vmatprep.subr.mxu0 0.0
  %514 = vmatpush1.msra.mxu0 0.0
  %515 = vmatprep.subr.mxu0 0.0
  %516 = vmatpush1.msra.mxu0 0.0
  %517 = vmatprep.subr.mxu0 0.0
  %518 = vmatpush1.msra.mxu0 0.0
  %519 = vmatprep.mubr.f32.mxu0 0.0
  %520 = vmatmul.mubr.f32.gmra.mrb[0].mxu0 %v449
  %v521 = vpop.f32.mrb[0].mxu0
  %v522 = vadd.f32 0.0, %v521
  %v523 = vpop.f32.mrb[0].mxu0
  %v524 = vadd.f32 0.0, %v523
  %525 = vdwg.mxu0
  %526 = vmatprep.subr.mxu0 %v205
  %527 = vmatpush1.msra.mxu0 %v204
  %528 = vmatprep.subr.mxu0 %v241
  %529 = vmatpush1.msra.mxu0 %v240
  %530 = vmatprep.subr.mxu0 %v272
  %531 = vmatpush1.msra.mxu0 %v271
  %532 = vmatprep.subr.mxu0 %v303
  %533 = vmatpush1.msra.mxu0 %v302
  %534 = vmatprep.subr.mxu0 %v442
  %535 = vmatpush1.msra.mxu0 %v441
  %536 = vmatprep.subr.mxu0 %v334
  %537 = vmatpush1.msra.mxu0 %v333
  %538 = vmatprep.subr.mxu0 %v365
  %539 = vmatpush1.msra.mxu0 %v364
  %540 = vmatprep.subr.mxu0 %v396
  %541 = vmatpush1.msra.mxu0 %v395
  %542 = vmatprep.subr.mxu0 %v427
  %543 = vmatpush1.msra.mxu0 %v426
  %544 = vmatprep.subr.mxu0 %v453
  %545 = vmatpush1.msra.mxu0 %v453
  %546 = vmatprep.subr.mxu0 0.0
  %547 = vmatpush1.msra.mxu0 0.0
  %548 = vmatprep.subr.mxu0 0.0
  %549 = vmatpush1.msra.mxu0 0.0
  %550 = vmatprep.subr.mxu0 0.0
  %551 = vmatpush1.msra.mxu0 0.0
  %552 = vmatprep.subr.mxu0 0.0
  %553 = vmatpush1.msra.mxu0 0.0
  %554 = vmatprep.subr.mxu0 0.0
  %555 = vmatpush1.msra.mxu0 0.0
  %556 = vmatprep.subr.mxu0 0.0
  %557 = vmatpush1.msra.mxu0 0.0
  %558 = vmatprep.subr.mxu0 0.0
  %559 = vmatpush1.msra.mxu0 0.0
  %560 = vmatprep.subr.mxu0 0.0
  %561 = vmatpush1.msra.mxu0 0.0
  %562 = vmatprep.subr.mxu0 0.0
  %563 = vmatpush1.msra.mxu0 0.0
  %564 = vmatprep.subr.mxu0 0.0
  %565 = vmatpush1.msra.mxu0 0.0
  %566 = vmatprep.subr.mxu0 0.0
  %567 = vmatpush1.msra.mxu0 0.0
  %568 = vmatprep.subr.mxu0 0.0
  %569 = vmatpush1.msra.mxu0 0.0
  %570 = vmatprep.subr.mxu0 0.0
  %571 = vmatpush1.msra.mxu0 0.0
  %572 = vmatprep.subr.mxu0 0.0
  %573 = vmatpush1.msra.mxu0 0.0
  %574 = vmatprep.subr.mxu0 0.0
  %575 = vmatpush1.msra.mxu0 0.0
  %576 = vmatprep.subr.mxu0 0.0
  %577 = vmatpush1.msra.mxu0 0.0
  %578 = vmatprep.subr.mxu0 0.0
  %579 = vmatpush1.msra.mxu0 0.0
  %580 = vmatprep.subr.mxu0 0.0
  %581 = vmatpush1.msra.mxu0 0.0
  %582 = vmatprep.subr.mxu0 0.0
  %583 = vmatpush1.msra.mxu0 0.0
  %584 = vmatprep.subr.mxu0 0.0
  %585 = vmatpush1.msra.mxu0 0.0
  %586 = vmatprep.subr.mxu0 0.0
  %587 = vmatpush1.msra.mxu0 0.0
  %588 = vmatprep.subr.mxu0 0.0
  %589 = vmatpush1.msra.mxu0 0.0
  %590 = vmatprep.mubr.f32.mxu0 0.0
  %591 = vmatmul.mubr.f32.gmra.mrb[0].mxu0 %v449
  %v592 = vpop.f32.mrb[0].mxu0
  %v593 = vadd.f32 0.0, %v592
  %v594 = vpop.f32.mrb[0].mxu0
  %v595 = vadd.f32 0.0, %v594
  %596 = vdwg.mxu0
  %v597 = vadd.f32 %v522, %v524
  %598 = vadd.xlane.f32.xlu0 %v597
  %v599 = vpop.xlane.xlu0 %598
  %v600 = vrcp.pop 256.0
  %v601 = vmul.f32 %v599, %v600
  %v602 = vsub.f32 %v522, %v601
  %v603 = vsub.f32 %v524, %v601
  %v604 = vmul.f32 %v602, %v602
  %v605 = vmul.f32 %v603, %v603
  %v606 = vadd.f32 %v604, %v605
  %607 = vadd.xlane.f32.xlu0 %v606
  %v608 = vpop.xlane.xlu0 %607
  %v609 = vmul.f32 %v608, %v600
  %v610 = vadd.f32 %v609, 1e-05
  %v611 = vrsqrt.pop %v610
  %v612 = vmul.f32 %v602, %v611
  %v613 = vmul.f32 %v603, %v611
  %v614 = vxor.u32 %v612, 2147483648
  %v615 = vxor.u32 %v613, 2147483648
  %v616 = vmul.f32 %v614, 1.442695
  %v617 = vpow.pop %v616
  %v618 = vmul.f32 %v615, 1.442695
  %v619 = vpow.pop %v618
  %v620 = vadd.f32 %v617, 1.0
  %v621 = vadd.f32 %v619, 1.0
  %v622 = vrcp.pop %v620
  %v623 = vmul.f32 1.0, %v622
  %v624 = vrcp.pop %v621
  %v625 = vmul.f32 1.0, %v624
  %v626 = vmul.f32 %v612, %v623
  %v627 = vmul.f32 %v613, %v625
  %630 = vrot.lane.b32.xlu0 %v626, 17
  %v631 = vpop.permute.xlu0 %630
  %632 = vrot.lane.b32.xlu0 %v627, 17
  %v633 = vpop.permute.xlu0 %632
  %v634 = vsel %vm172, %v631, %v633
  %vm638 = vcmask 1047688
  %639 = vst.msk [vmem:[#allocation2] sm:$0xff] %vm638, %v631
  %640 = vst [vmem:[#allocation2 + $0x8] sm:$0xff] %v634
  %641 = vst.msk [vmem:[#allocation2 + $0x10] sm:$0xff] %vm172, %v633
  %v642 = vadd.f32 %v593, %v595
  %643 = vadd.xlane.f32.xlu0 %v642
  %v644 = vpop.xlane.xlu0 %643
  %v645 = vmul.f32 %v644, %v600
  %v646 = vsub.f32 %v593, %v645
  %v647 = vsub.f32 %v595, %v645
  %v648 = vmul.f32 %v646, %v646
  %v649 = vmul.f32 %v647, %v647
  %v650 = vadd.f32 %v648, %v649
  %651 = vadd.xlane.f32.xlu0 %v650
  %v652 = vpop.xlane.xlu0 %651
  %v653 = vmul.f32 %v652, %v600
  %v654 = vadd.f32 %v653, 1e-05
  %v655 = vrsqrt.pop %v654
  %v656 = vmul.f32 %v646, %v655
  %v657 = vmul.f32 %v647, %v655
  %v658 = vxor.u32 %v656, 2147483648
  %v659 = vxor.u32 %v657, 2147483648
  %v660 = vmul.f32 %v658, 1.442695
  %v661 = vpow.pop %v660
  %v662 = vmul.f32 %v659, 1.442695
  %v663 = vpow.pop %v662
  %v664 = vadd.f32 %v661, 1.0
  %v665 = vadd.f32 %v663, 1.0
  %v666 = vrcp.pop %v664
  %v667 = vmul.f32 1.0, %v666
  %v668 = vrcp.pop %v665
  %v669 = vmul.f32 1.0, %v668
  %v670 = vmul.f32 %v656, %v667
  %v671 = vmul.f32 %v657, %v669
  %674 = vrot.lane.b32.xlu0 %v670, 17
  %v675 = vpop.permute.xlu0 %674
  %676 = vrot.lane.b32.xlu0 %v671, 17
  %v677 = vpop.permute.xlu0 %676
  %v678 = vsel %vm172, %v675, %v677
  %682 = vst.msk [vmem:[#allocation2 + $0x10] sm:$0xff] %vm638, %v675
  %683 = vst [vmem:[#allocation2 + $0x18] sm:$0xff] %v678
  %684 = vst.msk [vmem:[#allocation2 + $0x20] sm:$0xff] %vm172, %v677
  %v685 = vld [vmem:[%s1 + $0x8] sm:$0xff]
  %v686 = vld [vmem:[%s1 + $0x40] sm:$0xff]
  %v687 = vld [vmem:[#allocation2] sm:$0xff]
  %v688 = vld [vmem:[#allocation2 + $0x8] sm:$0xff]
  %v689 = vld [vmem:[#allocation2 + $0x10] sm:$0xff]
  %v690 = vld [vmem:[#allocation2 + $0x18] sm:$0xff]
  %v691 = vld [vmem:[#allocation2 + $0x20] sm:$0xff]
  %v692 = vsel %vm198, %v687, 0.0
  %v693 = vsel %vm199, %v688, 0.0
  %v694 = vsel %vm200, %v689, 0.0
  %v695 = vsel %vm201, %v690, 0.0
  %701 = vrot.lane.b32.xlu0 %v687, 127
  %v702 = vpop.permute.xlu0 %701
  %703 = vrot.lane.b32.xlu0 %v688, 127
  %v704 = vpop.permute.xlu0 %703
  %705 = vrot.lane.b32.xlu0 %v689, 127
  %v706 = vpop.permute.xlu0 %705
  %707 = vrot.lane.b32.xlu0 %v690, 127
  %v708 = vpop.permute.xlu0 %707
  %709 = vrot.lane.b32.xlu0 %v691, 127
  %v710 = vpop.permute.xlu0 %709
  %v711 = vsel %vm229, %v702, %v704
  %v712 = vsel %vm229, %v704, %v706
  %v713 = vsel %vm229, %v706, %v708
  %v714 = vsel %vm229, %v708, %v710
  %v719 = vsel %vm210, %v711, 0.0
  %v720 = vsel %vm211, %v712, 0.0
  %v721 = vsel %vm212, %v713, 0.0
  %v722 = vsel %vm213, %v714, 0.0
  %723 = vrot.lane.b32.xlu0 %v687, 126
  %v724 = vpop.permute.xlu0 %723
  %725 = vrot.lane.b32.xlu0 %v688, 126
  %v726 = vpop.permute.xlu0 %725
  %727 = vrot.lane.b32.xlu0 %v689, 126
  %v728 = vpop.permute.xlu0 %727
  %729 = vrot.lane.b32.xlu0 %v690, 126
  %v730 = vpop.permute.xlu0 %729
  %731 = vrot.lane.b32.xlu0 %v691, 126
  %v732 = vpop.permute.xlu0 %731
  %v733 = vsel %vm260, %v724, %v726
  %v734 = vsel %vm260, %v726, %v728
  %v735 = vsel %vm260, %v728, %v730
  %v736 = vsel %vm260, %v730, %v732
  %v741 = vsel %vm246, %v733, 0.0
  %v742 = vsel %vm247, %v734, 0.0
  %v743 = vsel %vm248, %v735, 0.0
  %v744 = vsel %vm249, %v736, 0.0
  %745 = vrot.lane.b32.xlu0 %v687, 112
  %v746 = vpop.permute.xlu0 %745
  %747 = vrot.lane.b32.xlu0 %v688, 112
  %v748 = vpop.permute.xlu0 %747
  %749 = vrot.lane.b32.xlu0 %v689, 112
  %v750 = vpop.permute.xlu0 %749
  %751 = vrot.lane.b32.xlu0 %v690, 112
  %v752 = vpop.permute.xlu0 %751
  %753 = vrot.lane.b32.xlu0 %v691, 112
  %v754 = vpop.permute.xlu0 %753
  %v755 = vsel %vm291, %v746, %v748
  %v756 = vsel %vm291, %v748, %v750
  %v757 = vsel %vm291, %v750, %v752
  %v758 = vsel %vm291, %v752, %v754
  %v763 = vsel %vm277, %v755, 0.0
  %v764 = vsel %vm278, %v756, 0.0
  %v765 = vsel %vm279, %v757, 0.0
  %v766 = vsel %vm280, %v758, 0.0
  %767 = vrot.lane.b32.xlu0 %v687, 110
  %v768 = vpop.permute.xlu0 %767
  %769 = vrot.lane.b32.xlu0 %v688, 110
  %v770 = vpop.permute.xlu0 %769
  %771 = vrot.lane.b32.xlu0 %v689, 110
  %v772 = vpop.permute.xlu0 %771
  %773 = vrot.lane.b32.xlu0 %v690, 110
  %v774 = vpop.permute.xlu0 %773
  %775 = vrot.lane.b32.xlu0 %v691, 110
  %v776 = vpop.permute.xlu0 %775
  %v777 = vsel %vm322, %v768, %v770
  %v778 = vsel %vm322, %v770, %v772
  %v779 = vsel %vm322, %v772, %v774
  %v780 = vsel %vm322, %v774, %v776
  %v785 = vsel %vm308, %v777, 0.0
  %v786 = vsel %vm309, %v778, 0.0
  %v787 = vsel %vm310, %v779, 0.0
  %v788 = vsel %vm311, %v780, 0.0
  %789 = vrot.lane.b32.xlu0 %v687, 96
  %v790 = vpop.permute.xlu0 %789
  %791 = vrot.lane.b32.xlu0 %v688, 96
  %v792 = vpop.permute.xlu0 %791
  %793 = vrot.lane.b32.xlu0 %v689, 96
  %v794 = vpop.permute.xlu0 %793
  %795 = vrot.lane.b32.xlu0 %v690, 96
  %v796 = vpop.permute.xlu0 %795
  %797 = vrot.lane.b32.xlu0 %v691, 96
  %v798 = vpop.permute.xlu0 %797
  %v799 = vsel %vm353, %v790, %v792
  %v800 = vsel %vm353, %v792, %v794
  %v801 = vsel %vm353, %v794, %v796
  %v802 = vsel %vm353, %v796, %v798
  %v807 = vsel %vm339, %v799, 0.0
  %v808 = vsel %vm340, %v800, 0.0
  %v809 = vsel %vm341, %v801, 0.0
  %v810 = vsel %vm342, %v802, 0.0
  %811 = vrot.lane.b32.xlu0 %v687, 95
  %v812 = vpop.permute.xlu0 %811
  %813 = vrot.lane.b32.xlu0 %v688, 95
  %v814 = vpop.permute.xlu0 %813
  %815 = vrot.lane.b32.xlu0 %v689, 95
  %v816 = vpop.permute.xlu0 %815
  %817 = vrot.lane.b32.xlu0 %v690, 95
  %v818 = vpop.permute.xlu0 %817
  %819 = vrot.lane.b32.xlu0 %v691, 95
  %v820 = vpop.permute.xlu0 %819
  %v821 = vsel %vm384, %v812, %v814
  %v822 = vsel %vm384, %v814, %v816
  %v823 = vsel %vm384, %v816, %v818
  %v824 = vsel %vm384, %v818, %v820
  %v829 = vsel %vm370, %v821, 0.0
  %v830 = vsel %vm371, %v822, 0.0
  %v831 = vsel %vm372, %v823, 0.0
  %v832 = vsel %vm373, %v824, 0.0
  %833 = vrot.lane.b32.xlu0 %v687, 94
  %v834 = vpop.permute.xlu0 %833
  %835 = vrot.lane.b32.xlu0 %v688, 94
  %v836 = vpop.permute.xlu0 %835
  %837 = vrot.lane.b32.xlu0 %v689, 94
  %v838 = vpop.permute.xlu0 %837
  %839 = vrot.lane.b32.xlu0 %v690, 94
  %v840 = vpop.permute.xlu0 %839
  %841 = vrot.lane.b32.xlu0 %v691, 94
  %v842 = vpop.permute.xlu0 %841
  %v843 = vsel %vm415, %v834, %v836
  %v844 = vsel %vm415, %v836, %v838
  %v845 = vsel %vm415, %v838, %v840
  %v846 = vsel %vm415, %v840, %v842
  %v851 = vsel %vm401, %v843, 0.0
  %v852 = vsel %vm402, %v844, 0.0
  %v853 = vsel %vm403, %v845, 0.0
  %v854 = vsel %vm404, %v846, 0.0
  %855 = vrot.lane.b32.xlu0 %v687, 111
  %v856 = vpop.permute.xlu0 %855
  %857 = vrot.lane.b32.xlu0 %v688, 111
  %v858 = vpop.permute.xlu0 %857
  %859 = vrot.lane.b32.xlu0 %v689, 111
  %v860 = vpop.permute.xlu0 %859
  %861 = vrot.lane.b32.xlu0 %v690, 111
  %v862 = vpop.permute.xlu0 %861
  %863 = vrot.lane.b32.xlu0 %v691, 111
  %v864 = vpop.permute.xlu0 %863
  %v865 = vsel %vm438, %v856, %v858
  %v866 = vsel %vm438, %v858, %v860
  %v867 = vsel %vm438, %v860, %v862
  %v868 = vsel %vm438, %v862, %v864
  %v874 = vsel %vm447, %v685, 0
  %v877 = vsel %vm447, %v686, 0
  %879 = vmatprep.subr.mxu0 %v693
  %880 = vmatpush1.msra.mxu0 %v692
  %881 = vmatprep.subr.mxu0 %v720
  %882 = vmatpush1.msra.mxu0 %v719
  %883 = vmatprep.subr.mxu0 %v742
  %884 = vmatpush1.msra.mxu0 %v741
  %885 = vmatprep.subr.mxu0 %v764
  %886 = vmatpush1.msra.mxu0 %v763
  %887 = vmatprep.subr.mxu0 %v866
  %888 = vmatpush1.msra.mxu0 %v865
  %889 = vmatprep.subr.mxu0 %v786
  %890 = vmatpush1.msra.mxu0 %v785
  %891 = vmatprep.subr.mxu0 %v808
  %892 = vmatpush1.msra.mxu0 %v807
  %893 = vmatprep.subr.mxu0 %v830
  %894 = vmatpush1.msra.mxu0 %v829
  %895 = vmatprep.subr.mxu0 %v852
  %896 = vmatpush1.msra.mxu0 %v851
  %897 = vmatprep.subr.mxu0 %v453
  %898 = vmatpush1.msra.mxu0 %v453
  %899 = vmatprep.subr.mxu0 0.0
  %900 = vmatpush1.msra.mxu0 0.0
  %901 = vmatprep.subr.mxu0 0.0
  %902 = vmatpush1.msra.mxu0 0.0
  %903 = vmatprep.subr.mxu0 0.0
  %904 = vmatpush1.msra.mxu0 0.0
  %905 = vmatprep.subr.mxu0 0.0
  %906 = vmatpush1.msra.mxu0 0.0
  %907 = vmatprep.subr.mxu0 0.0
  %908 = vmatpush1.msra.mxu0 0.0
  %909 = vmatprep.subr.mxu0 0.0
  %910 = vmatpush1.msra.mxu0 0.0
  %911 = vmatprep.subr.mxu0 0.0
  %912 = vmatpush1.msra.mxu0 0.0
  %913 = vmatprep.subr.mxu0 0.0
  %914 = vmatpush1.msra.mxu0 0.0
  %915 = vmatprep.subr.mxu0 0.0
  %916 = vmatpush1.msra.mxu0 0.0
  %917 = vmatprep.subr.mxu0 0.0
  %918 = vmatpush1.msra.mxu0 0.0
  %919 = vmatprep.subr.mxu0 0.0
  %920 = vmatpush1.msra.mxu0 0.0
  %921 = vmatprep.subr.mxu0 0.0
  %922 = vmatpush1.msra.mxu0 0.0
  %923 = vmatprep.subr.mxu0 0.0
  %924 = vmatpush1.msra.mxu0 0.0
  %925 = vmatprep.subr.mxu0 0.0
  %926 = vmatpush1.msra.mxu0 0.0
  %927 = vmatprep.subr.mxu0 0.0
  %928 = vmatpush1.msra.mxu0 0.0
  %929 = vmatprep.subr.mxu0 0.0
  %930 = vmatpush1.msra.mxu0 0.0
  %931 = vmatprep.subr.mxu0 0.0
  %932 = vmatpush1.msra.mxu0 0.0
  %933 = vmatprep.subr.mxu0 0.0
  %934 = vmatpush1.msra.mxu0 0.0
  %935 = vmatprep.subr.mxu0 0.0
  %936 = vmatpush1.msra.mxu0 0.0
  %937 = vmatprep.subr.mxu0 0.0
  %938 = vmatpush1.msra.mxu0 0.0
  %939 = vmatprep.subr.mxu0 0.0
  %940 = vmatpush1.msra.mxu0 0.0
  %941 = vmatprep.subr.mxu0 0.0
  %942 = vmatpush1.msra.mxu0 0.0
  %943 = vmatprep.mubr.f32.mxu0 0.0
  %944 = vmatmul.mubr.f32.gmra.mrb[0].mxu0 %v874
  %v945 = vpop.f32.mrb[0].mxu0
  %v946 = vadd.f32 0.0, %v945
  %v947 = vpop.f32.mrb[0].mxu0
  %v948 = vadd.f32 0.0, %v947
  %949 = vmatprep.mubr.f32.mxu0 0.0
  %950 = vmatmul.mubr.f32.gmra.mrb[0].mxu0 %v877
  %v951 = vpop.f32.mrb[0].mxu0
  %v952 = vadd.f32 0.0, %v951
  %v953 = vpop.f32.mrb[0].mxu0
  %v954 = vadd.f32 0.0, %v953
  %955 = vdwg.mxu0
  %956 = vmatprep.subr.mxu0 %v695
  %957 = vmatpush1.msra.mxu0 %v694
  %958 = vmatprep.subr.mxu0 %v722
  %959 = vmatpush1.msra.mxu0 %v721
  %960 = vmatprep.subr.mxu0 %v744
  %961 = vmatpush1.msra.mxu0 %v743
  %962 = vmatprep.subr.mxu0 %v766
  %963 = vmatpush1.msra.mxu0 %v765
  %964 = vmatprep.subr.mxu0 %v868
  %965 = vmatpush1.msra.mxu0 %v867
  %966 = vmatprep.subr.mxu0 %v788
  %967 = vmatpush1.msra.mxu0 %v787
  %968 = vmatprep.subr.mxu0 %v810
  %969 = vmatpush1.msra.mxu0 %v809
  %970 = vmatprep.subr.mxu0 %v832
  %971 = vmatpush1.msra.mxu0 %v831
  %972 = vmatprep.subr.mxu0 %v854
  %973 = vmatpush1.msra.mxu0 %v853
  %974 = vmatprep.subr.mxu0 %v453
  %975 = vmatpush1.msra.mxu0 %v453
  %976 = vmatprep.subr.mxu0 0.0
  %977 = vmatpush1.msra.mxu0 0.0
  %978 = vmatprep.subr.mxu0 0.0
  %979 = vmatpush1.msra.mxu0 0.0
  %980 = vmatprep.subr.mxu0 0.0
  %981 = vmatpush1.msra.mxu0 0.0
  %982 = vmatprep.subr.mxu0 0.0
  %983 = vmatpush1.msra.mxu0 0.0
  %984 = vmatprep.subr.mxu0 0.0
  %985 = vmatpush1.msra.mxu0 0.0
  %986 = vmatprep.subr.mxu0 0.0
  %987 = vmatpush1.msra.mxu0 0.0
  %988 = vmatprep.subr.mxu0 0.0
  %989 = vmatpush1.msra.mxu0 0.0
  %990 = vmatprep.subr.mxu0 0.0
  %991 = vmatpush1.msra.mxu0 0.0
  %992 = vmatprep.subr.mxu0 0.0
  %993 = vmatpush1.msra.mxu0 0.0
  %994 = vmatprep.subr.mxu0 0.0
  %995 = vmatpush1.msra.mxu0 0.0
  %996 = vmatprep.subr.mxu0 0.0
  %997 = vmatpush1.msra.mxu0 0.0
  %998 = vmatprep.subr.mxu0 0.0
  %999 = vmatpush1.msra.mxu0 0.0
  %1000 = vmatprep.subr.mxu0 0.0
  %1001 = vmatpush1.msra.mxu0 0.0
  %1002 = vmatprep.subr.mxu0 0.0
  %1003 = vmatpush1.msra.mxu0 0.0
  %1004 = vmatprep.subr.mxu0 0.0
  %1005 = vmatpush1.msra.mxu0 0.0
  %1006 = vmatprep.subr.mxu0 0.0
  %1007 = vmatpush1.msra.mxu0 0.0
  %1008 = vmatprep.subr.mxu0 0.0
  %1009 = vmatpush1.msra.mxu0 0.0
  %1010 = vmatprep.subr.mxu0 0.0
  %1011 = vmatpush1.msra.mxu0 0.0
  %1012 = vmatprep.subr.mxu0 0.0
  %1013 = vmatpush1.msra.mxu0 0.0
  %1014 = vmatprep.subr.mxu0 0.0
  %1015 = vmatpush1.msra.mxu0 0.0
  %1016 = vmatprep.subr.mxu0 0.0
  %1017 = vmatpush1.msra.mxu0 0.0
  %1018 = vmatprep.subr.mxu0 0.0
  %1019 = vmatpush1.msra.mxu0 0.0
  %1020 = vmatprep.mubr.f32.mxu0 0.0
  %1021 = vmatmul.mubr.f32.gmra.mrb[0].mxu0 %v874
  %v1022 = vpop.f32.mrb[0].mxu0
  %v1023 = vadd.f32 0.0, %v1022
  %v1024 = vpop.f32.mrb[0].mxu0
  %v1025 = vadd.f32 0.0, %v1024
  %1026 = vmatprep.mubr.f32.mxu0 0.0
  %1027 = vmatmul.mubr.f32.gmra.mrb[0].mxu0 %v877
  %v1028 = vpop.f32.mrb[0].mxu0
  %v1029 = vadd.f32 0.0, %v1028
  %v1030 = vpop.f32.mrb[0].mxu0
  %v1031 = vadd.f32 0.0, %v1030
  %1032 = vdwg.mxu0
  %v1033 = vadd.f32 %v946, %v948
  %1034 = vadd.xlane.f32.xlu0 %v1033
  %v1035 = vpop.xlane.xlu0 %1034
  %v1036 = vadd.f32 %v952, %v954
  %1037 = vadd.xlane.f32.xlu0 %v1036
  %v1038 = vpop.xlane.xlu0 %1037
  %v1039 = vmul.f32 %v1035, %v600
  %v1040 = vmul.f32 %v1038, %v600
  %v1041 = vsub.f32 %v946, %v1039
  %v1042 = vsub.f32 %v948, %v1039
  %v1043 = vsub.f32 %v952, %v1040
  %v1044 = vsub.f32 %v954, %v1040
  %v1045 = vmul.f32 %v1041, %v1041
  %v1046 = vmul.f32 %v1042, %v1042
  %v1047 = vmul.f32 %v1043, %v1043
  %v1048 = vmul.f32 %v1044, %v1044
  %v1049 = vadd.f32 %v1045, %v1046
  %1050 = vadd.xlane.f32.xlu0 %v1049
  %v1051 = vpop.xlane.xlu0 %1050
  %v1052 = vadd.f32 %v1047, %v1048
  %1053 = vadd.xlane.f32.xlu0 %v1052
  %v1054 = vpop.xlane.xlu0 %1053
  %v1055 = vmul.f32 %v1051, %v600
  %v1056 = vmul.f32 %v1054, %v600
  %v1057 = vadd.f32 %v1055, 1e-05
  %v1058 = vadd.f32 %v1056, 1e-05
  %v1059 = vrsqrt.pop %v1057
  %v1060 = vrsqrt.pop %v1058
  %v1061 = vmul.f32 %v1041, %v1059
  %v1062 = vmul.f32 %v1042, %v1059
  %v1063 = vmul.f32 %v1043, %v1060
  %v1064 = vmul.f32 %v1044, %v1060
  %v1065 = vxor.u32 %v1061, 2147483648
  %v1066 = vxor.u32 %v1062, 2147483648
  %v1067 = vxor.u32 %v1063, 2147483648
  %v1068 = vxor.u32 %v1064, 2147483648
  %v1069 = vmul.f32 %v1065, 1.442695
  %v1070 = vpow.pop %v1069
  %v1071 = vmul.f32 %v1066, 1.442695
  %v1072 = vpow.pop %v1071
  %v1073 = vmul.f32 %v1067, 1.442695
  %v1074 = vpow.pop %v1073
  %v1075 = vmul.f32 %v1068, 1.442695
  %v1076 = vpow.pop %v1075
  %v1077 = vadd.f32 %v1070, 1.0
  %v1078 = vadd.f32 %v1072, 1.0
  %v1079 = vadd.f32 %v1074, 1.0
  %v1080 = vadd.f32 %v1076, 1.0
  %v1081 = vrcp.pop %v1077
  %v1082 = vmul.f32 1.0, %v1081
  %v1083 = vrcp.pop %v1078
  %v1084 = vmul.f32 1.0, %v1083
  %v1085 = vrcp.pop %v1079
  %v1086 = vmul.f32 1.0, %v1085
  %v1087 = vrcp.pop %v1080
  %v1088 = vmul.f32 1.0, %v1087
  %v1089 = vmul.f32 %v1061, %v1082
  %v1090 = vmul.f32 %v1062, %v1084
  %v1091 = vmul.f32 %v1063, %v1086
  %v1092 = vmul.f32 %v1064, %v1088
  %1097 = vrot.lane.b32.xlu0 %v1089, 17
  %v1098 = vpop.permute.xlu0 %1097
  %1099 = vrot.lane.b32.xlu0 %v1090, 17
  %v1100 = vpop.permute.xlu0 %1099
  %1101 = vrot.lane.b32.xlu0 %v1091, 17
  %v1102 = vpop.permute.xlu0 %1101
  %1103 = vrot.lane.b32.xlu0 %v1092, 17
  %v1104 = vpop.permute.xlu0 %1103
  %v1105 = vsel %vm172, %v1098, %v1100
  %v1106 = vsel %vm172, %v1102, %v1104
  %1113 = vst.msk [vmem:[#allocation2] sm:$0xff] %vm638, %v1098
  %1114 = vst [vmem:[#allocation2 + $0x8] sm:$0xff] %v1105
  %1115 = vst.msk [vmem:[#allocation2 + $0x10] sm:$0xff] %vm172, %v1100
  %1116 = vst.msk [vmem:[#allocation2 + $0x28] sm:$0xff] %vm638, %v1102
  %1117 = vst [vmem:[#allocation2 + $0x30] sm:$0xff] %v1106
  %1118 = vst.msk [vmem:[#allocation2 + $0x38] sm:$0xff] %vm172, %v1104
  %v1119 = vadd.f32 %v1023, %v1025
  %1120 = vadd.xlane.f32.xlu0 %v1119
  %v1121 = vpop.xlane.xlu0 %1120
  %v1122 = vadd.f32 %v1029, %v1031
  %1123 = vadd.xlane.f32.xlu0 %v1122
  %v1124 = vpop.xlane.xlu0 %1123
  %v1125 = vmul.f32 %v1121, %v600
  %v1126 = vmul.f32 %v1124, %v600
  %v1127 = vsub.f32 %v1023, %v1125
  %v1128 = vsub.f32 %v1025, %v1125
  %v1129 = vsub.f32 %v1029, %v1126
  %v1130 = vsub.f32 %v1031, %v1126
  %v1131 = vmul.f32 %v1127, %v1127
  %v1132 = vmul.f32 %v1128, %v1128
  %v1133 = vmul.f32 %v1129, %v1129
  %v1134 = vmul.f32 %v1130, %v1130
  %v1135 = vadd.f32 %v1131, %v1132
  %1136 = vadd.xlane.f32.xlu0 %v1135
  %v1137 = vpop.xlane.xlu0 %1136
  %v1138 = vadd.f32 %v1133, %v1134
  %1139 = vadd.xlane.f32.xlu0 %v1138
  %v1140 = vpop.xlane.xlu0 %1139
  %v1141 = vmul.f32 %v1137, %v600
  %v1142 = vmul.f32 %v1140, %v600
  %v1143 = vadd.f32 %v1141, 1e-05
  %v1144 = vadd.f32 %v1142, 1e-05
  %v1145 = vrsqrt.pop %v1143
  %v1146 = vrsqrt.pop %v1144
  %v1147 = vmul.f32 %v1127, %v1145
  %v1148 = vmul.f32 %v1128, %v1145
  %v1149 = vmul.f32 %v1129, %v1146
  %v1150 = vmul.f32 %v1130, %v1146
  %v1151 = vxor.u32 %v1147, 2147483648
  %v1152 = vxor.u32 %v1148, 2147483648
  %v1153 = vxor.u32 %v1149, 2147483648
  %v1154 = vxor.u32 %v1150, 2147483648
  %v1155 = vmul.f32 %v1151, 1.442695
  %v1156 = vpow.pop %v1155
  %v1157 = vmul.f32 %v1152, 1.442695
  %v1158 = vpow.pop %v1157
  %v1159 = vmul.f32 %v1153, 1.442695
  %v1160 = vpow.pop %v1159
  %v1161 = vmul.f32 %v1154, 1.442695
  %v1162 = vpow.pop %v1161
  %v1163 = vadd.f32 %v1156, 1.0
  %v1164 = vadd.f32 %v1158, 1.0
  %v1165 = vadd.f32 %v1160, 1.0
  %v1166 = vadd.f32 %v1162, 1.0
  %v1167 = vrcp.pop %v1163
  %v1168 = vmul.f32 1.0, %v1167
  %v1169 = vrcp.pop %v1164
  %v1170 = vmul.f32 1.0, %v1169
  %v1171 = vrcp.pop %v1165
  %v1172 = vmul.f32 1.0, %v1171
  %v1173 = vrcp.pop %v1166
  %v1174 = vmul.f32 1.0, %v1173
  %v1175 = vmul.f32 %v1147, %v1168
  %v1176 = vmul.f32 %v1148, %v1170
  %v1177 = vmul.f32 %v1149, %v1172
  %v1178 = vmul.f32 %v1150, %v1174
  %1183 = vrot.lane.b32.xlu0 %v1175, 17
  %v1184 = vpop.permute.xlu0 %1183
  %1185 = vrot.lane.b32.xlu0 %v1176, 17
  %v1186 = vpop.permute.xlu0 %1185
  %1187 = vrot.lane.b32.xlu0 %v1177, 17
  %v1188 = vpop.permute.xlu0 %1187
  %1189 = vrot.lane.b32.xlu0 %v1178, 17
  %v1190 = vpop.permute.xlu0 %1189
  %v1191 = vsel %vm172, %v1184, %v1186
  %v1192 = vsel %vm172, %v1188, %v1190
  %1199 = vst.msk [vmem:[#allocation2 + $0x10] sm:$0xff] %vm638, %v1184
  %1200 = vst [vmem:[#allocation2 + $0x18] sm:$0xff] %v1191
  %1201 = vst.msk [vmem:[#allocation2 + $0x20] sm:$0xff] %vm172, %v1186
  %1202 = vst.msk [vmem:[#allocation2 + $0x38] sm:$0xff] %vm638, %v1188
  %1203 = vst [vmem:[#allocation2 + $0x40] sm:$0xff] %v1192
  %1204 = vst.msk [vmem:[#allocation2 + $0x48] sm:$0xff] %vm172, %v1190
  %v1205 = vld [vmem:[%s1 + $0x10] sm:$0xff]
  %v1206 = vld [vmem:[%s1 + $0x18] sm:$0xff]
  %v1207 = vld [vmem:[%s1 + $0x48] sm:$0xff]
  %v1208 = vld [vmem:[%s1 + $0x50] sm:$0xff]
  %v1209 = vld [vmem:[#allocation2] sm:$0xff]
  %v1210 = vld [vmem:[#allocation2 + $0x8] sm:$0xff]
  %v1211 = vld [vmem:[#allocation2 + $0x10] sm:$0xff]
  %v1212 = vld [vmem:[#allocation2 + $0x18] sm:$0xff]
  %v1213 = vld [vmem:[#allocation2 + $0x20] sm:$0xff]
  %v1214 = vld [vmem:[#allocation2 + $0x28] sm:$0xff]
  %v1215 = vld [vmem:[#allocation2 + $0x30] sm:$0xff]
  %v1216 = vld [vmem:[#allocation2 + $0x38] sm:$0xff]
  %v1217 = vld [vmem:[#allocation2 + $0x40] sm:$0xff]
  %v1218 = vld [vmem:[#allocation2 + $0x48] sm:$0xff]
  %v1219 = vsel %vm198, %v1209, 0.0
  %v1220 = vsel %vm199, %v1210, 0.0
  %v1221 = vsel %vm200, %v1211, 0.0
  %v1222 = vsel %vm201, %v1212, 0.0
  %v1223 = vsel %vm198, %v1214, 0.0
  %v1224 = vsel %vm199, %v1215, 0.0
  %v1225 = vsel %vm200, %v1216, 0.0
  %v1226 = vsel %vm201, %v1217, 0.0
  %1237 = vrot.lane.b32.xlu0 %v1209, 127
  %v1238 = vpop.permute.xlu0 %1237
  %1239 = vrot.lane.b32.xlu0 %v1210, 127
  %v1240 = vpop.permute.xlu0 %1239
  %1241 = vrot.lane.b32.xlu0 %v1211, 127
  %v1242 = vpop.permute.xlu0 %1241
  %1243 = vrot.lane.b32.xlu0 %v1212, 127
  %v1244 = vpop.permute.xlu0 %1243
  %1245 = vrot.lane.b32.xlu0 %v1213, 127
  %v1246 = vpop.permute.xlu0 %1245
  %1247 = vrot.lane.b32.xlu0 %v1214, 127
  %v1248 = vpop.permute.xlu0 %1247
  %1249 = vrot.lane.b32.xlu0 %v1215, 127
  %v1250 = vpop.permute.xlu0 %1249
  %1251 = vrot.lane.b32.xlu0 %v1216, 127
  %v1252 = vpop.permute.xlu0 %1251
  %1253 = vrot.lane.b32.xlu0 %v1217, 127
  %v1254 = vpop.permute.xlu0 %1253
  %1255 = vrot.lane.b32.xlu0 %v1218, 127
  %v1256 = vpop.permute.xlu0 %1255
  %v1257 = vsel %vm229, %v1238, %v1240
  %v1258 = vsel %vm229, %v1240, %v1242
  %v1259 = vsel %vm229, %v1242, %v1244
  %v1260 = vsel %vm229, %v1244, %v1246
  %v1261 = vsel %vm229, %v1248, %v1250
  %v1262 = vsel %vm229, %v1250, %v1252
  %v1263 = vsel %vm229, %v1252, %v1254
  %v1264 = vsel %vm229, %v1254, %v1256
  %v1273 = vsel %vm210, %v1257, 0.0
  %v1274 = vsel %vm211, %v1258, 0.0
  %v1275 = vsel %vm212, %v1259, 0.0
  %v1276 = vsel %vm213, %v1260, 0.0
  %v1277 = vsel %vm210, %v1261, 0.0
  %v1278 = vsel %vm211, %v1262, 0.0
  %v1279 = vsel %vm212, %v1263, 0.0
  %v1280 = vsel %vm213, %v1264, 0.0
  %1281 = vrot.lane.b32.xlu0 %v1209, 126
  %v1282 = vpop.permute.xlu0 %1281
  %1283 = vrot.lane.b32.xlu0 %v1210, 126
  %v1284 = vpop.permute.xlu0 %1283
  %1285 = vrot.lane.b32.xlu0 %v1211, 126
  %v1286 = vpop.permute.xlu0 %1285
  %1287 = vrot.lane.b32.xlu0 %v1212, 126
  %v1288 = vpop.permute.xlu0 %1287
  %1289 = vrot.lane.b32.xlu0 %v1213, 126
  %v1290 = vpop.permute.xlu0 %1289
  %1291 = vrot.lane.b32.xlu0 %v1214, 126
  %v1292 = vpop.permute.xlu0 %1291
  %1293 = vrot.lane.b32.xlu0 %v1215, 126
  %v1294 = vpop.permute.xlu0 %1293
  %1295 = vrot.lane.b32.xlu0 %v1216, 126
  %v1296 = vpop.permute.xlu0 %1295
  %1297 = vrot.lane.b32.xlu0 %v1217, 126
  %v1298 = vpop.permute.xlu0 %1297
  %1299 = vrot.lane.b32.xlu0 %v1218, 126
  %v1300 = vpop.permute.xlu0 %1299
  %v1301 = vsel %vm260, %v1282, %v1284
  %v1302 = vsel %vm260, %v1284, %v1286
  %v1303 = vsel %vm260, %v1286, %v1288
  %v1304 = vsel %vm260, %v1288, %v1290
  %v1305 = vsel %vm260, %v1292, %v1294
  %v1306 = vsel %vm260, %v1294, %v1296
  %v1307 = vsel %vm260, %v1296, %v1298
  %v1308 = vsel %vm260, %v1298, %v1300
  %v1317 = vsel %vm246, %v1301, 0.0
  %v1318 = vsel %vm247, %v1302, 0.0
  %v1319 = vsel %vm248, %v1303, 0.0
  %v1320 = vsel %vm249, %v1304, 0.0
  %v1321 = vsel %vm246, %v1305, 0.0
  %v1322 = vsel %vm247, %v1306, 0.0
  %v1323 = vsel %vm248, %v1307, 0.0
  %v1324 = vsel %vm249, %v1308, 0.0
  %1325 = vrot.lane.b32.xlu0 %v1209, 112
  %v1326 = vpop.permute.xlu0 %1325
  %1327 = vrot.lane.b32.xlu0 %v1210, 112
  %v1328 = vpop.permute.xlu0 %1327
  %1329 = vrot.lane.b32.xlu0 %v1211, 112
  %v1330 = vpop.permute.xlu0 %1329
  %1331 = vrot.lane.b32.xlu0 %v1212, 112
  %v1332 = vpop.permute.xlu0 %1331
  %1333 = vrot.lane.b32.xlu0 %v1213, 112
  %v1334 = vpop.permute.xlu0 %1333
  %1335 = vrot.lane.b32.xlu0 %v1214, 112
  %v1336 = vpop.permute.xlu0 %1335
  %1337 = vrot.lane.b32.xlu0 %v1215, 112
  %v1338 = vpop.permute.xlu0 %1337
  %1339 = vrot.lane.b32.xlu0 %v1216, 112
  %v1340 = vpop.permute.xlu0 %1339
  %1341 = vrot.lane.b32.xlu0 %v1217, 112
  %v1342 = vpop.permute.xlu0 %1341
  %1343 = vrot.lane.b32.xlu0 %v1218, 112
  %v1344 = vpop.permute.xlu0 %1343
  %v1345 = vsel %vm291, %v1326, %v1328
  %v1346 = vsel %vm291, %v1328, %v1330
  %v1347 = vsel %vm291, %v1330, %v1332
  %v1348 = vsel %vm291, %v1332, %v1334
  %v1349 = vsel %vm291, %v1336, %v1338
  %v1350 = vsel %vm291, %v1338, %v1340
  %v1351 = vsel %vm291, %v1340, %v1342
  %v1352 = vsel %vm291, %v1342, %v1344
  %v1361 = vsel %vm277, %v1345, 0.0
  %v1362 = vsel %vm278, %v1346, 0.0
  %v1363 = vsel %vm279, %v1347, 0.0
  %v1364 = vsel %vm280, %v1348, 0.0
  %v1365 = vsel %vm277, %v1349, 0.0
  %v1366 = vsel %vm278, %v1350, 0.0
  %v1367 = vsel %vm279, %v1351, 0.0
  %v1368 = vsel %vm280, %v1352, 0.0
  %1369 = vrot.lane.b32.xlu0 %v1209, 110
  %v1370 = vpop.permute.xlu0 %1369
  %1371 = vrot.lane.b32.xlu0 %v1210, 110
  %v1372 = vpop.permute.xlu0 %1371
  %1373 = vrot.lane.b32.xlu0 %v1211, 110
  %v1374 = vpop.permute.xlu0 %1373
  %1375 = vrot.lane.b32.xlu0 %v1212, 110
  %v1376 = vpop.permute.xlu0 %1375
  %1377 = vrot.lane.b32.xlu0 %v1213, 110
  %v1378 = vpop.permute.xlu0 %1377
  %1379 = vrot.lane.b32.xlu0 %v1214, 110
  %v1380 = vpop.permute.xlu0 %1379
  %1381 = vrot.lane.b32.xlu0 %v1215, 110
  %v1382 = vpop.permute.xlu0 %1381
  %1383 = vrot.lane.b32.xlu0 %v1216, 110
  %v1384 = vpop.permute.xlu0 %1383
  %1385 = vrot.lane.b32.xlu0 %v1217, 110
  %v1386 = vpop.permute.xlu0 %1385
  %1387 = vrot.lane.b32.xlu0 %v1218, 110
  %v1388 = vpop.permute.xlu0 %1387
  %v1389 = vsel %vm322, %v1370, %v1372
  %v1390 = vsel %vm322, %v1372, %v1374
  %v1391 = vsel %vm322, %v1374, %v1376
  %v1392 = vsel %vm322, %v1376, %v1378
  %v1393 = vsel %vm322, %v1380, %v1382
  %v1394 = vsel %vm322, %v1382, %v1384
  %v1395 = vsel %vm322, %v1384, %v1386
  %v1396 = vsel %vm322, %v1386, %v1388
  %v1405 = vsel %vm308, %v1389, 0.0
  %v1406 = vsel %vm309, %v1390, 0.0
  %v1407 = vsel %vm310, %v1391, 0.0
  %v1408 = vsel %vm311, %v1392, 0.0
  %v1409 = vsel %vm308, %v1393, 0.0
  %v1410 = vsel %vm309, %v1394, 0.0
  %v1411 = vsel %vm310, %v1395, 0.0
  %v1412 = vsel %vm311, %v1396, 0.0
  %1413 = vrot.lane.b32.xlu0 %v1209, 96
  %v1414 = vpop.permute.xlu0 %1413
  %1415 = vrot.lane.b32.xlu0 %v1210, 96
  %v1416 = vpop.permute.xlu0 %1415
  %1417 = vrot.lane.b32.xlu0 %v1211, 96
  %v1418 = vpop.permute.xlu0 %1417
  %1419 = vrot.lane.b32.xlu0 %v1212, 96
  %v1420 = vpop.permute.xlu0 %1419
  %1421 = vrot.lane.b32.xlu0 %v1213, 96
  %v1422 = vpop.permute.xlu0 %1421
  %1423 = vrot.lane.b32.xlu0 %v1214, 96
  %v1424 = vpop.permute.xlu0 %1423
  %1425 = vrot.lane.b32.xlu0 %v1215, 96
  %v1426 = vpop.permute.xlu0 %1425
  %1427 = vrot.lane.b32.xlu0 %v1216, 96
  %v1428 = vpop.permute.xlu0 %1427
  %1429 = vrot.lane.b32.xlu0 %v1217, 96
  %v1430 = vpop.permute.xlu0 %1429
  %1431 = vrot.lane.b32.xlu0 %v1218, 96
  %v1432 = vpop.permute.xlu0 %1431
  %v1433 = vsel %vm353, %v1414, %v1416
  %v1434 = vsel %vm353, %v1416, %v1418
  %v1435 = vsel %vm353, %v1418, %v1420
  %v1436 = vsel %vm353, %v1420, %v1422
  %v1437 = vsel %vm353, %v1424, %v1426
  %v1438 = vsel %vm353, %v1426, %v1428
  %v1439 = vsel %vm353, %v1428, %v1430
  %v1440 = vsel %vm353, %v1430, %v1432
  %v1449 = vsel %vm339, %v1433, 0.0
  %v1450 = vsel %vm340, %v1434, 0.0
  %v1451 = vsel %vm341, %v1435, 0.0
  %v1452 = vsel %vm342, %v1436, 0.0
  %v1453 = vsel %vm339, %v1437, 0.0
  %v1454 = vsel %vm340, %v1438, 0.0
  %v1455 = vsel %vm341, %v1439, 0.0
  %v1456 = vsel %vm342, %v1440, 0.0
  %1457 = vrot.lane.b32.xlu0 %v1209, 95
  %v1458 = vpop.permute.xlu0 %1457
  %1459 = vrot.lane.b32.xlu0 %v1210, 95
  %v1460 = vpop.permute.xlu0 %1459
  %1461 = vrot.lane.b32.xlu0 %v1211, 95
  %v1462 = vpop.permute.xlu0 %1461
  %1463 = vrot.lane.b32.xlu0 %v1212, 95
  %v1464 = vpop.permute.xlu0 %1463
  %1465 = vrot.lane.b32.xlu0 %v1213, 95
  %v1466 = vpop.permute.xlu0 %1465
  %1467 = vrot.lane.b32.xlu0 %v1214, 95
  %v1468 = vpop.permute.xlu0 %1467
  %1469 = vrot.lane.b32.xlu0 %v1215, 95
  %v1470 = vpop.permute.xlu0 %1469
  %1471 = vrot.lane.b32.xlu0 %v1216, 95
  %v1472 = vpop.permute.xlu0 %1471
  %1473 = vrot.lane.b32.xlu0 %v1217, 95
  %v1474 = vpop.permute.xlu0 %1473
  %1475 = vrot.lane.b32.xlu0 %v1218, 95
  %v1476 = vpop.permute.xlu0 %1475
  %v1477 = vsel %vm384, %v1458, %v1460
  %v1478 = vsel %vm384, %v1460, %v1462
  %v1479 = vsel %vm384, %v1462, %v1464
  %v1480 = vsel %vm384, %v1464, %v1466
  %v1481 = vsel %vm384, %v1468, %v1470
  %v1482 = vsel %vm384, %v1470, %v1472
  %v1483 = vsel %vm384, %v1472, %v1474
  %v1484 = vsel %vm384, %v1474, %v1476
  %v1493 = vsel %vm370, %v1477, 0.0
  %v1494 = vsel %vm371, %v1478, 0.0
  %v1495 = vsel %vm372, %v1479, 0.0
  %v1496 = vsel %vm373, %v1480, 0.0
  %v1497 = vsel %vm370, %v1481, 0.0
  %v1498 = vsel %vm371, %v1482, 0.0
  %v1499 = vsel %vm372, %v1483, 0.0
  %v1500 = vsel %vm373, %v1484, 0.0
  %1501 = vrot.lane.b32.xlu0 %v1209, 94
  %v1502 = vpop.permute.xlu0 %1501
  %1503 = vrot.lane.b32.xlu0 %v1210, 94
  %v1504 = vpop.permute.xlu0 %1503
  %1505 = vrot.lane.b32.xlu0 %v1211, 94
  %v1506 = vpop.permute.xlu0 %1505
  %1507 = vrot.lane.b32.xlu0 %v1212, 94
  %v1508 = vpop.permute.xlu0 %1507
  %1509 = vrot.lane.b32.xlu0 %v1213, 94
  %v1510 = vpop.permute.xlu0 %1509
  %1511 = vrot.lane.b32.xlu0 %v1214, 94
  %v1512 = vpop.permute.xlu0 %1511
  %1513 = vrot.lane.b32.xlu0 %v1215, 94
  %v1514 = vpop.permute.xlu0 %1513
  %1515 = vrot.lane.b32.xlu0 %v1216, 94
  %v1516 = vpop.permute.xlu0 %1515
  %1517 = vrot.lane.b32.xlu0 %v1217, 94
  %v1518 = vpop.permute.xlu0 %1517
  %1519 = vrot.lane.b32.xlu0 %v1218, 94
  %v1520 = vpop.permute.xlu0 %1519
  %v1521 = vsel %vm415, %v1502, %v1504
  %v1522 = vsel %vm415, %v1504, %v1506
  %v1523 = vsel %vm415, %v1506, %v1508
  %v1524 = vsel %vm415, %v1508, %v1510
  %v1525 = vsel %vm415, %v1512, %v1514
  %v1526 = vsel %vm415, %v1514, %v1516
  %v1527 = vsel %vm415, %v1516, %v1518
  %v1528 = vsel %vm415, %v1518, %v1520
  %v1537 = vsel %vm401, %v1521, 0.0
  %v1538 = vsel %vm402, %v1522, 0.0
  %v1539 = vsel %vm403, %v1523, 0.0
  %v1540 = vsel %vm404, %v1524, 0.0
  %v1541 = vsel %vm401, %v1525, 0.0
  %v1542 = vsel %vm402, %v1526, 0.0
  %v1543 = vsel %vm403, %v1527, 0.0
  %v1544 = vsel %vm404, %v1528, 0.0
  %1545 = vrot.lane.b32.xlu0 %v1209, 111
  %v1546 = vpop.permute.xlu0 %1545
  %1547 = vrot.lane.b32.xlu0 %v1210, 111
  %v1548 = vpop.permute.xlu0 %1547
  %1549 = vrot.lane.b32.xlu0 %v1211, 111
  %v1550 = vpop.permute.xlu0 %1549
  %1551 = vrot.lane.b32.xlu0 %v1212, 111
  %v1552 = vpop.permute.xlu0 %1551
  %1553 = vrot.lane.b32.xlu0 %v1213, 111
  %v1554 = vpop.permute.xlu0 %1553
  %1555 = vrot.lane.b32.xlu0 %v1214, 111
  %v1556 = vpop.permute.xlu0 %1555
  %1557 = vrot.lane.b32.xlu0 %v1215, 111
  %v1558 = vpop.permute.xlu0 %1557
  %1559 = vrot.lane.b32.xlu0 %v1216, 111
  %v1560 = vpop.permute.xlu0 %1559
  %1561 = vrot.lane.b32.xlu0 %v1217, 111
  %v1562 = vpop.permute.xlu0 %1561
  %1563 = vrot.lane.b32.xlu0 %v1218, 111
  %v1564 = vpop.permute.xlu0 %1563
  %v1565 = vsel %vm438, %v1546, %v1548
  %v1566 = vsel %vm438, %v1548, %v1550
  %v1567 = vsel %vm438, %v1550, %v1552
  %v1568 = vsel %vm438, %v1552, %v1554
  %v1569 = vsel %vm438, %v1556, %v1558
  %v1570 = vsel %vm438, %v1558, %v1560
  %v1571 = vsel %vm438, %v1560, %v1562
  %v1572 = vsel %vm438, %v1562, %v1564
  %v1582 = vsel %vm172, %v1206, 0
  %v1585 = vsel %vm172, %v1208, 0
  %1587 = vmatprep.subr.mxu0 %v1220
  %1588 = vmatpush1.msra.mxu0 %v1219
  %1589 = vmatprep.subr.mxu0 %v1224
  %1590 = vmatpush1.msra.mxu0 %v1223
  %1591 = vmatprep.subr.mxu0 %v1274
  %1592 = vmatpush1.msra.mxu0 %v1273
  %1593 = vmatprep.subr.mxu0 %v1278
  %1594 = vmatpush1.msra.mxu0 %v1277
  %1595 = vmatprep.subr.mxu0 %v1318
  %1596 = vmatpush1.msra.mxu0 %v1317
  %1597 = vmatprep.subr.mxu0 %v1322
  %1598 = vmatpush1.msra.mxu0 %v1321
  %1599 = vmatprep.subr.mxu0 %v1362
  %1600 = vmatpush1.msra.mxu0 %v1361
  %1601 = vmatprep.subr.mxu0 %v1366
  %1602 = vmatpush1.msra.mxu0 %v1365
  %1603 = vmatprep.subr.mxu0 %v1566
  %1604 = vmatpush1.msra.mxu0 %v1565
  %1605 = vmatprep.subr.mxu0 %v1570
  %1606 = vmatpush1.msra.mxu0 %v1569
  %1607 = vmatprep.subr.mxu0 %v1406
  %1608 = vmatpush1.msra.mxu0 %v1405
  %1609 = vmatprep.subr.mxu0 %v1410
  %1610 = vmatpush1.msra.mxu0 %v1409
  %1611 = vmatprep.subr.mxu0 %v1450
  %1612 = vmatpush1.msra.mxu0 %v1449
  %1613 = vmatprep.subr.mxu0 %v1454
  %1614 = vmatpush1.msra.mxu0 %v1453
  %1615 = vmatprep.subr.mxu0 %v1494
  %1616 = vmatpush1.msra.mxu0 %v1493
  %1617 = vmatprep.subr.mxu0 %v1498
  %1618 = vmatpush1.msra.mxu0 %v1497
  %1619 = vmatprep.subr.mxu0 %v1538
  %1620 = vmatpush1.msra.mxu0 %v1537
  %1621 = vmatprep.subr.mxu0 %v1542
  %1622 = vmatpush1.msra.mxu0 %v1541
  %1623 = vmatprep.subr.mxu0 %v453
  %1624 = vmatpush1.msra.mxu0 %v453
  %1625 = vmatprep.subr.mxu0 0.0
  %1626 = vmatpush1.msra.mxu0 0.0
  %1627 = vmatprep.subr.mxu0 0.0
  %1628 = vmatpush1.msra.mxu0 0.0
  %1629 = vmatprep.subr.mxu0 0.0
  %1630 = vmatpush1.msra.mxu0 0.0
  %1631 = vmatprep.subr.mxu0 0.0
  %1632 = vmatpush1.msra.mxu0 0.0
  %1633 = vmatprep.subr.mxu0 0.0
  %1634 = vmatpush1.msra.mxu0 0.0
  %1635 = vmatprep.subr.mxu0 0.0
  %1636 = vmatpush1.msra.mxu0 0.0
  %1637 = vmatprep.subr.mxu0 0.0
  %1638 = vmatpush1.msra.mxu0 0.0
  %1639 = vmatprep.subr.mxu0 0.0
  %1640 = vmatpush1.msra.mxu0 0.0
  %1641 = vmatprep.subr.mxu0 0.0
  %1642 = vmatpush1.msra.mxu0 0.0
  %1643 = vmatprep.subr.mxu0 0.0
  %1644 = vmatpush1.msra.mxu0 0.0
  %1645 = vmatprep.subr.mxu0 0.0
  %1646 = vmatpush1.msra.mxu0 0.0
  %1647 = vmatprep.subr.mxu0 0.0
  %1648 = vmatpush1.msra.mxu0 0.0
  %1649 = vmatprep.subr.mxu0 0.0
  %1650 = vmatpush1.msra.mxu0 0.0
  %1651 = vmatprep.mubr.f32.mxu0 %v1582
  %1652 = vmatmul.mubr.f32.gmra.mrb[0].mxu0 %v1205
  %v1653 = vpop.f32.mrb[0].mxu0
  %v1654 = vadd.f32 0.0, %v1653
  %v1655 = vpop.f32.mrb[0].mxu0
  %v1656 = vadd.f32 0.0, %v1655
  %1657 = vmatprep.mubr.f32.mxu0 %v1585
  %1658 = vmatmul.mubr.f32.gmra.mrb[0].mxu0 %v1207
  %v1659 = vpop.f32.mrb[0].mxu0
  %v1660 = vadd.f32 0.0, %v1659
  %v1661 = vpop.f32.mrb[0].mxu0
  %v1662 = vadd.f32 0.0, %v1661
  %1663 = vdwg.mxu0
  %1664 = vmatprep.subr.mxu0 %v1222
  %1665 = vmatpush1.msra.mxu0 %v1221
  %1666 = vmatprep.subr.mxu0 %v1226
  %1667 = vmatpush1.msra.mxu0 %v1225
  %1668 = vmatprep.subr.mxu0 %v1276
  %1669 = vmatpush1.msra.mxu0 %v1275
  %1670 = vmatprep.subr.mxu0 %v1280
  %1671 = vmatpush1.msra.mxu0 %v1279
  %1672 = vmatprep.subr.mxu0 %v1320
  %1673 = vmatpush1.msra.mxu0 %v1319
  %1674 = vmatprep.subr.mxu0 %v1324
  %1675 = vmatpush1.msra.mxu0 %v1323
  %1676 = vmatprep.subr.mxu0 %v1364
  %1677 = vmatpush1.msra.mxu0 %v1363
  %1678 = vmatprep.subr.mxu0 %v1368
  %1679 = vmatpush1.msra.mxu0 %v1367
  %1680 = vmatprep.subr.mxu0 %v1568
  %1681 = vmatpush1.msra.mxu0 %v1567
  %1682 = vmatprep.subr.mxu0 %v1572
  %1683 = vmatpush1.msra.mxu0 %v1571
  %1684 = vmatprep.subr.mxu0 %v1408
  %1685 = vmatpush1.msra.mxu0 %v1407
  %1686 = vmatprep.subr.mxu0 %v1412
  %1687 = vmatpush1.msra.mxu0 %v1411
  %1688 = vmatprep.subr.mxu0 %v1452
  %1689 = vmatpush1.msra.mxu0 %v1451
  %1690 = vmatprep.subr.mxu0 %v1456
  %1691 = vmatpush1.msra.mxu0 %v1455
  %1692 = vmatprep.subr.mxu0 %v1496
  %1693 = vmatpush1.msra.mxu0 %v1495
  %1694 = vmatprep.subr.mxu0 %v1500
  %1695 = vmatpush1.msra.mxu0 %v1499
  %1696 = vmatprep.subr.mxu0 %v1540
  %1697 = vmatpush1.msra.mxu0 %v1539
  %1698 = vmatprep.subr.mxu0 %v1544
  %1699 = vmatpush1.msra.mxu0 %v1543
  %1700 = vmatprep.subr.mxu0 %v453
  %1701 = vmatpush1.msra.mxu0 %v453
  %1702 = vmatprep.subr.mxu0 0.0
  %1703 = vmatpush1.msra.mxu0 0.0
  %1704 = vmatprep.subr.mxu0 0.0
  %1705 = vmatpush1.msra.mxu0 0.0
  %1706 = vmatprep.subr.mxu0 0.0
  %1707 = vmatpush1.msra.mxu0 0.0
  %1708 = vmatprep.subr.mxu0 0.0
  %1709 = vmatpush1.msra.mxu0 0.0
  %1710 = vmatprep.subr.mxu0 0.0
  %1711 = vmatpush1.msra.mxu0 0.0
  %1712 = vmatprep.subr.mxu0 0.0
  %1713 = vmatpush1.msra.mxu0 0.0
  %1714 = vmatprep.subr.mxu0 0.0
  %1715 = vmatpush1.msra.mxu0 0.0
  %1716 = vmatprep.subr.mxu0 0.0
  %1717 = vmatpush1.msra.mxu0 0.0
  %1718 = vmatprep.subr.mxu0 0.0
  %1719 = vmatpush1.msra.mxu0 0.0
  %1720 = vmatprep.subr.mxu0 0.0
  %1721 = vmatpush1.msra.mxu0 0.0
  %1722 = vmatprep.subr.mxu0 0.0
  %1723 = vmatpush1.msra.mxu0 0.0
  %1724 = vmatprep.subr.mxu0 0.0
  %1725 = vmatpush1.msra.mxu0 0.0
  %1726 = vmatprep.subr.mxu0 0.0
  %1727 = vmatpush1.msra.mxu0 0.0
  %1728 = vmatprep.mubr.f32.mxu0 %v1582
  %1729 = vmatmul.mubr.f32.gmra.mrb[0].mxu0 %v1205
  %v1730 = vpop.f32.mrb[0].mxu0
  %v1731 = vadd.f32 0.0, %v1730
  %v1732 = vpop.f32.mrb[0].mxu0
  %v1733 = vadd.f32 0.0, %v1732
  %1734 = vmatprep.mubr.f32.mxu0 %v1585
  %1735 = vmatmul.mubr.f32.gmra.mrb[0].mxu0 %v1207
  %v1736 = vpop.f32.mrb[0].mxu0
  %v1737 = vadd.f32 0.0, %v1736
  %v1738 = vpop.f32.mrb[0].mxu0
  %v1739 = vadd.f32 0.0, %v1738
  %1740 = vdwg.mxu0
  %v1741 = vld [vmem:[%s1 + $0x30] sm:$0xff]
  %v1742 = vld [vmem:[%s1 + $0x68] sm:$0xff]
  %vm1743 = vcmask 72704
  %v1745 = vsel %vm1743, %v1741, 0
  %v1748 = vsel %vm1743, %v1742, 0
  %1750 = vmatprep.subr.mxu0 %v524
  %1751 = vmatpush1.msra.mxu0 %v522
  %1752 = vmatprep.subr.mxu0 %v453
  %1753 = vmatpush1.msra.mxu0 %v453
  %1754 = vmatprep.subr.mxu0 0.0
  %1755 = vmatpush1.msra.mxu0 0.0
  %1756 = vmatprep.subr.mxu0 0.0
  %1757 = vmatpush1.msra.mxu0 0.0
  %1758 = vmatprep.subr.mxu0 0.0
  %1759 = vmatpush1.msra.mxu0 0.0
  %1760 = vmatprep.subr.mxu0 0.0
  %1761 = vmatpush1.msra.mxu0 0.0
  %1762 = vmatprep.subr.mxu0 0.0
  %1763 = vmatpush1.msra.mxu0 0.0
  %1764 = vmatprep.subr.mxu0 0.0
  %1765 = vmatpush1.msra.mxu0 0.0
  %1766 = vmatprep.subr.mxu0 0.0
  %1767 = vmatpush1.msra.mxu0 0.0
  %1768 = vmatprep.subr.mxu0 0.0
  %1769 = vmatpush1.msra.mxu0 0.0
  %1770 = vmatprep.subr.mxu0 0.0
  %1771 = vmatpush1.msra.mxu0 0.0
  %1772 = vmatprep.subr.mxu0 0.0
  %1773 = vmatpush1.msra.mxu0 0.0
  %1774 = vmatprep.subr.mxu0 0.0
  %1775 = vmatpush1.msra.mxu0 0.0
  %1776 = vmatprep.subr.mxu0 0.0
  %1777 = vmatpush1.msra.mxu0 0.0
  %1778 = vmatprep.subr.mxu0 0.0
  %1779 = vmatpush1.msra.mxu0 0.0
  %1780 = vmatprep.subr.mxu0 0.0
  %1781 = vmatpush1.msra.mxu0 0.0
  %1782 = vmatprep.subr.mxu0 0.0
  %1783 = vmatpush1.msra.mxu0 0.0
  %1784 = vmatprep.subr.mxu0 0.0
  %1785 = vmatpush1.msra.mxu0 0.0
  %1786 = vmatprep.subr.mxu0 0.0
  %1787 = vmatpush1.msra.mxu0 0.0
  %1788 = vmatprep.subr.mxu0 0.0
  %1789 = vmatpush1.msra.mxu0 0.0
  %1790 = vmatprep.subr.mxu0 0.0
  %1791 = vmatpush1.msra.mxu0 0.0
  %1792 = vmatprep.subr.mxu0 0.0
  %1793 = vmatpush1.msra.mxu0 0.0
  %1794 = vmatprep.subr.mxu0 0.0
  %1795 = vmatpush1.msra.mxu0 0.0
  %1796 = vmatprep.subr.mxu0 0.0
  %1797 = vmatpush1.msra.mxu0 0.0
  %1798 = vmatprep.subr.mxu0 0.0
  %1799 = vmatpush1.msra.mxu0 0.0
  %1800 = vmatprep.subr.mxu0 0.0
  %1801 = vmatpush1.msra.mxu0 0.0
  %1802 = vmatprep.subr.mxu0 0.0
  %1803 = vmatpush1.msra.mxu0 0.0
  %1804 = vmatprep.subr.mxu0 0.0
  %1805 = vmatpush1.msra.mxu0 0.0
  %1806 = vmatprep.subr.mxu0 0.0
  %1807 = vmatpush1.msra.mxu0 0.0
  %1808 = vmatprep.subr.mxu0 0.0
  %1809 = vmatpush1.msra.mxu0 0.0
  %1810 = vmatprep.subr.mxu0 0.0
  %1811 = vmatpush1.msra.mxu0 0.0
  %1812 = vmatprep.subr.mxu0 0.0
  %1813 = vmatpush1.msra.mxu0 0.0
  %1814 = vmatprep.mubr.f32.mxu0 0.0
  %1815 = vmatmul.mubr.f32.gmra.mrb[0].mxu0 %v1745
  %v1816 = vpop.f32.mrb[0].mxu0
  %v1817 = vadd.f32 %v1654, %v1816
  %v1818 = vpop.f32.mrb[0].mxu0
  %v1819 = vadd.f32 %v1656, %v1818
  %1820 = vmatprep.mubr.f32.mxu0 0.0
  %1821 = vmatmul.mubr.f32.gmra.mrb[0].mxu0 %v1748
  %v1822 = vpop.f32.mrb[0].mxu0
  %v1823 = vadd.f32 %v1660, %v1822
  %v1824 = vpop.f32.mrb[0].mxu0
  %v1825 = vadd.f32 %v1662, %v1824
  %1826 = vdwg.mxu0
  %1827 = vmatprep.subr.mxu0 %v595
  %1828 = vmatpush1.msra.mxu0 %v593
  %1829 = vmatprep.subr.mxu0 %v453
  %1830 = vmatpush1.msra.mxu0 %v453
  %1831 = vmatprep.subr.mxu0 0.0
  %1832 = vmatpush1.msra.mxu0 0.0
  %1833 = vmatprep.subr.mxu0 0.0
  %1834 = vmatpush1.msra.mxu0 0.0
  %1835 = vmatprep.subr.mxu0 0.0
  %1836 = vmatpush1.msra.mxu0 0.0
  %1837 = vmatprep.subr.mxu0 0.0
  %1838 = vmatpush1.msra.mxu0 0.0
  %1839 = vmatprep.subr.mxu0 0.0
  %1840 = vmatpush1.msra.mxu0 0.0
  %1841 = vmatprep.subr.mxu0 0.0
  %1842 = vmatpush1.msra.mxu0 0.0
  %1843 = vmatprep.subr.mxu0 0.0
  %1844 = vmatpush1.msra.mxu0 0.0
  %1845 = vmatprep.subr.mxu0 0.0
  %1846 = vmatpush1.msra.mxu0 0.0
  %1847 = vmatprep.subr.mxu0 0.0
  %1848 = vmatpush1.msra.mxu0 0.0
  %1849 = vmatprep.subr.mxu0 0.0
  %1850 = vmatpush1.msra.mxu0 0.0
  %1851 = vmatprep.subr.mxu0 0.0
  %1852 = vmatpush1.msra.mxu0 0.0
  %1853 = vmatprep.subr.mxu0 0.0
  %1854 = vmatpush1.msra.mxu0 0.0
  %1855 = vmatprep.subr.mxu0 0.0
  %1856 = vmatpush1.msra.mxu0 0.0
  %1857 = vmatprep.subr.mxu0 0.0
  %1858 = vmatpush1.msra.mxu0 0.0
  %1859 = vmatprep.subr.mxu0 0.0
  %1860 = vmatpush1.msra.mxu0 0.0
  %1861 = vmatprep.subr.mxu0 0.0
  %1862 = vmatpush1.msra.mxu0 0.0
  %1863 = vmatprep.subr.mxu0 0.0
  %1864 = vmatpush1.msra.mxu0 0.0
  %1865 = vmatprep.subr.mxu0 0.0
  %1866 = vmatpush1.msra.mxu0 0.0
  %1867 = vmatprep.subr.mxu0 0.0
  %1868 = vmatpush1.msra.mxu0 0.0
  %1869 = vmatprep.subr.mxu0 0.0
  %1870 = vmatpush1.msra.mxu0 0.0
  %1871 = vmatprep.subr.mxu0 0.0
  %1872 = vmatpush1.msra.mxu0 0.0
  %1873 = vmatprep.subr.mxu0 0.0
  %1874 = vmatpush1.msra.mxu0 0.0
  %1875 = vmatprep.subr.mxu0 0.0
  %1876 = vmatpush1.msra.mxu0 0.0
  %1877 = vmatprep.subr.mxu0 0.0
  %1878 = vmatpush1.msra.mxu0 0.0
  %1879 = vmatprep.subr.mxu0 0.0
  %1880 = vmatpush1.msra.mxu0 0.0
  %1881 = vmatprep.subr.mxu0 0.0
  %1882 = vmatpush1.msra.mxu0 0.0
  %1883 = vmatprep.subr.mxu0 0.0
  %1884 = vmatpush1.msra.mxu0 0.0
  %1885 = vmatprep.subr.mxu0 0.0
  %1886 = vmatpush1.msra.mxu0 0.0
  %1887 = vmatprep.subr.mxu0 0.0
  %1888 = vmatpush1.msra.mxu0 0.0
  %1889 = vmatprep.subr.mxu0 0.0
  %1890 = vmatpush1.msra.mxu0 0.0
  %1891 = vmatprep.mubr.f32.mxu0 0.0
  %1892 = vmatmul.mubr.f32.gmra.mrb[0].mxu0 %v1745
  %v1893 = vpop.f32.mrb[0].mxu0
  %v1894 = vadd.f32 %v1731, %v1893
  %v1895 = vpop.f32.mrb[0].mxu0
  %v1896 = vadd.f32 %v1733, %v1895
  %1897 = vmatprep.mubr.f32.mxu0 0.0
  %1898 = vmatmul.mubr.f32.gmra.mrb[0].mxu0 %v1748
  %v1899 = vpop.f32.mrb[0].mxu0
  %v1900 = vadd.f32 %v1737, %v1899
  %v1901 = vpop.f32.mrb[0].mxu0
  %v1902 = vadd.f32 %v1739, %v1901
  %1903 = vdwg.mxu0
  %1912 = vrot.lane.b32.xlu0 %v1817, 17
  %v1913 = vpop.permute.xlu0 %1912
  %1914 = vrot.lane.b32.xlu0 %v1819, 17
  %v1915 = vpop.permute.xlu0 %1914
  %1916 = vrot.lane.b32.xlu0 %v1894, 17
  %v1917 = vpop.permute.xlu0 %1916
  %1918 = vrot.lane.b32.xlu0 %v1896, 17
  %v1919 = vpop.permute.xlu0 %1918
  %1920 = vrot.lane.b32.xlu0 %v1823, 17
  %v1921 = vpop.permute.xlu0 %1920
  %1922 = vrot.lane.b32.xlu0 %v1825, 17
  %v1923 = vpop.permute.xlu0 %1922
  %1924 = vrot.lane.b32.xlu0 %v1900, 17
  %v1925 = vpop.permute.xlu0 %1924
  %1926 = vrot.lane.b32.xlu0 %v1902, 17
  %v1927 = vpop.permute.xlu0 %1926
  %v1928 = vsel %vm172, %v1913, %v1915
  %v1929 = vsel %vm172, %v1915, %v1917
  %v1930 = vsel %vm172, %v1917, %v1919
  %v1931 = vsel %vm172, %v1921, %v1923
  %v1932 = vsel %vm172, %v1923, %v1925
  %v1933 = vsel %vm172, %v1925, %v1927
  %1944 = vst.msk [vmem:[#allocation2] sm:$0xff] %vm638, %v1913
  %1945 = vst [vmem:[#allocation2 + $0x8] sm:$0xff] %v1928
  %1946 = vst [vmem:[#allocation2 + $0x10] sm:$0xff] %v1929
  %1947 = vst [vmem:[#allocation2 + $0x18] sm:$0xff] %v1930
  %1948 = vst.msk [vmem:[#allocation2 + $0x20] sm:$0xff] %vm172, %v1919
  %1949 = vst.msk [vmem:[#allocation2 + $0x28] sm:$0xff] %vm638, %v1921
  %1950 = vst [vmem:[#allocation2 + $0x30] sm:$0xff] %v1931
  %1951 = vst [vmem:[#allocation2 + $0x38] sm:$0xff] %v1932
  %1952 = vst [vmem:[#allocation2 + $0x40] sm:$0xff] %v1933
  %1953 = vst.msk [vmem:[#allocation2 + $0x48] sm:$0xff] %vm172, %v1927
  %v1954 = vld [vmem:[%s1 + $0x20] sm:$0xff]
  %v1955 = vld [vmem:[%s1 + $0x28] sm:$0xff]
  %v1956 = vld [vmem:[%s1 + $0x58] sm:$0xff]
  %v1957 = vld [vmem:[%s1 + $0x60] sm:$0xff]
  %v1958 = vld [vmem:[#allocation2] sm:$0xff]
  %v1959 = vld [vmem:[#allocation2 + $0x8] sm:$0xff]
  %v1960 = vld [vmem:[#allocation2 + $0x10] sm:$0xff]
  %v1961 = vld [vmem:[#allocation2 + $0x18] sm:$0xff]
  %v1962 = vld [vmem:[#allocation2 + $0x20] sm:$0xff]
  %v1963 = vld [vmem:[#allocation2 + $0x28] sm:$0xff]
  %v1964 = vld [vmem:[#allocation2 + $0x30] sm:$0xff]
  %v1965 = vld [vmem:[#allocation2 + $0x38] sm:$0xff]
  %v1966 = vld [vmem:[#allocation2 + $0x40] sm:$0xff]
  %v1967 = vld [vmem:[#allocation2 + $0x48] sm:$0xff]
  %v1968 = vsel %vm198, %v1958, 0.0
  %v1969 = vsel %vm199, %v1959, 0.0
  %v1970 = vsel %vm200, %v1960, 0.0
  %v1971 = vsel %vm201, %v1961, 0.0
  %v1972 = vsel %vm198, %v1963, 0.0
  %v1973 = vsel %vm199, %v1964, 0.0
  %v1974 = vsel %vm200, %v1965, 0.0
  %v1975 = vsel %vm201, %v1966, 0.0
  %1986 = vrot.lane.b32.xlu0 %v1958, 127
  %v1987 = vpop.permute.xlu0 %1986
  %1988 = vrot.lane.b32.xlu0 %v1959, 127
  %v1989 = vpop.permute.xlu0 %1988
  %1990 = vrot.lane.b32.xlu0 %v1960, 127
  %v1991 = vpop.permute.xlu0 %1990
  %1992 = vrot.lane.b32.xlu0 %v1961, 127
  %v1993 = vpop.permute.xlu0 %1992
  %1994 = vrot.lane.b32.xlu0 %v1962, 127
  %v1995 = vpop.permute.xlu0 %1994
  %1996 = vrot.lane.b32.xlu0 %v1963, 127
  %v1997 = vpop.permute.xlu0 %1996
  %1998 = vrot.lane.b32.xlu0 %v1964, 127
  %v1999 = vpop.permute.xlu0 %1998
  %2000 = vrot.lane.b32.xlu0 %v1965, 127
  %v2001 = vpop.permute.xlu0 %2000
  %2002 = vrot.lane.b32.xlu0 %v1966, 127
  %v2003 = vpop.permute.xlu0 %2002
  %2004 = vrot.lane.b32.xlu0 %v1967, 127
  %v2005 = vpop.permute.xlu0 %2004
  %v2006 = vsel %vm229, %v1987, %v1989
  %v2007 = vsel %vm229, %v1989, %v1991
  %v2008 = vsel %vm229, %v1991, %v1993
  %v2009 = vsel %vm229, %v1993, %v1995
  %v2010 = vsel %vm229, %v1997, %v1999
  %v2011 = vsel %vm229, %v1999, %v2001
  %v2012 = vsel %vm229, %v2001, %v2003
  %v2013 = vsel %vm229, %v2003, %v2005
  %v2022 = vsel %vm210, %v2006, 0.0
  %v2023 = vsel %vm211, %v2007, 0.0
  %v2024 = vsel %vm212, %v2008, 0.0
  %v2025 = vsel %vm213, %v2009, 0.0
  %v2026 = vsel %vm210, %v2010, 0.0
  %v2027 = vsel %vm211, %v2011, 0.0
  %v2028 = vsel %vm212, %v2012, 0.0
  %v2029 = vsel %vm213, %v2013, 0.0
  %2030 = vrot.lane.b32.xlu0 %v1958, 126
  %v2031 = vpop.permute.xlu0 %2030
  %2032 = vrot.lane.b32.xlu0 %v1959, 126
  %v2033 = vpop.permute.xlu0 %2032
  %2034 = vrot.lane.b32.xlu0 %v1960, 126
  %v2035 = vpop.permute.xlu0 %2034
  %2036 = vrot.lane.b32.xlu0 %v1961, 126
  %v2037 = vpop.permute.xlu0 %2036
  %2038 = vrot.lane.b32.xlu0 %v1962, 126
  %v2039 = vpop.permute.xlu0 %2038
  %2040 = vrot.lane.b32.xlu0 %v1963, 126
  %v2041 = vpop.permute.xlu0 %2040
  %2042 = vrot.lane.b32.xlu0 %v1964, 126
  %v2043 = vpop.permute.xlu0 %2042
  %2044 = vrot.lane.b32.xlu0 %v1965, 126
  %v2045 = vpop.permute.xlu0 %2044
  %2046 = vrot.lane.b32.xlu0 %v1966, 126
  %v2047 = vpop.permute.xlu0 %2046
  %2048 = vrot.lane.b32.xlu0 %v1967, 126
  %v2049 = vpop.permute.xlu0 %2048
  %v2050 = vsel %vm260, %v2031, %v2033
  %v2051 = vsel %vm260, %v2033, %v2035
  %v2052 = vsel %vm260, %v2035, %v2037
  %v2053 = vsel %vm260, %v2037, %v2039
  %v2054 = vsel %vm260, %v2041, %v2043
  %v2055 = vsel %vm260, %v2043, %v2045
  %v2056 = vsel %vm260, %v2045, %v2047
  %v2057 = vsel %vm260, %v2047, %v2049
  %v2066 = vsel %vm246, %v2050, 0.0
  %v2067 = vsel %vm247, %v2051, 0.0
  %v2068 = vsel %vm248, %v2052, 0.0
  %v2069 = vsel %vm249, %v2053, 0.0
  %v2070 = vsel %vm246, %v2054, 0.0
  %v2071 = vsel %vm247, %v2055, 0.0
  %v2072 = vsel %vm248, %v2056, 0.0
  %v2073 = vsel %vm249, %v2057, 0.0
  %2074 = vrot.lane.b32.xlu0 %v1958, 112
  %v2075 = vpop.permute.xlu0 %2074
  %2076 = vrot.lane.b32.xlu0 %v1959, 112
  %v2077 = vpop.permute.xlu0 %2076
  %2078 = vrot.lane.b32.xlu0 %v1960, 112
  %v2079 = vpop.permute.xlu0 %2078
  %2080 = vrot.lane.b32.xlu0 %v1961, 112
  %v2081 = vpop.permute.xlu0 %2080
  %2082 = vrot.lane.b32.xlu0 %v1962, 112
  %v2083 = vpop.permute.xlu0 %2082
  %2084 = vrot.lane.b32.xlu0 %v1963, 112
  %v2085 = vpop.permute.xlu0 %2084
  %2086 = vrot.lane.b32.xlu0 %v1964, 112
  %v2087 = vpop.permute.xlu0 %2086
  %2088 = vrot.lane.b32.xlu0 %v1965, 112
  %v2089 = vpop.permute.xlu0 %2088
  %2090 = vrot.lane.b32.xlu0 %v1966, 112
  %v2091 = vpop.permute.xlu0 %2090
  %2092 = vrot.lane.b32.xlu0 %v1967, 112
  %v2093 = vpop.permute.xlu0 %2092
  %v2094 = vsel %vm291, %v2075, %v2077
  %v2095 = vsel %vm291, %v2077, %v2079
  %v2096 = vsel %vm291, %v2079, %v2081
  %v2097 = vsel %vm291, %v2081, %v2083
  %v2098 = vsel %vm291, %v2085, %v2087
  %v2099 = vsel %vm291, %v2087, %v2089
  %v2100 = vsel %vm291, %v2089, %v2091
  %v2101 = vsel %vm291, %v2091, %v2093
  %v2110 = vsel %vm277, %v2094, 0.0
  %v2111 = vsel %vm278, %v2095, 0.0
  %v2112 = vsel %vm279, %v2096, 0.0
  %v2113 = vsel %vm280, %v2097, 0.0
  %v2114 = vsel %vm277, %v2098, 0.0
  %v2115 = vsel %vm278, %v2099, 0.0
  %v2116 = vsel %vm279, %v2100, 0.0
  %v2117 = vsel %vm280, %v2101, 0.0
  %2118 = vrot.lane.b32.xlu0 %v1958, 110
  %v2119 = vpop.permute.xlu0 %2118
  %2120 = vrot.lane.b32.xlu0 %v1959, 110
  %v2121 = vpop.permute.xlu0 %2120
  %2122 = vrot.lane.b32.xlu0 %v1960, 110
  %v2123 = vpop.permute.xlu0 %2122
  %2124 = vrot.lane.b32.xlu0 %v1961, 110
  %v2125 = vpop.permute.xlu0 %2124
  %2126 = vrot.lane.b32.xlu0 %v1962, 110
  %v2127 = vpop.permute.xlu0 %2126
  %2128 = vrot.lane.b32.xlu0 %v1963, 110
  %v2129 = vpop.permute.xlu0 %2128
  %2130 = vrot.lane.b32.xlu0 %v1964, 110
  %v2131 = vpop.permute.xlu0 %2130
  %2132 = vrot.lane.b32.xlu0 %v1965, 110
  %v2133 = vpop.permute.xlu0 %2132
  %2134 = vrot.lane.b32.xlu0 %v1966, 110
  %v2135 = vpop.permute.xlu0 %2134
  %2136 = vrot.lane.b32.xlu0 %v1967, 110
  %v2137 = vpop.permute.xlu0 %2136
  %v2138 = vsel %vm322, %v2119, %v2121
  %v2139 = vsel %vm322, %v2121, %v2123
  %v2140 = vsel %vm322, %v2123, %v2125
  %v2141 = vsel %vm322, %v2125, %v2127
  %v2142 = vsel %vm322, %v2129, %v2131
  %v2143 = vsel %vm322, %v2131, %v2133
  %v2144 = vsel %vm322, %v2133, %v2135
  %v2145 = vsel %vm322, %v2135, %v2137
  %v2154 = vsel %vm308, %v2138, 0.0
  %v2155 = vsel %vm309, %v2139, 0.0
  %v2156 = vsel %vm310, %v2140, 0.0
  %v2157 = vsel %vm311, %v2141, 0.0
  %v2158 = vsel %vm308, %v2142, 0.0
  %v2159 = vsel %vm309, %v2143, 0.0
  %v2160 = vsel %vm310, %v2144, 0.0
  %v2161 = vsel %vm311, %v2145, 0.0
  %2162 = vrot.lane.b32.xlu0 %v1958, 96
  %v2163 = vpop.permute.xlu0 %2162
  %2164 = vrot.lane.b32.xlu0 %v1959, 96
  %v2165 = vpop.permute.xlu0 %2164
  %2166 = vrot.lane.b32.xlu0 %v1960, 96
  %v2167 = vpop.permute.xlu0 %2166
  %2168 = vrot.lane.b32.xlu0 %v1961, 96
  %v2169 = vpop.permute.xlu0 %2168
  %2170 = vrot.lane.b32.xlu0 %v1962, 96
  %v2171 = vpop.permute.xlu0 %2170
  %2172 = vrot.lane.b32.xlu0 %v1963, 96
  %v2173 = vpop.permute.xlu0 %2172
  %2174 = vrot.lane.b32.xlu0 %v1964, 96
  %v2175 = vpop.permute.xlu0 %2174
  %2176 = vrot.lane.b32.xlu0 %v1965, 96
  %v2177 = vpop.permute.xlu0 %2176
  %2178 = vrot.lane.b32.xlu0 %v1966, 96
  %v2179 = vpop.permute.xlu0 %2178
  %2180 = vrot.lane.b32.xlu0 %v1967, 96
  %v2181 = vpop.permute.xlu0 %2180
  %v2182 = vsel %vm353, %v2163, %v2165
  %v2183 = vsel %vm353, %v2165, %v2167
  %v2184 = vsel %vm353, %v2167, %v2169
  %v2185 = vsel %vm353, %v2169, %v2171
  %v2186 = vsel %vm353, %v2173, %v2175
  %v2187 = vsel %vm353, %v2175, %v2177
  %v2188 = vsel %vm353, %v2177, %v2179
  %v2189 = vsel %vm353, %v2179, %v2181
  %v2198 = vsel %vm339, %v2182, 0.0
  %v2199 = vsel %vm340, %v2183, 0.0
  %v2200 = vsel %vm341, %v2184, 0.0
  %v2201 = vsel %vm342, %v2185, 0.0
  %v2202 = vsel %vm339, %v2186, 0.0
  %v2203 = vsel %vm340, %v2187, 0.0
  %v2204 = vsel %vm341, %v2188, 0.0
  %v2205 = vsel %vm342, %v2189, 0.0
  %2206 = vrot.lane.b32.xlu0 %v1958, 95
  %v2207 = vpop.permute.xlu0 %2206
  %2208 = vrot.lane.b32.xlu0 %v1959, 95
  %v2209 = vpop.permute.xlu0 %2208
  %2210 = vrot.lane.b32.xlu0 %v1960, 95
  %v2211 = vpop.permute.xlu0 %2210
  %2212 = vrot.lane.b32.xlu0 %v1961, 95
  %v2213 = vpop.permute.xlu0 %2212
  %2214 = vrot.lane.b32.xlu0 %v1962, 95
  %v2215 = vpop.permute.xlu0 %2214
  %2216 = vrot.lane.b32.xlu0 %v1963, 95
  %v2217 = vpop.permute.xlu0 %2216
  %2218 = vrot.lane.b32.xlu0 %v1964, 95
  %v2219 = vpop.permute.xlu0 %2218
  %2220 = vrot.lane.b32.xlu0 %v1965, 95
  %v2221 = vpop.permute.xlu0 %2220
  %2222 = vrot.lane.b32.xlu0 %v1966, 95
  %v2223 = vpop.permute.xlu0 %2222
  %2224 = vrot.lane.b32.xlu0 %v1967, 95
  %v2225 = vpop.permute.xlu0 %2224
  %v2226 = vsel %vm384, %v2207, %v2209
  %v2227 = vsel %vm384, %v2209, %v2211
  %v2228 = vsel %vm384, %v2211, %v2213
  %v2229 = vsel %vm384, %v2213, %v2215
  %v2230 = vsel %vm384, %v2217, %v2219
  %v2231 = vsel %vm384, %v2219, %v2221
  %v2232 = vsel %vm384, %v2221, %v2223
  %v2233 = vsel %vm384, %v2223, %v2225
  %v2242 = vsel %vm370, %v2226, 0.0
  %v2243 = vsel %vm371, %v2227, 0.0
  %v2244 = vsel %vm372, %v2228, 0.0
  %v2245 = vsel %vm373, %v2229, 0.0
  %v2246 = vsel %vm370, %v2230, 0.0
  %v2247 = vsel %vm371, %v2231, 0.0
  %v2248 = vsel %vm372, %v2232, 0.0
  %v2249 = vsel %vm373, %v2233, 0.0
  %2250 = vrot.lane.b32.xlu0 %v1958, 94
  %v2251 = vpop.permute.xlu0 %2250
  %2252 = vrot.lane.b32.xlu0 %v1959, 94
  %v2253 = vpop.permute.xlu0 %2252
  %2254 = vrot.lane.b32.xlu0 %v1960, 94
  %v2255 = vpop.permute.xlu0 %2254
  %2256 = vrot.lane.b32.xlu0 %v1961, 94
  %v2257 = vpop.permute.xlu0 %2256
  %2258 = vrot.lane.b32.xlu0 %v1962, 94
  %v2259 = vpop.permute.xlu0 %2258
  %2260 = vrot.lane.b32.xlu0 %v1963, 94
  %v2261 = vpop.permute.xlu0 %2260
  %2262 = vrot.lane.b32.xlu0 %v1964, 94
  %v2263 = vpop.permute.xlu0 %2262
  %2264 = vrot.lane.b32.xlu0 %v1965, 94
  %v2265 = vpop.permute.xlu0 %2264
  %2266 = vrot.lane.b32.xlu0 %v1966, 94
  %v2267 = vpop.permute.xlu0 %2266
  %2268 = vrot.lane.b32.xlu0 %v1967, 94
  %v2269 = vpop.permute.xlu0 %2268
  %v2270 = vsel %vm415, %v2251, %v2253
  %v2271 = vsel %vm415, %v2253, %v2255
  %v2272 = vsel %vm415, %v2255, %v2257
  %v2273 = vsel %vm415, %v2257, %v2259
  %v2274 = vsel %vm415, %v2261, %v2263
  %v2275 = vsel %vm415, %v2263, %v2265
  %v2276 = vsel %vm415, %v2265, %v2267
  %v2277 = vsel %vm415, %v2267, %v2269
  %v2286 = vsel %vm401, %v2270, 0.0
  %v2287 = vsel %vm402, %v2271, 0.0
  %v2288 = vsel %vm403, %v2272, 0.0
  %v2289 = vsel %vm404, %v2273, 0.0
  %v2290 = vsel %vm401, %v2274, 0.0
  %v2291 = vsel %vm402, %v2275, 0.0
  %v2292 = vsel %vm403, %v2276, 0.0
  %v2293 = vsel %vm404, %v2277, 0.0
  %2294 = vrot.lane.b32.xlu0 %v1958, 111
  %v2295 = vpop.permute.xlu0 %2294
  %2296 = vrot.lane.b32.xlu0 %v1959, 111
  %v2297 = vpop.permute.xlu0 %2296
  %2298 = vrot.lane.b32.xlu0 %v1960, 111
  %v2299 = vpop.permute.xlu0 %2298
  %2300 = vrot.lane.b32.xlu0 %v1961, 111
  %v2301 = vpop.permute.xlu0 %2300
  %2302 = vrot.lane.b32.xlu0 %v1962, 111
  %v2303 = vpop.permute.xlu0 %2302
  %2304 = vrot.lane.b32.xlu0 %v1963, 111
  %v2305 = vpop.permute.xlu0 %2304
  %2306 = vrot.lane.b32.xlu0 %v1964, 111
  %v2307 = vpop.permute.xlu0 %2306
  %2308 = vrot.lane.b32.xlu0 %v1965, 111
  %v2309 = vpop.permute.xlu0 %2308
  %2310 = vrot.lane.b32.xlu0 %v1966, 111
  %v2311 = vpop.permute.xlu0 %2310
  %2312 = vrot.lane.b32.xlu0 %v1967, 111
  %v2313 = vpop.permute.xlu0 %2312
  %v2314 = vsel %vm438, %v2295, %v2297
  %v2315 = vsel %vm438, %v2297, %v2299
  %v2316 = vsel %vm438, %v2299, %v2301
  %v2317 = vsel %vm438, %v2301, %v2303
  %v2318 = vsel %vm438, %v2305, %v2307
  %v2319 = vsel %vm438, %v2307, %v2309
  %v2320 = vsel %vm438, %v2309, %v2311
  %v2321 = vsel %vm438, %v2311, %v2313
  %v2331 = vsel %vm172, %v1955, 0
  %v2334 = vsel %vm172, %v1957, 0
  %2336 = vmatprep.subr.mxu0 %v1969
  %2337 = vmatpush1.msra.mxu0 %v1968
  %2338 = vmatprep.subr.mxu0 %v1973
  %2339 = vmatpush1.msra.mxu0 %v1972
  %2340 = vmatprep.subr.mxu0 %v2023
  %2341 = vmatpush1.msra.mxu0 %v2022
  %2342 = vmatprep.subr.mxu0 %v2027
  %2343 = vmatpush1.msra.mxu0 %v2026
  %2344 = vmatprep.subr.mxu0 %v2067
  %2345 = vmatpush1.msra.mxu0 %v2066
  %2346 = vmatprep.subr.mxu0 %v2071
  %2347 = vmatpush1.msra.mxu0 %v2070
  %2348 = vmatprep.subr.mxu0 %v2111
  %2349 = vmatpush1.msra.mxu0 %v2110
  %2350 = vmatprep.subr.mxu0 %v2115
  %2351 = vmatpush1.msra.mxu0 %v2114
  %2352 = vmatprep.subr.mxu0 %v2315
  %2353 = vmatpush1.msra.mxu0 %v2314
  %2354 = vmatprep.subr.mxu0 %v2319
  %2355 = vmatpush1.msra.mxu0 %v2318
  %2356 = vmatprep.subr.mxu0 %v2155
  %2357 = vmatpush1.msra.mxu0 %v2154
  %2358 = vmatprep.subr.mxu0 %v2159
  %2359 = vmatpush1.msra.mxu0 %v2158
  %2360 = vmatprep.subr.mxu0 %v2199
  %2361 = vmatpush1.msra.mxu0 %v2198
  %2362 = vmatprep.subr.mxu0 %v2203
  %2363 = vmatpush1.msra.mxu0 %v2202
  %2364 = vmatprep.subr.mxu0 %v2243
  %2365 = vmatpush1.msra.mxu0 %v2242
  %2366 = vmatprep.subr.mxu0 %v2247
  %2367 = vmatpush1.msra.mxu0 %v2246
  %2368 = vmatprep.subr.mxu0 %v2287
  %2369 = vmatpush1.msra.mxu0 %v2286
  %2370 = vmatprep.subr.mxu0 %v2291
  %2371 = vmatpush1.msra.mxu0 %v2290
  %2372 = vmatprep.subr.mxu0 %v453
  %2373 = vmatpush1.msra.mxu0 %v453
  %2374 = vmatprep.subr.mxu0 0.0
  %2375 = vmatpush1.msra.mxu0 0.0
  %2376 = vmatprep.subr.mxu0 0.0
  %2377 = vmatpush1.msra.mxu0 0.0
  %2378 = vmatprep.subr.mxu0 0.0
  %2379 = vmatpush1.msra.mxu0 0.0
  %2380 = vmatprep.subr.mxu0 0.0
  %2381 = vmatpush1.msra.mxu0 0.0
  %2382 = vmatprep.subr.mxu0 0.0
  %2383 = vmatpush1.msra.mxu0 0.0
  %2384 = vmatprep.subr.mxu0 0.0
  %2385 = vmatpush1.msra.mxu0 0.0
  %2386 = vmatprep.subr.mxu0 0.0
  %2387 = vmatpush1.msra.mxu0 0.0
  %2388 = vmatprep.subr.mxu0 0.0
  %2389 = vmatpush1.msra.mxu0 0.0
  %2390 = vmatprep.subr.mxu0 0.0
  %2391 = vmatpush1.msra.mxu0 0.0
  %2392 = vmatprep.subr.mxu0 0.0
  %2393 = vmatpush1.msra.mxu0 0.0
  %2394 = vmatprep.subr.mxu0 0.0
  %2395 = vmatpush1.msra.mxu0 0.0
  %2396 = vmatprep.subr.mxu0 0.0
  %2397 = vmatpush1.msra.mxu0 0.0
  %2398 = vmatprep.subr.mxu0 0.0
  %2399 = vmatpush1.msra.mxu0 0.0
  %2400 = vmatprep.mubr.f32.mxu0 %v2331
  %2401 = vmatmul.mubr.f32.gmra.mrb[0].mxu0 %v1954
  %v2402 = vpop.f32.mrb[0].mxu0
  %v2403 = vadd.f32 0.0, %v2402
  %v2404 = vpop.f32.mrb[0].mxu0
  %v2405 = vadd.f32 0.0, %v2404
  %2406 = vmatprep.mubr.f32.mxu0 %v2334
  %2407 = vmatmul.mubr.f32.gmra.mrb[0].mxu0 %v1956
  %v2408 = vpop.f32.mrb[0].mxu0
  %v2409 = vadd.f32 0.0, %v2408
  %v2410 = vpop.f32.mrb[0].mxu0
  %v2411 = vadd.f32 0.0, %v2410
  %2412 = vdwg.mxu0
  %2413 = vmatprep.subr.mxu0 %v1971
  %2414 = vmatpush1.msra.mxu0 %v1970
  %2415 = vmatprep.subr.mxu0 %v1975
  %2416 = vmatpush1.msra.mxu0 %v1974
  %2417 = vmatprep.subr.mxu0 %v2025
  %2418 = vmatpush1.msra.mxu0 %v2024
  %2419 = vmatprep.subr.mxu0 %v2029
  %2420 = vmatpush1.msra.mxu0 %v2028
  %2421 = vmatprep.subr.mxu0 %v2069
  %2422 = vmatpush1.msra.mxu0 %v2068
  %2423 = vmatprep.subr.mxu0 %v2073
  %2424 = vmatpush1.msra.mxu0 %v2072
  %2425 = vmatprep.subr.mxu0 %v2113
  %2426 = vmatpush1.msra.mxu0 %v2112
  %2427 = vmatprep.subr.mxu0 %v2117
  %2428 = vmatpush1.msra.mxu0 %v2116
  %2429 = vmatprep.subr.mxu0 %v2317
  %2430 = vmatpush1.msra.mxu0 %v2316
  %2431 = vmatprep.subr.mxu0 %v2321
  %2432 = vmatpush1.msra.mxu0 %v2320
  %2433 = vmatprep.subr.mxu0 %v2157
  %2434 = vmatpush1.msra.mxu0 %v2156
  %2435 = vmatprep.subr.mxu0 %v2161
  %2436 = vmatpush1.msra.mxu0 %v2160
  %2437 = vmatprep.subr.mxu0 %v2201
  %2438 = vmatpush1.msra.mxu0 %v2200
  %2439 = vmatprep.subr.mxu0 %v2205
  %2440 = vmatpush1.msra.mxu0 %v2204
  %2441 = vmatprep.subr.mxu0 %v2245
  %2442 = vmatpush1.msra.mxu0 %v2244
  %2443 = vmatprep.subr.mxu0 %v2249
  %2444 = vmatpush1.msra.mxu0 %v2248
  %2445 = vmatprep.subr.mxu0 %v2289
  %2446 = vmatpush1.msra.mxu0 %v2288
  %2447 = vmatprep.subr.mxu0 %v2293
  %2448 = vmatpush1.msra.mxu0 %v2292
  %2449 = vmatprep.subr.mxu0 %v453
  %2450 = vmatpush1.msra.mxu0 %v453
  %2451 = vmatprep.subr.mxu0 0.0
  %2452 = vmatpush1.msra.mxu0 0.0
  %2453 = vmatprep.subr.mxu0 0.0
  %2454 = vmatpush1.msra.mxu0 0.0
  %2455 = vmatprep.subr.mxu0 0.0
  %2456 = vmatpush1.msra.mxu0 0.0
  %2457 = vmatprep.subr.mxu0 0.0
  %2458 = vmatpush1.msra.mxu0 0.0
  %2459 = vmatprep.subr.mxu0 0.0
  %2460 = vmatpush1.msra.mxu0 0.0
  %2461 = vmatprep.subr.mxu0 0.0
  %2462 = vmatpush1.msra.mxu0 0.0
  %2463 = vmatprep.subr.mxu0 0.0
  %2464 = vmatpush1.msra.mxu0 0.0
  %2465 = vmatprep.subr.mxu0 0.0
  %2466 = vmatpush1.msra.mxu0 0.0
  %2467 = vmatprep.subr.mxu0 0.0
  %2468 = vmatpush1.msra.mxu0 0.0
  %2469 = vmatprep.subr.mxu0 0.0
  %2470 = vmatpush1.msra.mxu0 0.0
  %2471 = vmatprep.subr.mxu0 0.0
  %2472 = vmatpush1.msra.mxu0 0.0
  %2473 = vmatprep.subr.mxu0 0.0
  %2474 = vmatpush1.msra.mxu0 0.0
  %2475 = vmatprep.subr.mxu0 0.0
  %2476 = vmatpush1.msra.mxu0 0.0
  %2477 = vmatprep.mubr.f32.mxu0 %v2331
  %2478 = vmatmul.mubr.f32.gmra.mrb[0].mxu0 %v1954
  %v2479 = vpop.f32.mrb[0].mxu0
  %v2480 = vadd.f32 0.0, %v2479
  %v2481 = vpop.f32.mrb[0].mxu0
  %v2482 = vadd.f32 0.0, %v2481
  %2483 = vmatprep.mubr.f32.mxu0 %v2334
  %2484 = vmatmul.mubr.f32.gmra.mrb[0].mxu0 %v1956
  %v2485 = vpop.f32.mrb[0].mxu0
  %v2486 = vadd.f32 0.0, %v2485
  %v2487 = vpop.f32.mrb[0].mxu0
  %v2488 = vadd.f32 0.0, %v2487
  %2489 = vdwg.mxu0
  %v2490 = vld [vmem:[%s2] sm:$0xff]
  %v2491 = vld [vmem:[%s2 + $0x8] sm:$0xff]
  %v2492 = vld [vmem:[%s2 + $0x10] sm:$0xff]
  %v2493 = vld [vmem:[%s2 + $0x18] sm:$0xff]
  %v2494 = vld [vmem:[%s2 + $0x20] sm:$0xff]
  %v2495 = vld [vmem:[%s2 + $0x28] sm:$0xff]
  %v2496 = vld [vmem:[%s2 + $0x30] sm:$0xff]
  %v2497 = vld [vmem:[%s2 + $0x38] sm:$0xff]
  %v2498 = vld [vmem:[%s2 + $0x40] sm:$0xff]
  %v2499 = vld [vmem:[%s2 + $0x48] sm:$0xff]
  %v2500 = vld [vmem:[%s2 + $0x50] sm:$0xff]
  %v2501 = vld [vmem:[%s2 + $0x58] sm:$0xff]
  %v2502 = vld [vmem:[%s2 + $0x60] sm:$0xff]
  %v2503 = vld [vmem:[%s2 + $0x68] sm:$0xff]
  %v2504 = vld [vmem:[%s2 + $0x70] sm:$0xff]
  %v2505 = vld [vmem:[%s2 + $0x78] sm:$0xff]
  %v2506 = vld [vmem:[%s2 + $0x80] sm:$0xff]
  %v2507 = vld [vmem:[%s2 + $0x88] sm:$0xff]
  %v2508 = vld [vmem:[%s2 + $0x90] sm:$0xff]
  %v2509 = vld [vmem:[%s2 + $0x98] sm:$0xff]
  %v2510 = vld [vmem:[%s2 + $0xa0] sm:$0xff]
  %v2511 = vld [vmem:[%s2 + $0xa8] sm:$0xff]
  %v2512 = vld [vmem:[%s2 + $0xb0] sm:$0xff]
  %v2513 = vld [vmem:[%s2 + $0xb8] sm:$0xff]
  %v2514 = vld [vmem:[%s2 + $0xc0] sm:$0xff]
  %v2515 = vld [vmem:[%s2 + $0xc8] sm:$0xff]
  %v2516 = vld [vmem:[%s2 + $0xd0] sm:$0xff]
  %v2517 = vld [vmem:[%s2 + $0xd8] sm:$0xff]
  %v2518 = vld [vmem:[%s2 + $0xe0] sm:$0xff]
  %v2519 = vld [vmem:[%s2 + $0xe8] sm:$0xff]
  %v2520 = vld [vmem:[%s2 + $0xf0] sm:$0xff]
  %v2521 = vld [vmem:[%s2 + $0xf8] sm:$0xff]
  %v2522 = vld [vmem:[%s2 + $0x100] sm:$0xff]
  %v2523 = vld [vmem:[%s2 + $0x108] sm:$0xff]
  %v2524 = vld [vmem:[%s2 + $0x110] sm:$0xff]
  %v2525 = vld [vmem:[%s2 + $0x118] sm:$0xff]
  %v2526 = vld [vmem:[%s2 + $0x120] sm:$0xff]
  %v2527 = vld [vmem:[%s2 + $0x128] sm:$0xff]
  %v2528 = vld [vmem:[%s2 + $0x130] sm:$0xff]
  %v2529 = vld [vmem:[%s2 + $0x138] sm:$0xff]
  %v2530 = vld [vmem:[%s2 + $0x140] sm:$0xff]
  %v2531 = vld [vmem:[%s2 + $0x148] sm:$0xff]
  %v2532 = vld [vmem:[%s2 + $0x150] sm:$0xff]
  %v2533 = vld [vmem:[%s2 + $0x158] sm:$0xff]
  %v2534 = vld [vmem:[%s2 + $0x160] sm:$0xff]
  %v2535 = vld [vmem:[%s2 + $0x168] sm:$0xff]
  %v2536 = vld [vmem:[%s2 + $0x170] sm:$0xff]
  %v2537 = vld [vmem:[%s2 + $0x178] sm:$0xff]
  %v2538 = vld [vmem:[%s2 + $0x180] sm:$0xff]
  %v2539 = vld [vmem:[%s2 + $0x188] sm:$0xff]
  %v2540 = vld [vmem:[%s2 + $0x190] sm:$0xff]
  %v2541 = vld [vmem:[%s2 + $0x198] sm:$0xff]
  %v2542 = vld [vmem:[%s2 + $0x1a0] sm:$0xff]
  %v2543 = vld [vmem:[%s2 + $0x1a8] sm:$0xff]
  %v2544 = vld [vmem:[%s2 + $0x1b0] sm:$0xff]
  %v2545 = vld [vmem:[%s2 + $0x1b8] sm:$0xff]
  %v2546 = vld [vmem:[%s2 + $0x1c0] sm:$0xff]
  %v2547 = vld [vmem:[%s2 + $0x1c8] sm:$0xff]
  %v2548 = vld [vmem:[%s2 + $0x1d0] sm:$0xff]
  %v2549 = vld [vmem:[%s2 + $0x1d8] sm:$0xff]
  %v2550 = vld [vmem:[%s2 + $0x1e0] sm:$0xff]
  %v2551 = vld [vmem:[%s2 + $0x1e8] sm:$0xff]
  %v2552 = vld [vmem:[%s2 + $0x1f0] sm:$0xff]
  %v2553 = vld [vmem:[%s2 + $0x1f8] sm:$0xff]
  %2554 = vmatprep.subr.mxu0 0.0
  %2555 = vmatpush1.msra.mxu0 %v2490
  %2556 = vmatprep.subr.mxu0 0.0
  %2557 = vmatpush1.msra.mxu0 %v2491
  %2558 = vmatprep.subr.mxu0 0.0
  %2559 = vmatpush1.msra.mxu0 %v2492
  %2560 = vmatprep.subr.mxu0 0.0
  %2561 = vmatpush1.msra.mxu0 %v2493
  %2562 = vmatprep.subr.mxu0 0.0
  %2563 = vmatpush1.msra.mxu0 %v2494
  %2564 = vmatprep.subr.mxu0 0.0
  %2565 = vmatpush1.msra.mxu0 %v2495
  %2566 = vmatprep.subr.mxu0 0.0
  %2567 = vmatpush1.msra.mxu0 %v2496
  %2568 = vmatprep.subr.mxu0 0.0
  %2569 = vmatpush1.msra.mxu0 %v2497
  %2570 = vmatprep.subr.mxu0 0.0
  %2571 = vmatpush1.msra.mxu0 %v2498
  %2572 = vmatprep.subr.mxu0 0.0
  %2573 = vmatpush1.msra.mxu0 %v2499
  %2574 = vmatprep.subr.mxu0 0.0
  %2575 = vmatpush1.msra.mxu0 %v2500
  %2576 = vmatprep.subr.mxu0 0.0
  %2577 = vmatpush1.msra.mxu0 %v2501
  %2578 = vmatprep.subr.mxu0 0.0
  %2579 = vmatpush1.msra.mxu0 %v2502
  %2580 = vmatprep.subr.mxu0 0.0
  %2581 = vmatpush1.msra.mxu0 %v2503
  %2582 = vmatprep.subr.mxu0 0.0
  %2583 = vmatpush1.msra.mxu0 %v2504
  %2584 = vmatprep.subr.mxu0 0.0
  %2585 = vmatpush1.msra.mxu0 %v2505
  %2586 = vmatprep.subr.mxu0 0.0
  %2587 = vmatpush1.msra.mxu0 %v2506
  %2588 = vmatprep.subr.mxu0 0.0
  %2589 = vmatpush1.msra.mxu0 %v2507
  %2590 = vmatprep.subr.mxu0 0.0
  %2591 = vmatpush1.msra.mxu0 %v2508
  %2592 = vmatprep.subr.mxu0 0.0
  %2593 = vmatpush1.msra.mxu0 %v2509
  %2594 = vmatprep.subr.mxu0 0.0
  %2595 = vmatpush1.msra.mxu0 %v2510
  %2596 = vmatprep.subr.mxu0 0.0
  %2597 = vmatpush1.msra.mxu0 %v2511
  %2598 = vmatprep.subr.mxu0 0.0
  %2599 = vmatpush1.msra.mxu0 %v2512
  %2600 = vmatprep.subr.mxu0 0.0
  %2601 = vmatpush1.msra.mxu0 %v2513
  %2602 = vmatprep.subr.mxu0 0.0
  %2603 = vmatpush1.msra.mxu0 %v2514
  %2604 = vmatprep.subr.mxu0 0.0
  %2605 = vmatpush1.msra.mxu0 %v2515
  %2606 = vmatprep.subr.mxu0 0.0
  %2607 = vmatpush1.msra.mxu0 %v2516
  %2608 = vmatprep.subr.mxu0 0.0
  %2609 = vmatpush1.msra.mxu0 %v2517
  %2610 = vmatprep.subr.mxu0 0.0
  %2611 = vmatpush1.msra.mxu0 %v2518
  %2612 = vmatprep.subr.mxu0 0.0
  %2613 = vmatpush1.msra.mxu0 %v2519
  %2614 = vmatprep.subr.mxu0 0.0
  %2615 = vmatpush1.msra.mxu0 %v2520
  %2616 = vmatprep.subr.mxu0 0.0
  %2617 = vmatpush1.msra.mxu0 %v2521
  %2618 = vmatprep.mubr.f32.mxu0 %v2405
  %2619 = vmatmul.mubr.f32.gmra.mrb[0].mxu0 %v2403
  %v2620 = vpop.f32.mrb[0].mxu0
  %v2621 = vadd.f32 0.0, %v2620
  %v2622 = vpop.f32.mrb[0].mxu0
  %2623 = vmatprep.mubr.f32.mxu0 %v2411
  %2624 = vmatmul.mubr.f32.gmra.mrb[0].mxu0 %v2409
  %v2625 = vpop.f32.mrb[0].mxu0
  %v2626 = vadd.f32 0.0, %v2625
  %v2627 = vpop.f32.mrb[0].mxu0
  %2628 = vdwg.mxu0
  %2629 = vmatprep.subr.mxu0 0.0
  %2630 = vmatpush1.msra.mxu0 %v2522
  %2631 = vmatprep.subr.mxu0 0.0
  %2632 = vmatpush1.msra.mxu0 %v2523
  %2633 = vmatprep.subr.mxu0 0.0
  %2634 = vmatpush1.msra.mxu0 %v2524
  %2635 = vmatprep.subr.mxu0 0.0
  %2636 = vmatpush1.msra.mxu0 %v2525
  %2637 = vmatprep.subr.mxu0 0.0
  %2638 = vmatpush1.msra.mxu0 %v2526
  %2639 = vmatprep.subr.mxu0 0.0
  %2640 = vmatpush1.msra.mxu0 %v2527
  %2641 = vmatprep.subr.mxu0 0.0
  %2642 = vmatpush1.msra.mxu0 %v2528
  %2643 = vmatprep.subr.mxu0 0.0
  %2644 = vmatpush1.msra.mxu0 %v2529
  %2645 = vmatprep.subr.mxu0 0.0
  %2646 = vmatpush1.msra.mxu0 %v2530
  %2647 = vmatprep.subr.mxu0 0.0
  %2648 = vmatpush1.msra.mxu0 %v2531
  %2649 = vmatprep.subr.mxu0 0.0
  %2650 = vmatpush1.msra.mxu0 %v2532
  %2651 = vmatprep.subr.mxu0 0.0
  %2652 = vmatpush1.msra.mxu0 %v2533
  %2653 = vmatprep.subr.mxu0 0.0
  %2654 = vmatpush1.msra.mxu0 %v2534
  %2655 = vmatprep.subr.mxu0 0.0
  %2656 = vmatpush1.msra.mxu0 %v2535
  %2657 = vmatprep.subr.mxu0 0.0
  %2658 = vmatpush1.msra.mxu0 %v2536
  %2659 = vmatprep.subr.mxu0 0.0
  %2660 = vmatpush1.msra.mxu0 %v2537
  %2661 = vmatprep.subr.mxu0 0.0
  %2662 = vmatpush1.msra.mxu0 %v2538
  %2663 = vmatprep.subr.mxu0 0.0
  %2664 = vmatpush1.msra.mxu0 %v2539
  %2665 = vmatprep.subr.mxu0 0.0
  %2666 = vmatpush1.msra.mxu0 %v2540
  %2667 = vmatprep.subr.mxu0 0.0
  %2668 = vmatpush1.msra.mxu0 %v2541
  %2669 = vmatprep.subr.mxu0 0.0
  %2670 = vmatpush1.msra.mxu0 %v2542
  %2671 = vmatprep.subr.mxu0 0.0
  %2672 = vmatpush1.msra.mxu0 %v2543
  %2673 = vmatprep.subr.mxu0 0.0
  %2674 = vmatpush1.msra.mxu0 %v2544
  %2675 = vmatprep.subr.mxu0 0.0
  %2676 = vmatpush1.msra.mxu0 %v2545
  %2677 = vmatprep.subr.mxu0 0.0
  %2678 = vmatpush1.msra.mxu0 %v2546
  %2679 = vmatprep.subr.mxu0 0.0
  %2680 = vmatpush1.msra.mxu0 %v2547
  %2681 = vmatprep.subr.mxu0 0.0
  %2682 = vmatpush1.msra.mxu0 %v2548
  %2683 = vmatprep.subr.mxu0 0.0
  %2684 = vmatpush1.msra.mxu0 %v2549
  %2685 = vmatprep.subr.mxu0 0.0
  %2686 = vmatpush1.msra.mxu0 %v2550
  %2687 = vmatprep.subr.mxu0 0.0
  %2688 = vmatpush1.msra.mxu0 %v2551
  %2689 = vmatprep.subr.mxu0 0.0
  %2690 = vmatpush1.msra.mxu0 %v2552
  %2691 = vmatprep.subr.mxu0 0.0
  %2692 = vmatpush1.msra.mxu0 %v2553
  %2693 = vmatprep.mubr.f32.mxu0 %v2482
  %2694 = vmatmul.mubr.f32.gmra.mrb[0].mxu0 %v2480
  %v2695 = vpop.f32.mrb[0].mxu0
  %v2696 = vadd.f32 %v2621, %v2695
  %v2697 = vpop.f32.mrb[0].mxu0
  %2698 = vmatprep.mubr.f32.mxu0 %v2488
  %2699 = vmatmul.mubr.f32.gmra.mrb[0].mxu0 %v2486
  %v2700 = vpop.f32.mrb[0].mxu0
  %v2701 = vadd.f32 %v2626, %v2700
  %v2702 = vpop.f32.mrb[0].mxu0
  %2703 = vdwg.mxu0
  %2704 = vst [vmem:[%s3] sm:$0xff] %v2696
  %2705 = vst [vmem:[%s3 + $0x8] sm:$0xff] %v2701
  // Predicated region
  $region14: #{encoder_forward.1} parent=0 // pred_check
    _
  $region15: #{encoder_forward.1} parent=0 // pred_check_branch
    %2707 = sbr.rel (0) target = $region17
  $region16: #{encoder_forward.1} parent=0 // pred_region
    _
  $region17: #{encoder_forward.1} parent=0 // pred_fallthru
    _
  // Predicated region
  $region18: #{encoder_forward.1} parent=0 // pred_check
    _
  $region19: #{encoder_forward.1} parent=0 // pred_check_branch
    %2709 = sbr.rel (0) target = $region21
  $region20: #{encoder_forward.1} parent=0 // pred_region
    _
  $region21: #{encoder_forward.1} parent=0 // pred_fallthru
    _

</llo_original>
